<compile_context>
chip_gen: v5e
topology: v5e:2x2
jax: 0.10.0
libtpu: 0.0.40
codegen_flags: <defaults>
</compile_context>

<pallas_src>
import numpy as np
import jax
import jax.numpy as jnp
from jax.experimental import pallas as pl
from jax.experimental.pallas import tpu as pltpu


# ---------------- constant tables (same as DiffJPEG utils.py) ----------------
_Y_TABLE = np.array(
    [[16, 11, 10, 16, 24, 40, 51, 61], [12, 12, 14, 19, 26, 58, 60, 55],
     [14, 13, 16, 24, 40, 57, 69, 56], [14, 17, 22, 29, 51, 87, 80, 62],
     [18, 22, 37, 56, 68, 109, 103, 77], [24, 35, 55, 64, 81, 104, 113, 92],
     [49, 64, 78, 87, 103, 121, 120, 101], [72, 92, 95, 98, 112, 100, 103, 99]],
    dtype=np.float32).T  # DiffJPEG stores the transposed table

_C_TABLE = np.full((8, 8), 99.0, dtype=np.float32)
_C_TABLE[:4, :4] = np.array([[17, 18, 24, 47], [18, 21, 26, 66],
                             [24, 26, 56, 99], [47, 66, 99, 99]],
                            dtype=np.float32).T

# Pre-round matmuls feed round(): keep f32 for exact quantization parity with
# the PyTorch reference.  Post-round matmuls (IDCT, upsample) run in bf16 --
# ~3-6x faster on the MXU, <= ~1/255 output deviation, no round() flips.
_PREROUND_MXU_DTYPE = jnp.float32
_POSTROUND_MXU_DTYPE = jnp.bfloat16


def _quality_to_factor(quality):
    if quality < 50:
        q = 5000.0 / quality
    else:
        q = 200.0 - quality * 2
    return q / 100.0


# ------------------------------- tile picking -------------------------------
def _pick_tile_h(H):
    """Largest multiple-of-16 divisor of H, capped at 128 (sublane dim only
    needs %8; 16 keeps 2x2 chroma pooling tile-local)."""
    if H % 128 == 0:
        return 128
    for t in range(128, 15, -16):
        if H % t == 0:
            return t
    return H  # unreachable: H % 16 == 0 guarantees t = 16 divides H


def _pick_tile_w(W):
    """Lane dim must be a multiple of 128 (lane-dense, (8,128) rule) or the
    full extent.  Never exceeds 128 unless forced to full extent."""
    if W % 128 == 0:
        return 128
    if W > 512:
        # TODO(synk): support wide non-128-divisible images by padding W.
        raise ValueError("W must be a multiple of 128 for W > 512")
    return W  # full-extent fallback for small images


# ---------------------------- constant construction --------------------------
def _build_tile_constants(th, tw, factor):
    """Tile-sized constants for the merged (Y ; Cb|Cr) codec plane."""
    th2, tw2 = th // 2, tw // 2
    x8 = np.arange(8)
    # C[x, u] = cos((2x+1) u pi / 16)
    C = np.cos((2 * x8[:, None] + 1) * x8[None, :] * np.pi / 16).astype(np.float32)
    alpha = np.array([1.0 / np.sqrt(2)] + [1.0] * 7, dtype=np.float32)
    scale8 = (np.outer(alpha, alpha) * 0.25).astype(np.float32)
    alpha8 = np.outer(alpha, alpha).astype(np.float32)

    def bdiag(M, n):
        return np.kron(np.eye(n, dtype=np.float32), M).astype(np.float32)

    nbh = (th + th2) // 8     # merged-plane block rows: Y on top, pooled Cb|Cr below
    nbw = tw // 8
    # forward DCT:  Ld @ P @ Rd   (per 8x8 block: C^T X C)
    Ld = bdiag(C.T, nbh)
    Rd = bdiag(C, nbw)
    # inverse DCT:  Li @ F @ Ri   (per 8x8 block: C F C^T);  Li = Ld.T, Ri = Rd.T
    Li = bdiag(C, nbh)
    Ri = bdiag(C.T, nbw)

    qy = _Y_TABLE * factor
    qc = _C_TABLE * factor
    # A = scale/q (pre-round);  B = q*alpha * 0.25/255 (post-round; IDCT's 0.25
    # and the final /255 are folded in here).
    Aq = np.concatenate([np.tile(scale8 / qy, (th // 8, nbw)),
                         np.tile(scale8 / qc, (th2 // 8, nbw))], axis=0)
    Bq = np.concatenate([np.tile(qy * alpha8, (th // 8, nbw)),
                         np.tile(qc * alpha8, (th2 // 8, nbw))], axis=0) * (0.25 / 255.0)

    ih, iw = np.arange(th2), np.arange(tw2)
    # 2x2 average pooling of the (cb|cr along W) plane:  ph @ CC @ pw2T
    ph = np.zeros((th2, th), np.float32)
    ph[ih, 2 * ih] = 0.5
    ph[ih, 2 * ih + 1] = 0.5
    pwT = np.zeros((tw, tw2), np.float32)
    pwT[2 * iw, iw] = 0.5
    pwT[2 * iw + 1, iw] = 0.5
    pw2T = np.kron(np.eye(2, dtype=np.float32), pwT)          # (2*tw, tw)
    # nearest 2x upsampling of the reconstructed (cb|cr along W) plane
    uh = np.zeros((th, th2), np.float32)
    uh[2 * ih, ih] = 1.0
    uh[2 * ih + 1, ih] = 1.0
    uwT = np.zeros((tw2, tw), np.float32)
    uwT[iw, 2 * iw] = 1.0
    uwT[iw, 2 * iw + 1] = 1.0
    uw2T = np.kron(np.eye(2, dtype=np.float32), uwT)          # (tw, 2*tw)

    pre, post = _PREROUND_MXU_DTYPE, _POSTROUND_MXU_DTYPE
    return [jnp.asarray(Ld, pre), jnp.asarray(Rd, pre),
            jnp.asarray(Li, post), jnp.asarray(Ri, post),
            jnp.asarray(Aq, jnp.float32), jnp.asarray(Bq, jnp.float32),
            jnp.asarray(ph, pre), jnp.asarray(pw2T, pre),
            jnp.asarray(uh, post), jnp.asarray(uw2T, post)]


# ------------------------------ Pallas kernel -------------------------------
def _mm_pre(a, b):
    return jnp.dot(a.astype(_PREROUND_MXU_DTYPE), b.astype(_PREROUND_MXU_DTYPE),
                   preferred_element_type=jnp.float32)


def _mm_post(a, b):
    return jnp.dot(a.astype(_POSTROUND_MXU_DTYPE), b.astype(_POSTROUND_MXU_DTYPE),
                   preferred_element_type=jnp.float32)


def _diffjpeg_kernel(x_ref,
                     ld_ref, rd_ref, li_ref, ri_ref, aq_ref, bq_ref,
                     ph_ref, pw2_ref, uh_ref, uw2_ref,
                     o_ref):
    r = x_ref[0, 0]
    g = x_ref[0, 1]
    b = x_ref[0, 2]
    th, tw = r.shape

    # RGB in [0,1] -> centered YCbCr (the *255 and the -128 DC shift are folded
    # into the coefficients; the chroma +128/-128 pair cancels entirely).
    yc = (0.299 * 255.0) * r + (0.587 * 255.0) * g + (0.114 * 255.0) * b - 128.0
    cbc = (-0.168736 * 255.0) * r + (-0.331264 * 255.0) * g + 127.5 * b
    crc = 127.5 * r + (-0.418688 * 255.0) * g + (-0.081312 * 255.0) * b

    # chroma 2x2 average-pool subsampling, both planes in one merged pass
    cc = jnp.concatenate([cbc, crc], axis=1)                     # (th, 2*tw)
    cc_s = _mm_pre(_mm_pre(ph_ref[...], cc), pw2_ref[...])       # (th/2, tw)

    # merged plane: Y on top, pooled Cb|Cr below -> one blockwise 8x8 codec pass
    p = jnp.concatenate([yc, cc_s], axis=0)                      # (1.5*th, tw)

    # forward DCT + quant divide (f32: feeds round())
    t = _mm_pre(_mm_pre(ld_ref[...], p), rd_ref[...]) * aq_ref[...]
    rt = jnp.round(t)
    d = t - rt
    t2 = (rt + d * d * d) * bq_ref[...]          # diff-round + dequant (*alpha*0.25/255)

    # inverse DCT (bf16 operands, f32 accumulate); output is (plane-128)/255
    rec = _mm_post(_mm_post(li_ref[...], t2), ri_ref[...])       # (1.5*th, tw)

    y01 = rec[:th]                                               # (y_r - 128)/255
    ccr = rec[th:]                                               # centered/255 cb|cr (th/2, tw)

    # nearest-neighbor 2x chroma upsampling, both planes in one merged pass
    ccu = _mm_post(_mm_post(uh_ref[...], ccr), uw2_ref[...])     # (th, 2*tw)
    cbu = ccu[:, :tw]
    cru = ccu[:, tw:]

    # YCbCr -> RGB with the /255 already folded in; clamp to [0, 1]
    c0 = 128.0 / 255.0
    ro = y01 + 1.402 * cru + c0
    go = y01 - 0.344136 * cbu - 0.714136 * cru + c0
    bo = y01 + 1.772 * cbu + c0

    one = jnp.float32(1.0)
    zero = jnp.float32(0.0)
    o_ref[0, 0] = jnp.minimum(one, jnp.maximum(zero, ro))
    o_ref[0, 1] = jnp.minimum(one, jnp.maximum(zero, go))
    o_ref[0, 2] = jnp.minimum(one, jnp.maximum(zero, bo))


# --------------------------------- wrappers ---------------------------------
def diff_jpeg_nchw(x_nchw, quality=80):
    """DiffJPEG on an NCHW float32 image in [0,1]; no layout transposes."""
    B, C, H, W = x_nchw.shape
    assert C == 3
    assert H % 16 == 0 and W % 16 == 0, "H and W must be multiples of 16"
    th, tw = _pick_tile_h(H), _pick_tile_w(W)
    # v7x megacore: make sure the 'parallel' grid has >= 2 steps for tiny inputs
    if B * (H // th) * (W // tw) == 1 and th >= 32:
        th //= 2
    factor = _quality_to_factor(quality)
    consts = _build_tile_constants(th, tw, factor)
    x_nchw = x_nchw.astype(jnp.float32)

    img_spec = pl.BlockSpec((1, 3, th, tw), lambda b, i, j: (b, 0, i, j))

    def _run(const_pipeline_mode):
        if const_pipeline_mode is None:
            const_specs = [pl.BlockSpec(c.shape, lambda b, i, j: (0, 0))
                           for c in consts]
        else:
            const_specs = [pl.BlockSpec(c.shape, lambda b, i, j: (0, 0),
                                        pipeline_mode=const_pipeline_mode)
                           for c in consts]
        return pl.pallas_call(
            _diffjpeg_kernel,
            out_shape=jax.ShapeDtypeStruct((B, 3, H, W), jnp.float32),
            grid=(B, H // th, W // tw),
            in_specs=[img_spec] + const_specs,
            out_specs=img_spec,
            compiler_params=pltpu.CompilerParams(
                dimension_semantics=("parallel", "parallel", "parallel"),
                vmem_limit_bytes=32 * 1024 * 1024),
        )(x_nchw, *consts)

    try:
        # constant index_map -> a second pipeline buffer is pure waste
        return _run(pl.Buffered(1))
    except Exception:
        # fallback if this JAX build rejects buffer_count=1
        return _run(None)


def diff_jpeg(x_nhwc, quality=80):
    """DiffJPEG.forward: NHWC float32 in [0,1] -> NHWC float32 in [0,1].

    The two transposes below are pure layout shims to match the module's NHWC
    interface; callers that already hold NCHW data (as the PyTorch module does
    internally) should call diff_jpeg_nchw directly and skip both HBM passes.
    """
    assert x_nhwc.ndim == 4 and x_nhwc.shape[-1] == 3
    x_nchw = jnp.transpose(x_nhwc.astype(jnp.float32), (0, 3, 1, 2))
    out = diff_jpeg_nchw(x_nchw, quality=quality)
    return jnp.transpose(out, (0, 2, 3, 1))


# --------------------------- pure-jnp reference -----------------------------
def _diff_jpeg_ref(x_nhwc, quality=80):
    """Whole-image f32 jnp reference mirroring DiffJPEG (no Pallas)."""
    factor = _quality_to_factor(quality)
    Bn, H, W, _ = x_nhwc.shape
    x = jnp.transpose(x_nhwc.astype(jnp.float32), (0, 3, 1, 2)) * 255.0
    r, g, b = x[:, 0], x[:, 1], x[:, 2]
    y = 0.299 * r + 0.587 * g + 0.114 * b
    cb = -0.168736 * r - 0.331264 * g + 0.5 * b + 128.0
    cr = 0.5 * r - 0.418688 * g - 0.081312 * b + 128.0

    def pool(p):
        return p.reshape(Bn, H // 2, 2, W // 2, 2).mean(axis=(2, 4))

    x8 = np.arange(8)
    C = jnp.asarray(np.cos((2 * x8[:, None] + 1) * x8[None, :] * np.pi / 16),
                    jnp.float32)
    alpha = np.array([1.0 / np.sqrt(2)] + [1.0] * 7, dtype=np.float32)
    scale8 = np.outer(alpha, alpha).astype(np.float32) * 0.25
    alpha8 = np.outer(alpha, alpha).astype(np.float32)
    Ay = jnp.asarray(scale8 / (_Y_TABLE * factor))
    By = jnp.asarray((_Y_TABLE * factor) * alpha8)
    Ac = jnp.asarray(scale8 / (_C_TABLE * factor))
    Bc = jnp.asarray((_C_TABLE * factor) * alpha8)

    def codec(p, A, Bt):
        Bb, Hh, Ww = p.shape
        blk = p.reshape(Bb, Hh // 8, 8, Ww // 8, 8).transpose(0, 1, 3, 2, 4)
        t = jnp.einsum('xu,bijxy,yv->bijuv', C, blk - 128.0, C) * A
        rt = jnp.round(t)
        t = (rt + (t - rt) ** 3) * Bt
        rec = 0.25 * jnp.einsum('xu,bijuv,yv->bijxy', C, t, C) + 128.0
        return rec.transpose(0, 1, 3, 2, 4).reshape(Bb, Hh, Ww)

    y_r = codec(y, Ay, By)
    cb_r = codec(pool(cb), Ac, Bc)
    cr_r = codec(pool(cr), Ac, Bc)

    def up(p):
        return jnp.repeat(jnp.repeat(p, 2, axis=1), 2, axis=2)

    cb_u, cr_u = up(cb_r), up(cr_r)
    ro = y_r + 1.402 * (cr_u - 128.0)
    go = y_r - 0.344136 * (cb_u - 128.0) - 0.714136 * (cr_u - 128.0)
    bo = y_r + 1.772 * (cb_u - 128.0)
    out = jnp.stack([ro, go, bo], axis=-1)
    return jnp.clip(out, 0.0, 255.0) / 255.0


if __name__ == "__main__":
    key = jax.random.PRNGKey(0)
    k1, k2 = jax.random.split(key)

    # primary case: 128x128 -> lane-dense 128x128 tiles, grid=(2,1,1)
    x = jax.random.uniform(k1, (2, 128, 128, 3), dtype=jnp.float32)
    out = jax.block_until_ready(diff_jpeg(x, quality=80))
    assert out.shape == x.shape and out.dtype == jnp.float32
    assert bool(jnp.all(jnp.isfinite(out)))
    assert bool(jnp.all((out >= 0.0) & (out <= 1.0)))

    ref = _diff_jpeg_ref(x, quality=80)
    diff = jnp.abs(out - ref)
    # bf16 post-round IDCT/upsample => ~1/255 typical deviation; quantization
    # round() decisions remain identical (the pre-round path stays f32).
    assert float(jnp.mean(diff)) < 1e-2, float(jnp.mean(diff))
    assert float(jnp.max(diff)) < 1e-1, float(jnp.max(diff))

    # NCHW fast path (no wrapper transposes) must agree with the NHWC shim
    out_nchw = jax.block_until_ready(
        diff_jpeg_nchw(jnp.transpose(x, (0, 3, 1, 2)), quality=80))
    assert float(jnp.max(jnp.abs(jnp.transpose(out_nchw, (0, 2, 3, 1)) - out))) < 1e-6

    # small / non-128 case: full-extent W tile + megacore H split (grid=(1,2,1))
    x2 = jax.random.uniform(k2, (1, 32, 48, 3), dtype=jnp.float32)
    out2 = jax.block_until_ready(diff_jpeg(x2, quality=80))
    ref2 = _diff_jpeg_ref(x2, quality=80)
    assert float(jnp.mean(jnp.abs(out2 - ref2))) < 1e-2
    assert float(jnp.max(jnp.abs(out2 - ref2))) < 1e-1

    print("KERNEL_OK")
</pallas_src>

<mosaic_0001>
module attributes {stable_mosaic.version = 11 : i64} {
  func.func @_diffjpeg_kernel(%arg0: i32, %arg1: i32, %arg2: i32, %arg3: memref<1x3x128x128xf32, #tpu.memory_space<vmem>>, %arg4: memref<192x192xf32, #tpu.memory_space<vmem>>, %arg5: memref<128x128xf32, #tpu.memory_space<vmem>>, %arg6: memref<192x192xbf16, #tpu.memory_space<vmem>>, %arg7: memref<128x128xbf16, #tpu.memory_space<vmem>>, %arg8: memref<192x128xf32, #tpu.memory_space<vmem>>, %arg9: memref<192x128xf32, #tpu.memory_space<vmem>>, %arg10: memref<64x128xf32, #tpu.memory_space<vmem>>, %arg11: memref<256x128xf32, #tpu.memory_space<vmem>>, %arg12: memref<128x64xbf16, #tpu.memory_space<vmem>>, %arg13: memref<128x256xbf16, #tpu.memory_space<vmem>>, %arg14: memref<1x3x128x128xf32, #tpu.memory_space<vmem>>) attributes {dimension_semantics = [#tpu.dimension_semantics<parallel>, #tpu.dimension_semantics<parallel>, #tpu.dimension_semantics<parallel>], iteration_bounds = array<i64: 2, 1, 1>, scalar_prefetch = 0 : i64, scratch_operands = 0 : i64, tpu.core_type = #tpu.core_type<tc>, window_params = [{transform_indices = @transform_0, window_bounds = array<i64: 1, 3, 128, 128>}, {pipeline_mode = #tpu.pipeline_mode<synchronous>, transform_indices = @transform_1, window_bounds = array<i64: 192, 192>}, {pipeline_mode = #tpu.pipeline_mode<synchronous>, transform_indices = @transform_2, window_bounds = array<i64: 128, 128>}, {pipeline_mode = #tpu.pipeline_mode<synchronous>, transform_indices = @transform_3, window_bounds = array<i64: 192, 192>}, {pipeline_mode = #tpu.pipeline_mode<synchronous>, transform_indices = @transform_4, window_bounds = array<i64: 128, 128>}, {pipeline_mode = #tpu.pipeline_mode<synchronous>, transform_indices = @transform_5, window_bounds = array<i64: 192, 128>}, {pipeline_mode = #tpu.pipeline_mode<synchronous>, transform_indices = @transform_6, window_bounds = array<i64: 192, 128>}, {pipeline_mode = #tpu.pipeline_mode<synchronous>, transform_indices = @transform_7, window_bounds = array<i64: 64, 128>}, {pipeline_mode = #tpu.pipeline_mode<synchronous>, transform_indices = @transform_8, window_bounds = array<i64: 256, 128>}, {pipeline_mode = #tpu.pipeline_mode<synchronous>, transform_indices = @transform_9, window_bounds = array<i64: 128, 64>}, {pipeline_mode = #tpu.pipeline_mode<synchronous>, transform_indices = @transform_10, window_bounds = array<i64: 128, 256>}, {transform_indices = @transform_11, window_bounds = array<i64: 1, 3, 128, 128>}]} {
    %c0 = arith.constant 0 : index
    %c0_0 = arith.constant 0 : index
    %c0_1 = arith.constant 0 : index
    %c0_2 = arith.constant 0 : index
    %0 = vector.load %arg3[%c0, %c0_0, %c0_1, %c0_2] : memref<1x3x128x128xf32, #tpu.memory_space<vmem>>, vector<1x1x128x128xf32>
    %1 = vector.shape_cast %0 : vector<1x1x128x128xf32> to vector<128x128xf32>
    %c0_3 = arith.constant 0 : index
    %c1 = arith.constant 1 : index
    %c0_4 = arith.constant 0 : index
    %c0_5 = arith.constant 0 : index
    %2 = vector.load %arg3[%c0_3, %c1, %c0_4, %c0_5] : memref<1x3x128x128xf32, #tpu.memory_space<vmem>>, vector<1x1x128x128xf32>
    %3 = vector.shape_cast %2 : vector<1x1x128x128xf32> to vector<128x128xf32>
    %c0_6 = arith.constant 0 : index
    %c2 = arith.constant 2 : index
    %c0_7 = arith.constant 0 : index
    %c0_8 = arith.constant 0 : index
    %4 = vector.load %arg3[%c0_6, %c2, %c0_7, %c0_8] : memref<1x3x128x128xf32, #tpu.memory_space<vmem>>, vector<1x1x128x128xf32>
    %5 = vector.shape_cast %4 : vector<1x1x128x128xf32> to vector<128x128xf32>
    %cst = arith.constant 7.624500e+01 : f32
    %6 = vector.broadcast %cst : f32 to vector<128x128xf32>
    %7 = arith.mulf %6, %1 : vector<128x128xf32>
    %cst_9 = arith.constant 1.496850e+02 : f32
    %8 = vector.broadcast %cst_9 : f32 to vector<128x128xf32>
    %9 = arith.mulf %8, %3 : vector<128x128xf32>
    %10 = arith.addf %7, %9 : vector<128x128xf32>
    %cst_10 = arith.constant 2.907000e+01 : f32
    %11 = vector.broadcast %cst_10 : f32 to vector<128x128xf32>
    %12 = arith.mulf %11, %5 : vector<128x128xf32>
    %13 = arith.addf %10, %12 : vector<128x128xf32>
    %cst_11 = arith.constant 1.280000e+02 : f32
    %14 = vector.broadcast %cst_11 : f32 to vector<128x128xf32>
    %15 = arith.subf %13, %14 : vector<128x128xf32>
    %cst_12 = arith.constant -43.0276794 : f32
    %16 = vector.broadcast %cst_12 : f32 to vector<128x128xf32>
    %17 = arith.mulf %16, %1 : vector<128x128xf32>
    %cst_13 = arith.constant -84.4723205 : f32
    %18 = vector.broadcast %cst_13 : f32 to vector<128x128xf32>
    %19 = arith.mulf %18, %3 : vector<128x128xf32>
    %20 = arith.addf %17, %19 : vector<128x128xf32>
    %cst_14 = arith.constant 1.275000e+02 : f32
    %21 = vector.broadcast %cst_14 : f32 to vector<128x128xf32>
    %22 = arith.mulf %21, %5 : vector<128x128xf32>
    %23 = arith.addf %20, %22 : vector<128x128xf32>
    %cst_15 = arith.constant 1.275000e+02 : f32
    %24 = vector.broadcast %cst_15 : f32 to vector<128x128xf32>
    %25 = arith.mulf %24, %1 : vector<128x128xf32>
    %cst_16 = arith.constant -106.765442 : f32
    %26 = vector.broadcast %cst_16 : f32 to vector<128x128xf32>
    %27 = arith.mulf %26, %3 : vector<128x128xf32>
    %28 = arith.addf %25, %27 : vector<128x128xf32>
    %cst_17 = arith.constant -20.73456 : f32
    %29 = vector.broadcast %cst_17 : f32 to vector<128x128xf32>
    %30 = arith.mulf %29, %5 : vector<128x128xf32>
    %31 = arith.addf %28, %30 : vector<128x128xf32>
    %32 = tpu.concatenate %23, %31 in 1 : vector<128x128xf32>, vector<128x128xf32> -> vector<128x256xf32>
    %c0_18 = arith.constant 0 : index
    %c0_19 = arith.constant 0 : index
    %33 = vector.load %arg10[%c0_18, %c0_19] : memref<64x128xf32, #tpu.memory_space<vmem>>, vector<64x128xf32>
    %cst_20 = arith.constant dense<0.000000e+00> : vector<64x256xf32>
    %34 = tpu.matmul %33, %32, %cst_20 {dimension_numbers = #tpu.dot_dimension_numbers<[1], [0], [0], [1], [0, 0, 1, 1], [], []>} : vector<64x128xf32>, vector<128x256xf32>, vector<64x256xf32> -> vector<64x256xf32>
    %c0_21 = arith.constant 0 : index
    %c0_22 = arith.constant 0 : index
    %35 = vector.load %arg11[%c0_21, %c0_22] : memref<256x128xf32, #tpu.memory_space<vmem>>, vector<256x128xf32>
    %cst_23 = arith.constant dense<0.000000e+00> : vector<64x128xf32>
    %36 = tpu.matmul %34, %35, %cst_23 {dimension_numbers = #tpu.dot_dimension_numbers<[1], [0], [0], [1], [0, 0, 1, 1], [], []>} : vector<64x256xf32>, vector<256x128xf32>, vector<64x128xf32> -> vector<64x128xf32>
    %37 = tpu.concatenate %15, %36 in 0 : vector<128x128xf32>, vector<64x128xf32> -> vector<192x128xf32>
    %c0_24 = arith.constant 0 : index
    %c0_25 = arith.constant 0 : index
    %38 = vector.load %arg4[%c0_24, %c0_25] : memref<192x192xf32, #tpu.memory_space<vmem>>, vector<192x192xf32>
    %cst_26 = arith.constant dense<0.000000e+00> : vector<192x128xf32>
    %39 = tpu.matmul %38, %37, %cst_26 {dimension_numbers = #tpu.dot_dimension_numbers<[1], [0], [0], [1], [0, 0, 1, 1], [], []>} : vector<192x192xf32>, vector<192x128xf32>, vector<192x128xf32> -> vector<192x128xf32>
    %c0_27 = arith.constant 0 : index
    %c0_28 = arith.constant 0 : index
    %40 = vector.load %arg5[%c0_27, %c0_28] : memref<128x128xf32, #tpu.memory_space<vmem>>, vector<128x128xf32>
    %cst_29 = arith.constant dense<0.000000e+00> : vector<192x128xf32>
    %41 = tpu.matmul %39, %40, %cst_29 {dimension_numbers = #tpu.dot_dimension_numbers<[1], [0], [0], [1], [0, 0, 1, 1], [], []>} : vector<192x128xf32>, vector<128x128xf32>, vector<192x128xf32> -> vector<192x128xf32>
    %c0_30 = arith.constant 0 : index
    %c0_31 = arith.constant 0 : index
    %42 = vector.load %arg8[%c0_30, %c0_31] : memref<192x128xf32, #tpu.memory_space<vmem>>, vector<192x128xf32>
    %43 = arith.mulf %41, %42 : vector<192x128xf32>
    %44 = math.roundeven %43 : vector<192x128xf32>
    %45 = arith.subf %43, %44 : vector<192x128xf32>
    %46 = arith.mulf %45, %45 : vector<192x128xf32>
    %47 = arith.mulf %46, %45 : vector<192x128xf32>
    %48 = arith.addf %44, %47 : vector<192x128xf32>
    %c0_32 = arith.constant 0 : index
    %c0_33 = arith.constant 0 : index
    %49 = vector.load %arg9[%c0_32, %c0_33] : memref<192x128xf32, #tpu.memory_space<vmem>>, vector<192x128xf32>
    %50 = arith.mulf %48, %49 : vector<192x128xf32>
    %c0_34 = arith.constant 0 : index
    %c0_35 = arith.constant 0 : index
    %51 = vector.load %arg6[%c0_34, %c0_35] : memref<192x192xbf16, #tpu.memory_space<vmem>>, vector<192x192xbf16>
    %52 = arith.truncf %50 : vector<192x128xf32> to vector<192x128xbf16>
    %cst_36 = arith.constant dense<0.000000e+00> : vector<192x128xf32>
    %53 = tpu.matmul %51, %52, %cst_36 {dimension_numbers = #tpu.dot_dimension_numbers<[1], [0], [0], [1], [0, 0, 1, 1], [], []>} : vector<192x192xbf16>, vector<192x128xbf16>, vector<192x128xf32> -> vector<192x128xf32>
    %c0_37 = arith.constant 0 : index
    %c0_38 = arith.constant 0 : index
    %54 = vector.load %arg7[%c0_37, %c0_38] : memref<128x128xbf16, #tpu.memory_space<vmem>>, vector<128x128xbf16>
    %55 = arith.truncf %53 : vector<192x128xf32> to vector<192x128xbf16>
    %cst_39 = arith.constant dense<0.000000e+00> : vector<192x128xf32>
    %56 = tpu.matmul %55, %54, %cst_39 {dimension_numbers = #tpu.dot_dimension_numbers<[1], [0], [0], [1], [0, 0, 1, 1], [], []>} : vector<192x128xbf16>, vector<128x128xbf16>, vector<192x128xf32> -> vector<192x128xf32>
    %57 = vector.extract_strided_slice %56 {offsets = [0, 0], sizes = [128, 128], strides = [1, 1]} : vector<192x128xf32> to vector<128x128xf32>
    %58 = vector.extract_strided_slice %56 {offsets = [128, 0], sizes = [64, 128], strides = [1, 1]} : vector<192x128xf32> to vector<64x128xf32>
    %c0_40 = arith.constant 0 : index
    %c0_41 = arith.constant 0 : index
    %59 = vector.load %arg12[%c0_40, %c0_41] : memref<128x64xbf16, #tpu.memory_space<vmem>>, vector<128x64xbf16>
    %60 = arith.truncf %58 : vector<64x128xf32> to vector<64x128xbf16>
    %cst_42 = arith.constant dense<0.000000e+00> : vector<128x128xf32>
    %61 = tpu.matmul %59, %60, %cst_42 {dimension_numbers = #tpu.dot_dimension_numbers<[1], [0], [0], [1], [0, 0, 1, 1], [], []>} : vector<128x64xbf16>, vector<64x128xbf16>, vector<128x128xf32> -> vector<128x128xf32>
    %c0_43 = arith.constant 0 : index
    %c0_44 = arith.constant 0 : index
    %62 = vector.load %arg13[%c0_43, %c0_44] : memref<128x256xbf16, #tpu.memory_space<vmem>>, vector<128x256xbf16>
    %63 = arith.truncf %61 : vector<128x128xf32> to vector<128x128xbf16>
    %cst_45 = arith.constant dense<0.000000e+00> : vector<128x256xf32>
    %64 = tpu.matmul %63, %62, %cst_45 {dimension_numbers = #tpu.dot_dimension_numbers<[1], [0], [0], [1], [0, 0, 1, 1], [], []>} : vector<128x128xbf16>, vector<128x256xbf16>, vector<128x256xf32> -> vector<128x256xf32>
    %65 = vector.extract_strided_slice %64 {offsets = [0, 0], sizes = [128, 128], strides = [1, 1]} : vector<128x256xf32> to vector<128x128xf32>
    %66 = vector.extract_strided_slice %64 {offsets = [0, 128], sizes = [128, 128], strides = [1, 1]} : vector<128x256xf32> to vector<128x128xf32>
    %cst_46 = arith.constant 1.402000e+00 : f32
    %67 = vector.broadcast %cst_46 : f32 to vector<128x128xf32>
    %68 = arith.mulf %67, %66 : vector<128x128xf32>
    %69 = arith.addf %57, %68 : vector<128x128xf32>
    %cst_47 = arith.constant 0.501960814 : f32
    %70 = vector.broadcast %cst_47 : f32 to vector<128x128xf32>
    %71 = arith.addf %69, %70 : vector<128x128xf32>
    %cst_48 = arith.constant 3.441360e-01 : f32
    %72 = vector.broadcast %cst_48 : f32 to vector<128x128xf32>
    %73 = arith.mulf %72, %65 : vector<128x128xf32>
    %74 = arith.subf %57, %73 : vector<128x128xf32>
    %cst_49 = arith.constant 7.141360e-01 : f32
    %75 = vector.broadcast %cst_49 : f32 to vector<128x128xf32>
    %76 = arith.mulf %75, %66 : vector<128x128xf32>
    %77 = arith.subf %74, %76 : vector<128x128xf32>
    %cst_50 = arith.constant 0.501960814 : f32
    %78 = vector.broadcast %cst_50 : f32 to vector<128x128xf32>
    %79 = arith.addf %77, %78 : vector<128x128xf32>
    %cst_51 = arith.constant 1.772000e+00 : f32
    %80 = vector.broadcast %cst_51 : f32 to vector<128x128xf32>
    %81 = arith.mulf %80, %65 : vector<128x128xf32>
    %82 = arith.addf %57, %81 : vector<128x128xf32>
    %cst_52 = arith.constant 0.501960814 : f32
    %83 = vector.broadcast %cst_52 : f32 to vector<128x128xf32>
    %84 = arith.addf %82, %83 : vector<128x128xf32>
    %cst_53 = arith.constant 0.000000e+00 : f32
    %85 = vector.broadcast %cst_53 : f32 to vector<128x128xf32>
    %86 = arith.maximumf %85, %71 : vector<128x128xf32>
    %cst_54 = arith.constant 1.000000e+00 : f32
    %87 = vector.broadcast %cst_54 : f32 to vector<128x128xf32>
    %88 = arith.minimumf %87, %86 : vector<128x128xf32>
    %c0_55 = arith.constant 0 : index
    %c0_56 = arith.constant 0 : index
    %c0_57 = arith.constant 0 : index
    %c0_58 = arith.constant 0 : index
    %89 = vector.load %arg14[%c0_55, %c0_56, %c0_57, %c0_58] : memref<1x3x128x128xf32, #tpu.memory_space<vmem>>, vector<1x1x128x128xf32>
    %90 = vector.shape_cast %89 : vector<1x1x128x128xf32> to vector<128x128xf32>
    %91 = vector.shape_cast %88 : vector<128x128xf32> to vector<1x1x128x128xf32>
    tpu.vector_store %arg14[%c0_55, %c0_56, %c0_57, %c0_58], %91 {strides = array<i32>} : memref<1x3x128x128xf32, #tpu.memory_space<vmem>>, vector<1x1x128x128xf32>,
    %cst_59 = arith.constant 0.000000e+00 : f32
    %92 = vector.broadcast %cst_59 : f32 to vector<128x128xf32>
    %93 = arith.maximumf %92, %79 : vector<128x128xf32>
    %cst_60 = arith.constant 1.000000e+00 : f32
    %94 = vector.broadcast %cst_60 : f32 to vector<128x128xf32>
    %95 = arith.minimumf %94, %93 : vector<128x128xf32>
    %c0_61 = arith.constant 0 : index
    %c1_62 = arith.constant 1 : index
    %c0_63 = arith.constant 0 : index
    %c0_64 = arith.constant 0 : index
    %96 = vector.load %arg14[%c0_61, %c1_62, %c0_63, %c0_64] : memref<1x3x128x128xf32, #tpu.memory_space<vmem>>, vector<1x1x128x128xf32>
    %97 = vector.shape_cast %96 : vector<1x1x128x128xf32> to vector<128x128xf32>
    %98 = vector.shape_cast %95 : vector<128x128xf32> to vector<1x1x128x128xf32>
    tpu.vector_store %arg14[%c0_61, %c1_62, %c0_63, %c0_64], %98 {strides = array<i32>} : memref<1x3x128x128xf32, #tpu.memory_space<vmem>>, vector<1x1x128x128xf32>,
    %cst_65 = arith.constant 0.000000e+00 : f32
    %99 = vector.broadcast %cst_65 : f32 to vector<128x128xf32>
    %100 = arith.maximumf %99, %84 : vector<128x128xf32>
    %cst_66 = arith.constant 1.000000e+00 : f32
    %101 = vector.broadcast %cst_66 : f32 to vector<128x128xf32>
    %102 = arith.minimumf %101, %100 : vector<128x128xf32>
    %c0_67 = arith.constant 0 : index
    %c2_68 = arith.constant 2 : index
    %c0_69 = arith.constant 0 : index
    %c0_70 = arith.constant 0 : index
    %103 = vector.load %arg14[%c0_67, %c2_68, %c0_69, %c0_70] : memref<1x3x128x128xf32, #tpu.memory_space<vmem>>, vector<1x1x128x128xf32>
    %104 = vector.shape_cast %103 : vector<1x1x128x128xf32> to vector<128x128xf32>
    %105 = vector.shape_cast %102 : vector<128x128xf32> to vector<1x1x128x128xf32>
    tpu.vector_store %arg14[%c0_67, %c2_68, %c0_69, %c0_70], %105 {strides = array<i32>} : memref<1x3x128x128xf32, #tpu.memory_space<vmem>>, vector<1x1x128x128xf32>,
    return
  }
  func.func @transform_0(%arg0: i32, %arg1: i32, %arg2: i32) -> (i32, i32, i32, i32) {
    %c0_i32 = arith.constant 0 : i32
    %c0_i32_0 = arith.constant 0 : i32
    return %arg0, %c0_i32, %arg1, %arg2 : i32, i32, i32, i32
  }
  func.func @transform_1(%arg0: i32, %arg1: i32, %arg2: i32) -> (i32, i32) {
    %c0_i32 = arith.constant 0 : i32
    %c0_i32_0 = arith.constant 0 : i32
    %c0_i32_1 = arith.constant 0 : i32
    return %c0_i32, %c0_i32_0 : i32, i32
  }
  func.func @transform_2(%arg0: i32, %arg1: i32, %arg2: i32) -> (i32, i32) {
    %c0_i32 = arith.constant 0 : i32
    %c0_i32_0 = arith.constant 0 : i32
    %c0_i32_1 = arith.constant 0 : i32
    return %c0_i32, %c0_i32_0 : i32, i32
  }
  func.func @transform_3(%arg0: i32, %arg1: i32, %arg2: i32) -> (i32, i32) {
    %c0_i32 = arith.constant 0 : i32
    %c0_i32_0 = arith.constant 0 : i32
    %c0_i32_1 = arith.constant 0 : i32
    return %c0_i32, %c0_i32_0 : i32, i32
  }
  func.func @transform_4(%arg0: i32, %arg1: i32, %arg2: i32) -> (i32, i32) {
    %c0_i32 = arith.constant 0 : i32
    %c0_i32_0 = arith.constant 0 : i32
    %c0_i32_1 = arith.constant 0 : i32
    return %c0_i32, %c0_i32_0 : i32, i32
  }
  func.func @transform_5(%arg0: i32, %arg1: i32, %arg2: i32) -> (i32, i32) {
    %c0_i32 = arith.constant 0 : i32
    %c0_i32_0 = arith.constant 0 : i32
    %c0_i32_1 = arith.constant 0 : i32
    return %c0_i32, %c0_i32_0 : i32, i32
  }
  func.func @transform_6(%arg0: i32, %arg1: i32, %arg2: i32) -> (i32, i32) {
    %c0_i32 = arith.constant 0 : i32
    %c0_i32_0 = arith.constant 0 : i32
    %c0_i32_1 = arith.constant 0 : i32
    return %c0_i32, %c0_i32_0 : i32, i32
  }
  func.func @transform_7(%arg0: i32, %arg1: i32, %arg2: i32) -> (i32, i32) {
    %c0_i32 = arith.constant 0 : i32
    %c0_i32_0 = arith.constant 0 : i32
    %c0_i32_1 = arith.constant 0 : i32
    return %c0_i32, %c0_i32_0 : i32, i32
  }
  func.func @transform_8(%arg0: i32, %arg1: i32, %arg2: i32) -> (i32, i32) {
    %c0_i32 = arith.constant 0 : i32
    %c0_i32_0 = arith.constant 0 : i32
    %c0_i32_1 = arith.constant 0 : i32
    return %c0_i32, %c0_i32_0 : i32, i32
  }
  func.func @transform_9(%arg0: i32, %arg1: i32, %arg2: i32) -> (i32, i32) {
    %c0_i32 = arith.constant 0 : i32
    %c0_i32_0 = arith.constant 0 : i32
    %c0_i32_1 = arith.constant 0 : i32
    return %c0_i32, %c0_i32_0 : i32, i32
  }
  func.func @transform_10(%arg0: i32, %arg1: i32, %arg2: i32) -> (i32, i32) {
    %c0_i32 = arith.constant 0 : i32
    %c0_i32_0 = arith.constant 0 : i32
    %c0_i32_1 = arith.constant 0 : i32
    return %c0_i32, %c0_i32_0 : i32, i32
  }
  func.func @transform_11(%arg0: i32, %arg1: i32, %arg2: i32) -> (i32, i32, i32, i32) {
    %c0_i32 = arith.constant 0 : i32
    %c0_i32_0 = arith.constant 0 : i32
    return %arg0, %c0_i32, %arg1, %arg2 : i32, i32, i32, i32
  }
}

module attributes {stable_mosaic.version = 11 : i64} {
  func.func @_diffjpeg_kernel(%arg0: i32, %arg1: i32, %arg2: i32, %arg3: memref<1x3x128x128xf32, #tpu.memory_space<vmem>>, %arg4: memref<192x192xf32, #tpu.memory_space<vmem>>, %arg5: memref<128x128xf32, #tpu.memory_space<vmem>>, %arg6: memref<192x192xbf16, #tpu.memory_space<vmem>>, %arg7: memref<128x128xbf16, #tpu.memory_space<vmem>>, %arg8: memref<192x128xf32, #tpu.memory_space<vmem>>, %arg9: memref<192x128xf32, #tpu.memory_space<vmem>>, %arg10: memref<64x128xf32, #tpu.memory_space<vmem>>, %arg11: memref<256x128xf32, #tpu.memory_space<vmem>>, %arg12: memref<128x64xbf16, #tpu.memory_space<vmem>>, %arg13: memref<128x256xbf16, #tpu.memory_space<vmem>>, %arg14: memref<1x3x128x128xf32, #tpu.memory_space<vmem>>) attributes {dimension_semantics = [#tpu.dimension_semantics<parallel>, #tpu.dimension_semantics<parallel>, #tpu.dimension_semantics<parallel>], iteration_bounds = array<i64: 2, 1, 1>, scalar_prefetch = 0 : i64, scratch_operands = 0 : i64, tpu.core_type = #tpu.core_type<tc>, window_params = [{transform_indices = @transform_0, window_bounds = array<i64: 1, 3, 128, 128>}, {pipeline_mode = #tpu.pipeline_mode<synchronous>, transform_indices = @transform_1, window_bounds = array<i64: 192, 192>}, {pipeline_mode = #tpu.pipeline_mode<synchronous>, transform_indices = @transform_2, window_bounds = array<i64: 128, 128>}, {pipeline_mode = #tpu.pipeline_mode<synchronous>, transform_indices = @transform_3, window_bounds = array<i64: 192, 192>}, {pipeline_mode = #tpu.pipeline_mode<synchronous>, transform_indices = @transform_4, window_bounds = array<i64: 128, 128>}, {pipeline_mode = #tpu.pipeline_mode<synchronous>, transform_indices = @transform_5, window_bounds = array<i64: 192, 128>}, {pipeline_mode = #tpu.pipeline_mode<synchronous>, transform_indices = @transform_6, window_bounds = array<i64: 192, 128>}, {pipeline_mode = #tpu.pipeline_mode<synchronous>, transform_indices = @transform_7, window_bounds = array<i64: 64, 128>}, {pipeline_mode = #tpu.pipeline_mode<synchronous>, transform_indices = @transform_8, window_bounds = array<i64: 256, 128>}, {pipeline_mode = #tpu.pipeline_mode<synchronous>, transform_indices = @transform_9, window_bounds = array<i64: 128, 64>}, {pipeline_mode = #tpu.pipeline_mode<synchronous>, transform_indices = @transform_10, window_bounds = array<i64: 128, 256>}, {transform_indices = @transform_11, window_bounds = array<i64: 1, 3, 128, 128>}]} {
    %c0 = arith.constant 0 : index
    %c0_0 = arith.constant 0 : index
    %c0_1 = arith.constant 0 : index
    %c0_2 = arith.constant 0 : index
    %0 = vector.load %arg3[%c0, %c0_0, %c0_1, %c0_2] : memref<1x3x128x128xf32, #tpu.memory_space<vmem>>, vector<1x1x128x128xf32>
    %1 = vector.shape_cast %0 : vector<1x1x128x128xf32> to vector<128x128xf32>
    %c0_3 = arith.constant 0 : index
    %c1 = arith.constant 1 : index
    %c0_4 = arith.constant 0 : index
    %c0_5 = arith.constant 0 : index
    %2 = vector.load %arg3[%c0_3, %c1, %c0_4, %c0_5] : memref<1x3x128x128xf32, #tpu.memory_space<vmem>>, vector<1x1x128x128xf32>
    %3 = vector.shape_cast %2 : vector<1x1x128x128xf32> to vector<128x128xf32>
    %c0_6 = arith.constant 0 : index
    %c2 = arith.constant 2 : index
    %c0_7 = arith.constant 0 : index
    %c0_8 = arith.constant 0 : index
    %4 = vector.load %arg3[%c0_6, %c2, %c0_7, %c0_8] : memref<1x3x128x128xf32, #tpu.memory_space<vmem>>, vector<1x1x128x128xf32>
    %5 = vector.shape_cast %4 : vector<1x1x128x128xf32> to vector<128x128xf32>
    %cst = arith.constant 7.624500e+01 : f32
    %6 = vector.broadcast %cst : f32 to vector<128x128xf32>
    %7 = arith.mulf %6, %1 : vector<128x128xf32>
    %cst_9 = arith.constant 1.496850e+02 : f32
    %8 = vector.broadcast %cst_9 : f32 to vector<128x128xf32>
    %9 = arith.mulf %8, %3 : vector<128x128xf32>
    %10 = arith.addf %7, %9 : vector<128x128xf32>
    %cst_10 = arith.constant 2.907000e+01 : f32
    %11 = vector.broadcast %cst_10 : f32 to vector<128x128xf32>
    %12 = arith.mulf %11, %5 : vector<128x128xf32>
    %13 = arith.addf %10, %12 : vector<128x128xf32>
    %cst_11 = arith.constant 1.280000e+02 : f32
    %14 = vector.broadcast %cst_11 : f32 to vector<128x128xf32>
    %15 = arith.subf %13, %14 : vector<128x128xf32>
    %cst_12 = arith.constant -43.0276794 : f32
    %16 = vector.broadcast %cst_12 : f32 to vector<128x128xf32>
    %17 = arith.mulf %16, %1 : vector<128x128xf32>
    %cst_13 = arith.constant -84.4723205 : f32
    %18 = vector.broadcast %cst_13 : f32 to vector<128x128xf32>
    %19 = arith.mulf %18, %3 : vector<128x128xf32>
    %20 = arith.addf %17, %19 : vector<128x128xf32>
    %cst_14 = arith.constant 1.275000e+02 : f32
    %21 = vector.broadcast %cst_14 : f32 to vector<128x128xf32>
    %22 = arith.mulf %21, %5 : vector<128x128xf32>
    %23 = arith.addf %20, %22 : vector<128x128xf32>
    %cst_15 = arith.constant 1.275000e+02 : f32
    %24 = vector.broadcast %cst_15 : f32 to vector<128x128xf32>
    %25 = arith.mulf %24, %1 : vector<128x128xf32>
    %cst_16 = arith.constant -106.765442 : f32
    %26 = vector.broadcast %cst_16 : f32 to vector<128x128xf32>
    %27 = arith.mulf %26, %3 : vector<128x128xf32>
    %28 = arith.addf %25, %27 : vector<128x128xf32>
    %cst_17 = arith.constant -20.73456 : f32
    %29 = vector.broadcast %cst_17 : f32 to vector<128x128xf32>
    %30 = arith.mulf %29, %5 : vector<128x128xf32>
    %31 = arith.addf %28, %30 : vector<128x128xf32>
    %32 = tpu.concatenate %23, %31 in 1 : vector<128x128xf32>, vector<128x128xf32> -> vector<128x256xf32>
    %c0_18 = arith.constant 0 : index
    %c0_19 = arith.constant 0 : index
    %33 = vector.load %arg10[%c0_18, %c0_19] : memref<64x128xf32, #tpu.memory_space<vmem>>, vector<64x128xf32>
    %cst_20 = arith.constant dense<0.000000e+00> : vector<64x256xf32>
    %34 = tpu.matmul %33, %32, %cst_20 {dimension_numbers = #tpu.dot_dimension_numbers<[1], [0], [0], [1], [0, 0, 1, 1], [], []>} : vector<64x128xf32>, vector<128x256xf32>, vector<64x256xf32> -> vector<64x256xf32>
    %c0_21 = arith.constant 0 : index
    %c0_22 = arith.constant 0 : index
    %35 = vector.load %arg11[%c0_21, %c0_22] : memref<256x128xf32, #tpu.memory_space<vmem>>, vector<256x128xf32>
    %cst_23 = arith.constant dense<0.000000e+00> : vector<64x128xf32>
    %36 = tpu.matmul %34, %35, %cst_23 {dimension_numbers = #tpu.dot_dimension_numbers<[1], [0], [0], [1], [0, 0, 1, 1], [], []>} : vector<64x256xf32>, vector<256x128xf32>, vector<64x128xf32> -> vector<64x128xf32>
    %37 = tpu.concatenate %15, %36 in 0 : vector<128x128xf32>, vector<64x128xf32> -> vector<192x128xf32>
    %c0_24 = arith.constant 0 : index
    %c0_25 = arith.constant 0 : index
    %38 = vector.load %arg4[%c0_24, %c0_25] : memref<192x192xf32, #tpu.memory_space<vmem>>, vector<192x192xf32>
    %cst_26 = arith.constant dense<0.000000e+00> : vector<192x128xf32>
    %39 = tpu.matmul %38, %37, %cst_26 {dimension_numbers = #tpu.dot_dimension_numbers<[1], [0], [0], [1], [0, 0, 1, 1], [], []>} : vector<192x192xf32>, vector<192x128xf32>, vector<192x128xf32> -> vector<192x128xf32>
    %c0_27 = arith.constant 0 : index
    %c0_28 = arith.constant 0 : index
    %40 = vector.load %arg5[%c0_27, %c0_28] : memref<128x128xf32, #tpu.memory_space<vmem>>, vector<128x128xf32>
    %cst_29 = arith.constant dense<0.000000e+00> : vector<192x128xf32>
    %41 = tpu.matmul %39, %40, %cst_29 {dimension_numbers = #tpu.dot_dimension_numbers<[1], [0], [0], [1], [0, 0, 1, 1], [], []>} : vector<192x128xf32>, vector<128x128xf32>, vector<192x128xf32> -> vector<192x128xf32>
    %c0_30 = arith.constant 0 : index
    %c0_31 = arith.constant 0 : index
    %42 = vector.load %arg8[%c0_30, %c0_31] : memref<192x128xf32, #tpu.memory_space<vmem>>, vector<192x128xf32>
    %43 = arith.mulf %41, %42 : vector<192x128xf32>
    %44 = math.roundeven %43 : vector<192x128xf32>
    %45 = arith.subf %43, %44 : vector<192x128xf32>
    %46 = arith.mulf %45, %45 : vector<192x128xf32>
    %47 = arith.mulf %46, %45 : vector<192x128xf32>
    %48 = arith.addf %44, %47 : vector<192x128xf32>
    %c0_32 = arith.constant 0 : index
    %c0_33 = arith.constant 0 : index
    %49 = vector.load %arg9[%c0_32, %c0_33] : memref<192x128xf32, #tpu.memory_space<vmem>>, vector<192x128xf32>
    %50 = arith.mulf %48, %49 : vector<192x128xf32>
    %c0_34 = arith.constant 0 : index
    %c0_35 = arith.constant 0 : index
    %51 = vector.load %arg6[%c0_34, %c0_35] : memref<192x192xbf16, #tpu.memory_space<vmem>>, vector<192x192xbf16>
    %52 = arith.truncf %50 : vector<192x128xf32> to vector<192x128xbf16>
    %cst_36 = arith.constant dense<0.000000e+00> : vector<192x128xf32>
    %53 = tpu.matmul %51, %52, %cst_36 {dimension_numbers = #tpu.dot_dimension_numbers<[1], [0], [0], [1], [0, 0, 1, 1], [], []>} : vector<192x192xbf16>, vector<192x128xbf16>, vector<192x128xf32> -> vector<192x128xf32>
    %c0_37 = arith.constant 0 : index
    %c0_38 = arith.constant 0 : index
    %54 = vector.load %arg7[%c0_37, %c0_38] : memref<128x128xbf16, #tpu.memory_space<vmem>>, vector<128x128xbf16>
    %55 = arith.truncf %53 : vector<192x128xf32> to vector<192x128xbf16>
    %cst_39 = arith.constant dense<0.000000e+00> : vector<192x128xf32>
    %56 = tpu.matmul %55, %54, %cst_39 {dimension_numbers = #tpu.dot_dimension_numbers<[1], [0], [0], [1], [0, 0, 1, 1], [], []>} : vector<192x128xbf16>, vector<128x128xbf16>, vector<192x128xf32> -> vector<192x128xf32>
    %57 = vector.extract_strided_slice %56 {offsets = [0, 0], sizes = [128, 128], strides = [1, 1]} : vector<192x128xf32> to vector<128x128xf32>
    %58 = vector.extract_strided_slice %56 {offsets = [128, 0], sizes = [64, 128], strides = [1, 1]} : vector<192x128xf32> to vector<64x128xf32>
    %c0_40 = arith.constant 0 : index
    %c0_41 = arith.constant 0 : index
    %59 = vector.load %arg12[%c0_40, %c0_41] : memref<128x64xbf16, #tpu.memory_space<vmem>>, vector<128x64xbf16>
    %60 = arith.truncf %58 : vector<64x128xf32> to vector<64x128xbf16>
    %cst_42 = arith.constant dense<0.000000e+00> : vector<128x128xf32>
    %61 = tpu.matmul %59, %60, %cst_42 {dimension_numbers = #tpu.dot_dimension_numbers<[1], [0], [0], [1], [0, 0, 1, 1], [], []>} : vector<128x64xbf16>, vector<64x128xbf16>, vector<128x128xf32> -> vector<128x128xf32>
    %c0_43 = arith.constant 0 : index
    %c0_44 = arith.constant 0 : index
    %62 = vector.load %arg13[%c0_43, %c0_44] : memref<128x256xbf16, #tpu.memory_space<vmem>>, vector<128x256xbf16>
    %63 = arith.truncf %61 : vector<128x128xf32> to vector<128x128xbf16>
    %cst_45 = arith.constant dense<0.000000e+00> : vector<128x256xf32>
    %64 = tpu.matmul %63, %62, %cst_45 {dimension_numbers = #tpu.dot_dimension_numbers<[1], [0], [0], [1], [0, 0, 1, 1], [], []>} : vector<128x128xbf16>, vector<128x256xbf16>, vector<128x256xf32> -> vector<128x256xf32>
    %65 = vector.extract_strided_slice %64 {offsets = [0, 0], sizes = [128, 128], strides = [1, 1]} : vector<128x256xf32> to vector<128x128xf32>
    %66 = vector.extract_strided_slice %64 {offsets = [0, 128], sizes = [128, 128], strides = [1, 1]} : vector<128x256xf32> to vector<128x128xf32>
    %cst_46 = arith.constant 1.402000e+00 : f32
    %67 = vector.broadcast %cst_46 : f32 to vector<128x128xf32>
    %68 = arith.mulf %67, %66 : vector<128x128xf32>
    %69 = arith.addf %57, %68 : vector<128x128xf32>
    %cst_47 = arith.constant 0.501960814 : f32
    %70 = vector.broadcast %cst_47 : f32 to vector<128x128xf32>
    %71 = arith.addf %69, %70 : vector<128x128xf32>
    %cst_48 = arith.constant 3.441360e-01 : f32
    %72 = vector.broadcast %cst_48 : f32 to vector<128x128xf32>
    %73 = arith.mulf %72, %65 : vector<128x128xf32>
    %74 = arith.subf %57, %73 : vector<128x128xf32>
    %cst_49 = arith.constant 7.141360e-01 : f32
    %75 = vector.broadcast %cst_49 : f32 to vector<128x128xf32>
    %76 = arith.mulf %75, %66 : vector<128x128xf32>
    %77 = arith.subf %74, %76 : vector<128x128xf32>
    %cst_50 = arith.constant 0.501960814 : f32
    %78 = vector.broadcast %cst_50 : f32 to vector<128x128xf32>
    %79 = arith.addf %77, %78 : vector<128x128xf32>
    %cst_51 = arith.constant 1.772000e+00 : f32
    %80 = vector.broadcast %cst_51 : f32 to vector<128x128xf32>
    %81 = arith.mulf %80, %65 : vector<128x128xf32>
    %82 = arith.addf %57, %81 : vector<128x128xf32>
    %cst_52 = arith.constant 0.501960814 : f32
    %83 = vector.broadcast %cst_52 : f32 to vector<128x128xf32>
    %84 = arith.addf %82, %83 : vector<128x128xf32>
    %cst_53 = arith.constant 0.000000e+00 : f32
    %85 = vector.broadcast %cst_53 : f32 to vector<128x128xf32>
    %86 = arith.maximumf %85, %71 : vector<128x128xf32>
    %cst_54 = arith.constant 1.000000e+00 : f32
    %87 = vector.broadcast %cst_54 : f32 to vector<128x128xf32>
    %88 = arith.minimumf %87, %86 : vector<128x128xf32>
    %c0_55 = arith.constant 0 : index
    %c0_56 = arith.constant 0 : index
    %c0_57 = arith.constant 0 : index
    %c0_58 = arith.constant 0 : index
    %89 = vector.load %arg14[%c0_55, %c0_56, %c0_57, %c0_58] : memref<1x3x128x128xf32, #tpu.memory_space<vmem>>, vector<1x1x128x128xf32>
    %90 = vector.shape_cast %89 : vector<1x1x128x128xf32> to vector<128x128xf32>
    %91 = vector.shape_cast %88 : vector<128x128xf32> to vector<1x1x128x128xf32>
    tpu.vector_store %arg14[%c0_55, %c0_56, %c0_57, %c0_58], %91 {strides = array<i32>} : memref<1x3x128x128xf32, #tpu.memory_space<vmem>>, vector<1x1x128x128xf32>,
    %cst_59 = arith.constant 0.000000e+00 : f32
    %92 = vector.broadcast %cst_59 : f32 to vector<128x128xf32>
    %93 = arith.maximumf %92, %79 : vector<128x128xf32>
    %cst_60 = arith.constant 1.000000e+00 : f32
    %94 = vector.broadcast %cst_60 : f32 to vector<128x128xf32>
    %95 = arith.minimumf %94, %93 : vector<128x128xf32>
    %c0_61 = arith.constant 0 : index
    %c1_62 = arith.constant 1 : index
    %c0_63 = arith.constant 0 : index
    %c0_64 = arith.constant 0 : index
    %96 = vector.load %arg14[%c0_61, %c1_62, %c0_63, %c0_64] : memref<1x3x128x128xf32, #tpu.memory_space<vmem>>, vector<1x1x128x128xf32>
    %97 = vector.shape_cast %96 : vector<1x1x128x128xf32> to vector<128x128xf32>
    %98 = vector.shape_cast %95 : vector<128x128xf32> to vector<1x1x128x128xf32>
    tpu.vector_store %arg14[%c0_61, %c1_62, %c0_63, %c0_64], %98 {strides = array<i32>} : memref<1x3x128x128xf32, #tpu.memory_space<vmem>>, vector<1x1x128x128xf32>,
    %cst_65 = arith.constant 0.000000e+00 : f32
    %99 = vector.broadcast %cst_65 : f32 to vector<128x128xf32>
    %100 = arith.maximumf %99, %84 : vector<128x128xf32>
    %cst_66 = arith.constant 1.000000e+00 : f32
    %101 = vector.broadcast %cst_66 : f32 to vector<128x128xf32>
    %102 = arith.minimumf %101, %100 : vector<128x128xf32>
    %c0_67 = arith.constant 0 : index
    %c2_68 = arith.constant 2 : index
    %c0_69 = arith.constant 0 : index
    %c0_70 = arith.constant 0 : index
    %103 = vector.load %arg14[%c0_67, %c2_68, %c0_69, %c0_70] : memref<1x3x128x128xf32, #tpu.memory_space<vmem>>, vector<1x1x128x128xf32>
    %104 = vector.shape_cast %103 : vector<1x1x128x128xf32> to vector<128x128xf32>
    %105 = vector.shape_cast %102 : vector<128x128xf32> to vector<1x1x128x128xf32>
    tpu.vector_store %arg14[%c0_67, %c2_68, %c0_69, %c0_70], %105 {strides = array<i32>} : memref<1x3x128x128xf32, #tpu.memory_space<vmem>>, vector<1x1x128x128xf32>,
    return
  }
  func.func @transform_0(%arg0: i32, %arg1: i32, %arg2: i32) -> (i32, i32, i32, i32) {
    %c0_i32 = arith.constant 0 : i32
    %c0_i32_0 = arith.constant 0 : i32
    return %arg0, %c0_i32, %arg1, %arg2 : i32, i32, i32, i32
  }
  func.func @transform_1(%arg0: i32, %arg1: i32, %arg2: i32) -> (i32, i32) {
    %c0_i32 = arith.constant 0 : i32
    %c0_i32_0 = arith.constant 0 : i32
    %c0_i32_1 = arith.constant 0 : i32
    return %c0_i32, %c0_i32_0 : i32, i32
  }
  func.func @transform_2(%arg0: i32, %arg1: i32, %arg2: i32) -> (i32, i32) {
    %c0_i32 = arith.constant 0 : i32
    %c0_i32_0 = arith.constant 0 : i32
    %c0_i32_1 = arith.constant 0 : i32
    return %c0_i32, %c0_i32_0 : i32, i32
  }
  func.func @transform_3(%arg0: i32, %arg1: i32, %arg2: i32) -> (i32, i32) {
    %c0_i32 = arith.constant 0 : i32
    %c0_i32_0 = arith.constant 0 : i32
    %c0_i32_1 = arith.constant 0 : i32
    return %c0_i32, %c0_i32_0 : i32, i32
  }
  func.func @transform_4(%arg0: i32, %arg1: i32, %arg2: i32) -> (i32, i32) {
    %c0_i32 = arith.constant 0 : i32
    %c0_i32_0 = arith.constant 0 : i32
    %c0_i32_1 = arith.constant 0 : i32
    return %c0_i32, %c0_i32_0 : i32, i32
  }
  func.func @transform_5(%arg0: i32, %arg1: i32, %arg2: i32) -> (i32, i32) {
    %c0_i32 = arith.constant 0 : i32
    %c0_i32_0 = arith.constant 0 : i32
    %c0_i32_1 = arith.constant 0 : i32
    return %c0_i32, %c0_i32_0 : i32, i32
  }
  func.func @transform_6(%arg0: i32, %arg1: i32, %arg2: i32) -> (i32, i32) {
    %c0_i32 = arith.constant 0 : i32
    %c0_i32_0 = arith.constant 0 : i32
    %c0_i32_1 = arith.constant 0 : i32
    return %c0_i32, %c0_i32_0 : i32, i32
  }
  func.func @transform_7(%arg0: i32, %arg1: i32, %arg2: i32) -> (i32, i32) {
    %c0_i32 = arith.constant 0 : i32
    %c0_i32_0 = arith.constant 0 : i32
    %c0_i32_1 = arith.constant 0 : i32
    return %c0_i32, %c0_i32_0 : i32, i32
  }
  func.func @transform_8(%arg0: i32, %arg1: i32, %arg2: i32) -> (i32, i32) {
    %c0_i32 = arith.constant 0 : i32
    %c0_i32_0 = arith.constant 0 : i32
    %c0_i32_1 = arith.constant 0 : i32
    return %c0_i32, %c0_i32_0 : i32, i32
  }
  func.func @transform_9(%arg0: i32, %arg1: i32, %arg2: i32) -> (i32, i32) {
    %c0_i32 = arith.constant 0 : i32
    %c0_i32_0 = arith.constant 0 : i32
    %c0_i32_1 = arith.constant 0 : i32
    return %c0_i32, %c0_i32_0 : i32, i32
  }
  func.func @transform_10(%arg0: i32, %arg1: i32, %arg2: i32) -> (i32, i32) {
    %c0_i32 = arith.constant 0 : i32
    %c0_i32_0 = arith.constant 0 : i32
    %c0_i32_1 = arith.constant 0 : i32
    return %c0_i32, %c0_i32_0 : i32, i32
  }
  func.func @transform_11(%arg0: i32, %arg1: i32, %arg2: i32) -> (i32, i32, i32, i32) {
    %c0_i32 = arith.constant 0 : i32
    %c0_i32_0 = arith.constant 0 : i32
    return %arg0, %c0_i32, %arg1, %arg2 : i32, i32, i32, i32
  }
}

</mosaic_0001>

<llo_original>
// kernel: tpu_custom_call.1
$region0: #{tpu_custom_call.1}
  #allocation0 [shape = 'u32[]', space=smem, size = 0x4, offset = 0x4, fixed_abs, tag = 'smem constant byte address 0x4 - core index']
  #allocation1 [shape = 'u32[72,128]{1,0:T(1,128)}', space=vmem, size = 0x9000, scoped, tag = 'internal scratch']
  %s0 = inlined_call_operand.hbm [shape: f32[2,3,128,128], index: 0, kind: input, shape index: {}]
  %s1 = inlined_call_operand.hbm [shape: f32[192,192], index: 1, kind: input, shape index: {}]
  %s2 = inlined_call_operand.hbm [shape: f32[128,128], index: 2, kind: input, shape index: {}]
  %s3 = inlined_call_operand.hbm [shape: bf16[192,192], index: 3, kind: input, shape index: {}]
  %s4 = inlined_call_operand.vmem [shape: bf16[128,128], index: 4, kind: input, shape index: {}]
  %s5 = inlined_call_operand.hbm [shape: f32[192,128], index: 5, kind: input, shape index: {}]
  %s6 = inlined_call_operand.hbm [shape: f32[192,128], index: 6, kind: input, shape index: {}]
  %s7 = inlined_call_operand.hbm [shape: f32[64,128], index: 7, kind: input, shape index: {}]
  %s8 = inlined_call_operand.hbm [shape: f32[256,128], index: 8, kind: input, shape index: {}]
  %s9 = inlined_call_operand.vmem [shape: bf16[128,64], index: 9, kind: input, shape index: {}]
  %s10 = inlined_call_operand.hbm [shape: bf16[128,256], index: 10, kind: input, shape index: {}]
  %s11 = inlined_call_operand.hbm [shape: f32[2,3,128,128], index: 11, kind: output, shape index: {}]
  %s12 = sld [smem:[#allocation0]]
  $region113: #{tpu_custom_call.1} parent=0
    _
  %s14 = ssub.s32 1, %s12
  %s15 = scalar_select 0, %s14, %s12
  $region1: #{tpu_custom_call.1} parent=0
    #allocation2 [shape = 'u8[393216]{0}', space=vmem, size = 0x60000, scoped, tag = 'input window, operand 0']
    #allocation3 [shape = 's32[2]{0}', space=sflag, size = 0x8, scoped, tag = 'scoped memory for tpu_custom_call.1']
    #allocation4 [shape = 's32[2]{0}', space=sflag, size = 0x8, scoped, tag = 'scoped memory for tpu_custom_call.1']
    #allocation5 [shape = 'u8[196608]{0}', space=vmem, size = 0x30000, scoped, tag = 'input window, operand 1, single buffered']
    #allocation6 [shape = 's32[1]{0}', space=sflag, size = 0x4, scoped, tag = 'scoped memory for tpu_custom_call.1']
    #allocation7 [shape = 'u8[65536]{0}', space=vmem, size = 0x10000, scoped, tag = 'input window, operand 2, single buffered']
    #allocation8 [shape = 'u8[98304]{0}', space=vmem, size = 0x18000, scoped, tag = 'input window, operand 3, single buffered']
    #allocation9 [shape = 's32[1]{0}', space=sflag, size = 0x4, scoped, tag = 'scoped memory for tpu_custom_call.1']
    #allocation10 [shape = 'u8[98304]{0}', space=vmem, size = 0x18000, scoped, tag = 'input window, operand 5, single buffered']
    #allocation11 [shape = 'u8[98304]{0}', space=vmem, size = 0x18000, scoped, tag = 'input window, operand 6, single buffered']
    #allocation12 [shape = 's32[1]{0}', space=sflag, size = 0x4, scoped, tag = 'scoped memory for tpu_custom_call.1']
    #allocation13 [shape = 'u8[32768]{0}', space=vmem, size = 0x8000, scoped, tag = 'input window, operand 7, single buffered']
    #allocation14 [shape = 'u8[131072]{0}', space=vmem, size = 0x20000, scoped, tag = 'input window, operand 8, single buffered']
    #allocation15 [shape = 's32[1]{0}', space=sflag, size = 0x4, scoped, tag = 'scoped memory for tpu_custom_call.1']
    #allocation16 [shape = 'u8[65536]{0}', space=vmem, size = 0x10000, scoped, tag = 'input window, operand 10, single buffered']
    #allocation17 [shape = 'u8[393216]{0}', space=vmem, size = 0x60000, scoped, tag = 'output window, operand 0']
    %16 = vsyncpa [#allocation3], 0
    %s17 = scalar_lea.sflag [#allocation3], 1
    %18 = vsyncpa %s17, 0
    %19 = vsyncpa [#allocation6], 0
    %20 = vsyncpa [#allocation9], 0
    %21 = vsyncpa [#allocation12], 0
    %22 = vsyncpa [#allocation15], 0
    %23 = vsyncpa [#allocation4], 0
    %s24 = scalar_lea.sflag [#allocation4], 1
    %25 = vsyncpa %s24, 0
    loop: start=0, step=1, limit=4
    $region2: #{tpu_custom_call.1} parent=1 // loop_pre_header
      _
    $region3: #{tpu_custom_call.1} parent=1 // loop_header
      %s27 = sphi 0, %s31
      %p28 = scmp.ge.s32.totalorder %s27, 4
      %s34 = sphi 0, %s53
      %s35 = sphi 0, %s49
      %s36 = sphi 0, %s45
      %s37 = sphi 0, %s34
      %s38 = sphi 0, %s35
      %s39 = sphi 0, %s36
      %s40 = sphi 0, %s37
      %s41 = sphi 0, %s38
      %s42 = sphi 0, %s39
      %s60 = sphi 0, %s62
      %s63 = sphi 0, %s60
      %s64 = sphi 0, %s63
      %s80 = sphi 0, %s64
      %s84 = sphi 0, %s84
      %s86 = sphi 0, %s84
      %s87 = sphi 0, %s86
      %s101 = sphi 0, %s87
      %s105 = sphi 0, %s105
      %s107 = sphi 0, %s105
      %s108 = sphi 0, %s107
      %s122 = sphi 0, %s108
      %s126 = sphi 0, %s126
      %s128 = sphi 0, %s126
      %s129 = sphi 0, %s128
      %s143 = sphi 0, %s129
      %s147 = sphi 0, %s147
      %s149 = sphi 0, %s147
      %s150 = sphi 0, %s149
      %s164 = sphi 0, %s150
      %s168 = sphi 0, %s168
      %s170 = sphi 0, %s168
      %s171 = sphi 0, %s170
      %s185 = sphi 0, %s171
      %s189 = sphi 0, %s189
      %s191 = sphi 0, %s189
      %s192 = sphi 0, %s191
      %s206 = sphi 0, %s192
      %s210 = sphi 0, %s210
      %s212 = sphi 0, %s210
      %s213 = sphi 0, %s212
      %s227 = sphi 0, %s213
      %s231 = sphi 0, %s231
      %s233 = sphi 0, %s231
      %s234 = sphi 0, %s233
      %s248 = sphi 0, %s234
      %s252 = sphi 0, %s252
      %s254 = sphi 0, %s252
      %s255 = sphi 0, %s254
      %s269 = sphi 0, %s255
      %s273 = sphi 0, %s273
      %s275 = sphi 0, %s273
      %s276 = sphi 0, %s275
      %s290 = sphi 0, %s276
      %s300 = sphi 0, %s302
      %s303 = sphi 0, %s300
      %s304 = sphi 0, %s303
      %s320 = sphi 0, %s304
    $region4: #{tpu_custom_call.1} parent=1 // loop_header_branch
      %30 = sbr.rel (%p28) target = $region8
    $region5: #{tpu_custom_call.1} parent=1 // loop_body
      %s32 = ssub.s32 %s27, 1
      %s33 = ssub.s32 %s27, 2
      %s43 = sadd.s32 1, %s36
      %p44 = scmp.ge.s32.totalorder %s43, 1
      %s45 = scalar_select %p44, 0, %s43
      %s46 = sadd.s32 1, %s35
      %s47 = scalar_select %p44, %s46, %s35
      %p48 = scmp.ge.s32.totalorder %s47, 1
      %s49 = scalar_select %p48, 0, %s47
      %s50 = sadd.s32 1, %s34
      %s51 = scalar_select %p48, %s50, %s34
      %p52 = scmp.ge.s32.totalorder %s51, 2
      %s53 = scalar_select %p52, 0, %s51
      %s54 = ssub.s32 %s34, %s53
      %s55 = ssub.s32 %s35, %s49
      %s56 = sor.u32 %s54, %s55
      %s57 = ssub.s32 %s36, %s45
      %s58 = sor.u32 %s56, %s57
      %p59 = scmp.eq.s32.totalorder %s58, 0
      %s61 = sadd.s32 %s60, 1
      %s62 = scalar_select %p59, %s60, %s61
      %p65 = pneg %p59
      %p66 = scmp.eq.s32.totalorder %s27, 1
      %p67 = por %p65, %p66
      %p68 = scmp.ne.s32.totalorder %s60, %s63
      %p69 = scmp.eq.s32.totalorder %s27, 0
      %p70 = por %p68, %p69
      %p71 = scmp.ne.s32.totalorder %s60, %s63
      %p72 = scmp.eq.s32.totalorder %s32, 1
      %p73 = por %p71, %p72
      %p74 = scmp.ne.s32.totalorder %s63, %s64
      %p75 = scmp.eq.s32.totalorder %s32, 0
      %p76 = por %p74, %p75
      %p77 = scmp.ne.s32.totalorder %s63, %s64
      %p78 = scmp.eq.s32.totalorder %s33, 1
      %p79 = por %p77, %p78
      %p81 = scmp.ne.s32.totalorder %s64, %s80
      %p82 = scmp.eq.s32.totalorder %s33, 0
      %p83 = por %p81, %p82
      %s85 = sadd.s32 %s84, 1
      %p88 = scmp.eq.s32.totalorder %s27, 1
      %p89 = scmp.ne.s32.totalorder %s84, %s86
      %p90 = scmp.eq.s32.totalorder %s27, 0
      %p91 = por %p89, %p90
      %p92 = scmp.ne.s32.totalorder %s84, %s86
      %p93 = scmp.eq.s32.totalorder %s32, 1
      %p94 = por %p92, %p93
      %p95 = scmp.ne.s32.totalorder %s86, %s87
      %p96 = scmp.eq.s32.totalorder %s32, 0
      %p97 = por %p95, %p96
      %p98 = scmp.ne.s32.totalorder %s86, %s87
      %p99 = scmp.eq.s32.totalorder %s33, 1
      %p100 = por %p98, %p99
      %p102 = scmp.ne.s32.totalorder %s87, %s101
      %p103 = scmp.eq.s32.totalorder %s33, 0
      %p104 = por %p102, %p103
      %s106 = sadd.s32 %s105, 1
      %p109 = scmp.eq.s32.totalorder %s27, 1
      %p110 = scmp.ne.s32.totalorder %s105, %s107
      %p111 = scmp.eq.s32.totalorder %s27, 0
      %p112 = por %p110, %p111
      %p113 = scmp.ne.s32.totalorder %s105, %s107
      %p114 = scmp.eq.s32.totalorder %s32, 1
      %p115 = por %p113, %p114
      %p116 = scmp.ne.s32.totalorder %s107, %s108
      %p117 = scmp.eq.s32.totalorder %s32, 0
      %p118 = por %p116, %p117
      %p119 = scmp.ne.s32.totalorder %s107, %s108
      %p120 = scmp.eq.s32.totalorder %s33, 1
      %p121 = por %p119, %p120
      %p123 = scmp.ne.s32.totalorder %s108, %s122
      %p124 = scmp.eq.s32.totalorder %s33, 0
      %p125 = por %p123, %p124
      %s127 = sadd.s32 %s126, 1
      %p130 = scmp.eq.s32.totalorder %s27, 1
      %p131 = scmp.ne.s32.totalorder %s126, %s128
      %p132 = scmp.eq.s32.totalorder %s27, 0
      %p133 = por %p131, %p132
      %p134 = scmp.ne.s32.totalorder %s126, %s128
      %p135 = scmp.eq.s32.totalorder %s32, 1
      %p136 = por %p134, %p135
      %p137 = scmp.ne.s32.totalorder %s128, %s129
      %p138 = scmp.eq.s32.totalorder %s32, 0
      %p139 = por %p137, %p138
      %p140 = scmp.ne.s32.totalorder %s128, %s129
      %p141 = scmp.eq.s32.totalorder %s33, 1
      %p142 = por %p140, %p141
      %p144 = scmp.ne.s32.totalorder %s129, %s143
      %p145 = scmp.eq.s32.totalorder %s33, 0
      %p146 = por %p144, %p145
      %s148 = sadd.s32 %s147, 1
      %p151 = scmp.eq.s32.totalorder %s27, 1
      %p152 = scmp.ne.s32.totalorder %s147, %s149
      %p153 = scmp.eq.s32.totalorder %s27, 0
      %p154 = por %p152, %p153
      %p155 = scmp.ne.s32.totalorder %s147, %s149
      %p156 = scmp.eq.s32.totalorder %s32, 1
      %p157 = por %p155, %p156
      %p158 = scmp.ne.s32.totalorder %s149, %s150
      %p159 = scmp.eq.s32.totalorder %s32, 0
      %p160 = por %p158, %p159
      %p161 = scmp.ne.s32.totalorder %s149, %s150
      %p162 = scmp.eq.s32.totalorder %s33, 1
      %p163 = por %p161, %p162
      %p165 = scmp.ne.s32.totalorder %s150, %s164
      %p166 = scmp.eq.s32.totalorder %s33, 0
      %p167 = por %p165, %p166
      %s169 = sadd.s32 %s168, 1
      %p172 = scmp.eq.s32.totalorder %s27, 1
      %p173 = scmp.ne.s32.totalorder %s168, %s170
      %p174 = scmp.eq.s32.totalorder %s27, 0
      %p175 = por %p173, %p174
      %p176 = scmp.ne.s32.totalorder %s168, %s170
      %p177 = scmp.eq.s32.totalorder %s32, 1
      %p178 = por %p176, %p177
      %p179 = scmp.ne.s32.totalorder %s170, %s171
      %p180 = scmp.eq.s32.totalorder %s32, 0
      %p181 = por %p179, %p180
      %p182 = scmp.ne.s32.totalorder %s170, %s171
      %p183 = scmp.eq.s32.totalorder %s33, 1
      %p184 = por %p182, %p183
      %p186 = scmp.ne.s32.totalorder %s171, %s185
      %p187 = scmp.eq.s32.totalorder %s33, 0
      %p188 = por %p186, %p187
      %s190 = sadd.s32 %s189, 1
      %p193 = scmp.eq.s32.totalorder %s27, 1
      %p194 = scmp.ne.s32.totalorder %s189, %s191
      %p195 = scmp.eq.s32.totalorder %s27, 0
      %p196 = por %p194, %p195
      %p197 = scmp.ne.s32.totalorder %s189, %s191
      %p198 = scmp.eq.s32.totalorder %s32, 1
      %p199 = por %p197, %p198
      %p200 = scmp.ne.s32.totalorder %s191, %s192
      %p201 = scmp.eq.s32.totalorder %s32, 0
      %p202 = por %p200, %p201
      %p203 = scmp.ne.s32.totalorder %s191, %s192
      %p204 = scmp.eq.s32.totalorder %s33, 1
      %p205 = por %p203, %p204
      %p207 = scmp.ne.s32.totalorder %s192, %s206
      %p208 = scmp.eq.s32.totalorder %s33, 0
      %p209 = por %p207, %p208
      %s211 = sadd.s32 %s210, 1
      %p214 = scmp.eq.s32.totalorder %s27, 1
      %p215 = scmp.ne.s32.totalorder %s210, %s212
      %p216 = scmp.eq.s32.totalorder %s27, 0
      %p217 = por %p215, %p216
      %p218 = scmp.ne.s32.totalorder %s210, %s212
      %p219 = scmp.eq.s32.totalorder %s32, 1
      %p220 = por %p218, %p219
      %p221 = scmp.ne.s32.totalorder %s212, %s213
      %p222 = scmp.eq.s32.totalorder %s32, 0
      %p223 = por %p221, %p222
      %p224 = scmp.ne.s32.totalorder %s212, %s213
      %p225 = scmp.eq.s32.totalorder %s33, 1
      %p226 = por %p224, %p225
      %p228 = scmp.ne.s32.totalorder %s213, %s227
      %p229 = scmp.eq.s32.totalorder %s33, 0
      %p230 = por %p228, %p229
      %s232 = sadd.s32 %s231, 1
      %p235 = scmp.eq.s32.totalorder %s27, 1
      %p236 = scmp.ne.s32.totalorder %s231, %s233
      %p237 = scmp.eq.s32.totalorder %s27, 0
      %p238 = por %p236, %p237
      %p239 = scmp.ne.s32.totalorder %s231, %s233
      %p240 = scmp.eq.s32.totalorder %s32, 1
      %p241 = por %p239, %p240
      %p242 = scmp.ne.s32.totalorder %s233, %s234
      %p243 = scmp.eq.s32.totalorder %s32, 0
      %p244 = por %p242, %p243
      %p245 = scmp.ne.s32.totalorder %s233, %s234
      %p246 = scmp.eq.s32.totalorder %s33, 1
      %p247 = por %p245, %p246
      %p249 = scmp.ne.s32.totalorder %s234, %s248
      %p250 = scmp.eq.s32.totalorder %s33, 0
      %p251 = por %p249, %p250
      %s253 = sadd.s32 %s252, 1
      %p256 = scmp.eq.s32.totalorder %s27, 1
      %p257 = scmp.ne.s32.totalorder %s252, %s254
      %p258 = scmp.eq.s32.totalorder %s27, 0
      %p259 = por %p257, %p258
      %p260 = scmp.ne.s32.totalorder %s252, %s254
      %p261 = scmp.eq.s32.totalorder %s32, 1
      %p262 = por %p260, %p261
      %p263 = scmp.ne.s32.totalorder %s254, %s255
      %p264 = scmp.eq.s32.totalorder %s32, 0
      %p265 = por %p263, %p264
      %p266 = scmp.ne.s32.totalorder %s254, %s255
      %p267 = scmp.eq.s32.totalorder %s33, 1
      %p268 = por %p266, %p267
      %p270 = scmp.ne.s32.totalorder %s255, %s269
      %p271 = scmp.eq.s32.totalorder %s33, 0
      %p272 = por %p270, %p271
      %s274 = sadd.s32 %s273, 1
      %p277 = scmp.eq.s32.totalorder %s27, 1
      %p278 = scmp.ne.s32.totalorder %s273, %s275
      %p279 = scmp.eq.s32.totalorder %s27, 0
      %p280 = por %p278, %p279
      %p281 = scmp.ne.s32.totalorder %s273, %s275
      %p282 = scmp.eq.s32.totalorder %s32, 1
      %p283 = por %p281, %p282
      %p284 = scmp.ne.s32.totalorder %s275, %s276
      %p285 = scmp.eq.s32.totalorder %s32, 0
      %p286 = por %p284, %p285
      %p287 = scmp.ne.s32.totalorder %s275, %s276
      %p288 = scmp.eq.s32.totalorder %s33, 1
      %p289 = por %p287, %p288
      %p291 = scmp.ne.s32.totalorder %s276, %s290
      %p292 = scmp.eq.s32.totalorder %s33, 0
      %p293 = por %p291, %p292
      %s294 = ssub.s32 %s34, %s53
      %s295 = ssub.s32 %s35, %s49
      %s296 = sor.u32 %s294, %s295
      %s297 = ssub.s32 %s36, %s45
      %s298 = sor.u32 %s296, %s297
      %p299 = scmp.eq.s32.totalorder %s298, 0
      %s301 = sadd.s32 %s300, 1
      %s302 = scalar_select %p299, %s300, %s301
      %p305 = pneg %p299
      %p306 = scmp.eq.s32.totalorder %s27, 1
      %p307 = por %p305, %p306
      %p308 = scmp.ne.s32.totalorder %s300, %s303
      %p309 = scmp.eq.s32.totalorder %s27, 0
      %p310 = por %p308, %p309
      %p311 = scmp.ne.s32.totalorder %s300, %s303
      %p312 = scmp.eq.s32.totalorder %s32, 1
      %p313 = por %p311, %p312
      %p314 = scmp.ne.s32.totalorder %s303, %s304
      %p315 = scmp.eq.s32.totalorder %s32, 0
      %p316 = por %p314, %p315
      %p317 = scmp.ne.s32.totalorder %s303, %s304
      %p318 = scmp.eq.s32.totalorder %s33, 1
      %p319 = por %p317, %p318
      %p321 = scmp.ne.s32.totalorder %s304, %s320
      %p322 = scmp.eq.s32.totalorder %s33, 0
      %p323 = por %p321, %p322
      %p324 = scmp.le.s32.totalorder 1, %s27
      %p325 = scmp.lt.s32.totalorder %s27, 3
      %p326 = pnand %p324, %p325
      %p327 = pneg %p326
      // Predicated region
      $region9: #{tpu_custom_call.1} parent=5 // pred_check
        _
      $region10: #{tpu_custom_call.1} parent=5 // pred_check_branch
        %329 = sbr.rel (%p326) target = $region12
      $region11: #{tpu_custom_call.1} parent=5 // pred_region
        %s330 = ssub.s32 %s27, 1
        // Predicated region
        $region13: #{tpu_custom_call.1} parent=11 // pred_check
          %p331 = pneg %p97
        $region14: #{tpu_custom_call.1} parent=11 // pred_check_branch
          %333 = sbr.rel (%p331) target = $region16
        $region15: #{tpu_custom_call.1} parent=11 // pred_region
          %335 = vsyncadd [#allocation6], 0
          %s336 = sshll.u32 %s1, 4
          %s337 = int_to_ptr.hbm [resolvable:$true] %s336
          %s338 = sshll.u32 [#allocation5], 4
          %s339 = int_to_ptr.vmem [resolvable:$true] %s338
          %344 = dma.hbm_to_vmem [thread:$0]  %s337, 6144, %s339, [#allocation6], 256, 256, 16
        $region16: #{tpu_custom_call.1} parent=11 // pred_fallthru
          _
        // Predicated region
        $region17: #{tpu_custom_call.1} parent=11 // pred_check
          %p345 = pneg %p118
        $region18: #{tpu_custom_call.1} parent=11 // pred_check_branch
          %347 = sbr.rel (%p345) target = $region20
        $region19: #{tpu_custom_call.1} parent=11 // pred_region
          %349 = vsyncadd [#allocation6], 0
          %s350 = sshll.u32 %s2, 4
          %s351 = int_to_ptr.hbm [resolvable:$true] %s350
          %s352 = sshll.u32 [#allocation7], 4
          %s353 = int_to_ptr.vmem [resolvable:$true] %s352
          %358 = dma.hbm_to_vmem [thread:$0]  %s351, 2048, %s353, [#allocation6], 128, 128, 8
        $region20: #{tpu_custom_call.1} parent=11 // pred_fallthru
          _
        // Predicated region
        $region21: #{tpu_custom_call.1} parent=11 // pred_check
          %p359 = pneg %p139
        $region22: #{tpu_custom_call.1} parent=11 // pred_check_branch
          %361 = sbr.rel (%p359) target = $region24
        $region23: #{tpu_custom_call.1} parent=11 // pred_region
          %363 = vsyncadd [#allocation9], 0
          %s364 = sshll.u32 %s3, 4
          %s365 = int_to_ptr.hbm [resolvable:$true] %s364
          %s366 = sshll.u32 [#allocation8], 4
          %s367 = int_to_ptr.vmem [resolvable:$true] %s366
          %372 = dma.hbm_to_vmem [thread:$0]  %s365, 3072, %s367, [#allocation9], 128, 128, 8
        $region24: #{tpu_custom_call.1} parent=11 // pred_fallthru
          _
        // Predicated region
        $region25: #{tpu_custom_call.1} parent=11 // pred_check
          %p373 = pneg %p160
        $region26: #{tpu_custom_call.1} parent=11 // pred_check_branch
          %375 = sbr.rel (%p373) target = $region28
        $region27: #{tpu_custom_call.1} parent=11 // pred_region
          _
        $region28: #{tpu_custom_call.1} parent=11 // pred_fallthru
          _
        // Predicated region
        $region29: #{tpu_custom_call.1} parent=11 // pred_check
          %p376 = pneg %p181
        $region30: #{tpu_custom_call.1} parent=11 // pred_check_branch
          %378 = sbr.rel (%p376) target = $region32
        $region31: #{tpu_custom_call.1} parent=11 // pred_region
          %380 = vsyncadd [#allocation9], 0
          %s381 = sshll.u32 %s5, 4
          %s382 = int_to_ptr.hbm [resolvable:$true] %s381
          %s383 = sshll.u32 [#allocation10], 4
          %s384 = int_to_ptr.vmem [resolvable:$true] %s383
          %389 = dma.hbm_to_vmem [thread:$0]  %s382, 3072, %s384, [#allocation9], 128, 128, 8
        $region32: #{tpu_custom_call.1} parent=11 // pred_fallthru
          _
        // Predicated region
        $region33: #{tpu_custom_call.1} parent=11 // pred_check
          %p390 = pneg %p202
        $region34: #{tpu_custom_call.1} parent=11 // pred_check_branch
          %392 = sbr.rel (%p390) target = $region36
        $region35: #{tpu_custom_call.1} parent=11 // pred_region
          %394 = vsyncadd [#allocation12], 0
          %s395 = sshll.u32 %s6, 4
          %s396 = int_to_ptr.hbm [resolvable:$true] %s395
          %s397 = sshll.u32 [#allocation11], 4
          %s398 = int_to_ptr.vmem [resolvable:$true] %s397
          %403 = dma.hbm_to_vmem [thread:$0]  %s396, 3072, %s398, [#allocation12], 128, 128, 8
        $region36: #{tpu_custom_call.1} parent=11 // pred_fallthru
          _
        // Predicated region
        $region37: #{tpu_custom_call.1} parent=11 // pred_check
          %p404 = pneg %p223
        $region38: #{tpu_custom_call.1} parent=11 // pred_check_branch
          %406 = sbr.rel (%p404) target = $region40
        $region39: #{tpu_custom_call.1} parent=11 // pred_region
          %408 = vsyncadd [#allocation12], 0
          %s409 = sshll.u32 %s7, 4
          %s410 = int_to_ptr.hbm [resolvable:$true] %s409
          %s411 = sshll.u32 [#allocation13], 4
          %s412 = int_to_ptr.vmem [resolvable:$true] %s411
          %417 = dma.hbm_to_vmem [thread:$0]  %s410, 1024, %s412, [#allocation12], 128, 128, 8
        $region40: #{tpu_custom_call.1} parent=11 // pred_fallthru
          _
        // Predicated region
        $region41: #{tpu_custom_call.1} parent=11 // pred_check
          %p418 = pneg %p244
        $region42: #{tpu_custom_call.1} parent=11 // pred_check_branch
          %420 = sbr.rel (%p418) target = $region44
        $region43: #{tpu_custom_call.1} parent=11 // pred_region
          %422 = vsyncadd [#allocation15], 0
          %s423 = sshll.u32 %s8, 4
          %s424 = int_to_ptr.hbm [resolvable:$true] %s423
          %s425 = sshll.u32 [#allocation14], 4
          %s426 = int_to_ptr.vmem [resolvable:$true] %s425
          %431 = dma.hbm_to_vmem [thread:$0]  %s424, 4096, %s426, [#allocation15], 128, 128, 8
        $region44: #{tpu_custom_call.1} parent=11 // pred_fallthru
          _
        // Predicated region
        $region45: #{tpu_custom_call.1} parent=11 // pred_check
          %p432 = pneg %p265
        $region46: #{tpu_custom_call.1} parent=11 // pred_check_branch
          %434 = sbr.rel (%p432) target = $region48
        $region47: #{tpu_custom_call.1} parent=11 // pred_region
          _
        $region48: #{tpu_custom_call.1} parent=11 // pred_fallthru
          _
        // Predicated region
        $region49: #{tpu_custom_call.1} parent=11 // pred_check
          %p435 = pneg %p286
        $region50: #{tpu_custom_call.1} parent=11 // pred_check_branch
          %437 = sbr.rel (%p435) target = $region52
        $region51: #{tpu_custom_call.1} parent=11 // pred_region
          %439 = vsyncadd [#allocation15], 0
          %s440 = sshll.u32 %s10, 4
          %s441 = int_to_ptr.hbm [resolvable:$true] %s440
          %s442 = sshll.u32 [#allocation16], 4
          %s443 = int_to_ptr.vmem [resolvable:$true] %s442
          %448 = dma.hbm_to_vmem [thread:$0]  %s441, 2048, %s443, [#allocation15], 128, 128, 8
        $region52: #{tpu_custom_call.1} parent=11 // pred_fallthru
          _
      $region12: #{tpu_custom_call.1} parent=5 // pred_fallthru
        _
      %p449 = scmp.lt.s32.totalorder %s27, 2
      // Predicated region
      $region53: #{tpu_custom_call.1} parent=5 // pred_check
        %p450 = pneg %p449
      $region54: #{tpu_custom_call.1} parent=5 // pred_check_branch
        %452 = sbr.rel (%p450) target = $region56
      $region55: #{tpu_custom_call.1} parent=5 // pred_region
        // Predicated region
        $region57: #{tpu_custom_call.1} parent=55 // pred_check
          %p453 = pneg %p70
        $region58: #{tpu_custom_call.1} parent=55 // pred_check_branch
          %455 = sbr.rel (%p453) target = $region60
        $region59: #{tpu_custom_call.1} parent=55 // pred_region
          %s456 = sand.u32 %s60, 1
          %s457 = scalar_lea.sflag [#allocation3], %s456
          %s458 = sand.u32 %s60, 1
          %s459 = smul.addr %s458, 384
          %s460 = scalar_lea.vmem [#allocation2], %s459
          %s461 = smul.u32 16, %s35
          %463 = vsyncadd %s457, 0
          %s464 = sadd.s32 %s36, %s461
          %s465 = smul.addr %s34, 48
          %s466 = sadd.s32 %s464, %s465
          %s467 = smul.addr %s466, 8
          %s468 = scalar_lea.hbm %s0, %s467
          %s469 = sshll.u32 %s468, 4
          %s470 = int_to_ptr.hbm [resolvable:$true] %s469
          %s471 = sshll.u32 %s460, 4
          %s472 = int_to_ptr.vmem [resolvable:$true] %s471
          %477 = dma.hbm_to_vmem [thread:$0]  %s470, 6144, %s472, %s457, 128, 128, 8
        $region60: #{tpu_custom_call.1} parent=55 // pred_fallthru
          _
      $region56: #{tpu_custom_call.1} parent=5 // pred_fallthru
        _
      %p478 = scmp.le.s32.totalorder 1, %s27
      %p479 = scmp.lt.s32.totalorder %s27, 3
      %p480 = pnand %p478, %p479
      %p481 = pneg %p480
      // Predicated region
      $region61: #{tpu_custom_call.1} parent=5 // pred_check
        _
      $region62: #{tpu_custom_call.1} parent=5 // pred_check_branch
        %483 = sbr.rel (%p480) target = $region64
      $region63: #{tpu_custom_call.1} parent=5 // pred_region
        %s484 = ssub.s32 %s27, 1
        %s485 = sand.u32 %s63, 1
        %s486 = scalar_lea.sflag [#allocation3], %s485
        %s487 = sand.u32 %s63, 1
        %s488 = smul.addr %s487, 384
        %s489 = scalar_lea.vmem [#allocation2], %s488
        // Predicated region
        $region65: #{tpu_custom_call.1} parent=63 // pred_check
          %p490 = pneg %p76
        $region66: #{tpu_custom_call.1} parent=63 // pred_check_branch
          %492 = sbr.rel (%p490) target = $region68
        $region67: #{tpu_custom_call.1} parent=63 // pred_region
          %494 = dma.done %s486, 6144
        $region68: #{tpu_custom_call.1} parent=63 // pred_fallthru
          _
        // Predicated region
        $region69: #{tpu_custom_call.1} parent=63 // pred_check
          %p495 = pneg %p97
        $region70: #{tpu_custom_call.1} parent=63 // pred_check_branch
          %497 = sbr.rel (%p495) target = $region72
        $region71: #{tpu_custom_call.1} parent=63 // pred_region
          %499 = dma.done [#allocation6], 6144
        $region72: #{tpu_custom_call.1} parent=63 // pred_fallthru
          _
        // Predicated region
        $region73: #{tpu_custom_call.1} parent=63 // pred_check
          %p500 = pneg %p118
        $region74: #{tpu_custom_call.1} parent=63 // pred_check_branch
          %502 = sbr.rel (%p500) target = $region76
        $region75: #{tpu_custom_call.1} parent=63 // pred_region
          %504 = dma.done [#allocation6], 2048
        $region76: #{tpu_custom_call.1} parent=63 // pred_fallthru
          _
        // Predicated region
        $region77: #{tpu_custom_call.1} parent=63 // pred_check
          %p505 = pneg %p139
        $region78: #{tpu_custom_call.1} parent=63 // pred_check_branch
          %507 = sbr.rel (%p505) target = $region80
        $region79: #{tpu_custom_call.1} parent=63 // pred_region
          %509 = dma.done [#allocation9], 3072
        $region80: #{tpu_custom_call.1} parent=63 // pred_fallthru
          _
        // Predicated region
        $region81: #{tpu_custom_call.1} parent=63 // pred_check
          %p510 = pneg %p181
        $region82: #{tpu_custom_call.1} parent=63 // pred_check_branch
          %512 = sbr.rel (%p510) target = $region84
        $region83: #{tpu_custom_call.1} parent=63 // pred_region
          %514 = dma.done [#allocation9], 3072
        $region84: #{tpu_custom_call.1} parent=63 // pred_fallthru
          _
        // Predicated region
        $region85: #{tpu_custom_call.1} parent=63 // pred_check
          %p515 = pneg %p202
        $region86: #{tpu_custom_call.1} parent=63 // pred_check_branch
          %517 = sbr.rel (%p515) target = $region88
        $region87: #{tpu_custom_call.1} parent=63 // pred_region
          %519 = dma.done [#allocation12], 3072
        $region88: #{tpu_custom_call.1} parent=63 // pred_fallthru
          _
        // Predicated region
        $region89: #{tpu_custom_call.1} parent=63 // pred_check
          %p520 = pneg %p223
        $region90: #{tpu_custom_call.1} parent=63 // pred_check_branch
          %522 = sbr.rel (%p520) target = $region92
        $region91: #{tpu_custom_call.1} parent=63 // pred_region
          %524 = dma.done [#allocation12], 1024
        $region92: #{tpu_custom_call.1} parent=63 // pred_fallthru
          _
        // Predicated region
        $region93: #{tpu_custom_call.1} parent=63 // pred_check
          %p525 = pneg %p244
        $region94: #{tpu_custom_call.1} parent=63 // pred_check_branch
          %527 = sbr.rel (%p525) target = $region96
        $region95: #{tpu_custom_call.1} parent=63 // pred_region
          %529 = dma.done [#allocation15], 4096
        $region96: #{tpu_custom_call.1} parent=63 // pred_fallthru
          _
        // Predicated region
        $region97: #{tpu_custom_call.1} parent=63 // pred_check
          %p530 = pneg %p286
        $region98: #{tpu_custom_call.1} parent=63 // pred_check_branch
          %532 = sbr.rel (%p530) target = $region100
        $region99: #{tpu_custom_call.1} parent=63 // pred_region
          %534 = dma.done [#allocation15], 2048
        $region100: #{tpu_custom_call.1} parent=63 // pred_fallthru
          _
        %s535 = sand.u32 %s63, 1
        %s536 = scalar_lea.sflag [#allocation3], %s535
        %s537 = sand.u32 %s63, 1
        %s538 = smul.addr %s537, 384
        %s539 = scalar_lea.vmem [#allocation2], %s538
        %p540 = pneg %p76
        %p541 = pneg %p73
        %p542 = pneg %p97
        %p543 = pneg %p94
        %p544 = pneg %p118
        %p545 = pneg %p115
        %p546 = pneg %p139
        %p547 = pneg %p136
        %p548 = pneg %p160
        %p549 = pneg %p157
        %p550 = pneg %p181
        %p551 = pneg %p178
        %p552 = pneg %p202
        %p553 = pneg %p199
        %p554 = pneg %p223
        %p555 = pneg %p220
        %p556 = pneg %p244
        %p557 = pneg %p241
        %p558 = pneg %p265
        %p559 = pneg %p262
        %p560 = pneg %p286
        %p561 = pneg %p283
        %p562 = pneg %p316
        %p563 = pneg %p313
        %s564 = sand.u32 %s303, 1
        %s565 = scalar_lea.sflag [#allocation4], %s564
        %s566 = sand.u32 %s303, 1
        %s567 = smul.addr %s566, 384
        %s568 = scalar_lea.vmem [#allocation17], %s567
        %s569 = smul.u32 16, %s38
        %s570 = smul.u32 16, %s38
        %v572 = vld [vmem:[%s489] sm:$0xff]
        %v573 = vld [vmem:[%s489 + $0x8] sm:$0xff]
        %v574 = vld [vmem:[%s489 + $0x10] sm:$0xff]
        %v575 = vld [vmem:[%s489 + $0x18] sm:$0xff]
        %v576 = vld [vmem:[%s489 + $0x20] sm:$0xff]
        %v577 = vld [vmem:[%s489 + $0x28] sm:$0xff]
        %v578 = vld [vmem:[%s489 + $0x30] sm:$0xff]
        %v579 = vld [vmem:[%s489 + $0x38] sm:$0xff]
        %v580 = vld [vmem:[%s489 + $0x40] sm:$0xff]
        %v581 = vld [vmem:[%s489 + $0x48] sm:$0xff]
        %v582 = vld [vmem:[%s489 + $0x50] sm:$0xff]
        %v583 = vld [vmem:[%s489 + $0x58] sm:$0xff]
        %v584 = vld [vmem:[%s489 + $0x60] sm:$0xff]
        %v585 = vld [vmem:[%s489 + $0x68] sm:$0xff]
        %v586 = vld [vmem:[%s489 + $0x70] sm:$0xff]
        %v587 = vld [vmem:[%s489 + $0x78] sm:$0xff]
        %s588 = scalar_lea.vmem %s489, 128 [#allocation2]
        %v589 = vld [vmem:[%s588] sm:$0xff]
        %v590 = vld [vmem:[%s588 + $0x8] sm:$0xff]
        %v591 = vld [vmem:[%s588 + $0x10] sm:$0xff]
        %v592 = vld [vmem:[%s588 + $0x18] sm:$0xff]
        %v593 = vld [vmem:[%s588 + $0x20] sm:$0xff]
        %v594 = vld [vmem:[%s588 + $0x28] sm:$0xff]
        %v595 = vld [vmem:[%s588 + $0x30] sm:$0xff]
        %v596 = vld [vmem:[%s588 + $0x38] sm:$0xff]
        %v597 = vld [vmem:[%s588 + $0x40] sm:$0xff]
        %v598 = vld [vmem:[%s588 + $0x48] sm:$0xff]
        %v599 = vld [vmem:[%s588 + $0x50] sm:$0xff]
        %v600 = vld [vmem:[%s588 + $0x58] sm:$0xff]
        %v601 = vld [vmem:[%s588 + $0x60] sm:$0xff]
        %v602 = vld [vmem:[%s588 + $0x68] sm:$0xff]
        %v603 = vld [vmem:[%s588 + $0x70] sm:$0xff]
        %v604 = vld [vmem:[%s588 + $0x78] sm:$0xff]
        %s605 = scalar_lea.vmem %s489, 256 [#allocation2]
        %v606 = vld [vmem:[%s605] sm:$0xff]
        %v607 = vld [vmem:[%s605 + $0x8] sm:$0xff]
        %v608 = vld [vmem:[%s605 + $0x10] sm:$0xff]
        %v609 = vld [vmem:[%s605 + $0x18] sm:$0xff]
        %v610 = vld [vmem:[%s605 + $0x20] sm:$0xff]
        %v611 = vld [vmem:[%s605 + $0x28] sm:$0xff]
        %v612 = vld [vmem:[%s605 + $0x30] sm:$0xff]
        %v613 = vld [vmem:[%s605 + $0x38] sm:$0xff]
        %v614 = vld [vmem:[%s605 + $0x40] sm:$0xff]
        %v615 = vld [vmem:[%s605 + $0x48] sm:$0xff]
        %v616 = vld [vmem:[%s605 + $0x50] sm:$0xff]
        %v617 = vld [vmem:[%s605 + $0x58] sm:$0xff]
        %v618 = vld [vmem:[%s605 + $0x60] sm:$0xff]
        %v619 = vld [vmem:[%s605 + $0x68] sm:$0xff]
        %v620 = vld [vmem:[%s605 + $0x70] sm:$0xff]
        %v621 = vld [vmem:[%s605 + $0x78] sm:$0xff]
        %v622 = vmul.f32 %v572, 76.245
        %v623 = vmul.f32 %v573, 76.245
        %v624 = vmul.f32 %v574, 76.245
        %v625 = vmul.f32 %v575, 76.245
        %v626 = vmul.f32 %v576, 76.245
        %v627 = vmul.f32 %v577, 76.245
        %v628 = vmul.f32 %v578, 76.245
        %v629 = vmul.f32 %v579, 76.245
        %v630 = vmul.f32 %v580, 76.245
        %v631 = vmul.f32 %v581, 76.245
        %v632 = vmul.f32 %v582, 76.245
        %v633 = vmul.f32 %v583, 76.245
        %v634 = vmul.f32 %v584, 76.245
        %v635 = vmul.f32 %v585, 76.245
        %v636 = vmul.f32 %v586, 76.245
        %v637 = vmul.f32 %v587, 76.245
        %v638 = vmul.f32 %v589, 149.685
        %v639 = vmul.f32 %v590, 149.685
        %v640 = vmul.f32 %v591, 149.685
        %v641 = vmul.f32 %v592, 149.685
        %v642 = vmul.f32 %v593, 149.685
        %v643 = vmul.f32 %v594, 149.685
        %v644 = vmul.f32 %v595, 149.685
        %v645 = vmul.f32 %v596, 149.685
        %v646 = vmul.f32 %v597, 149.685
        %v647 = vmul.f32 %v598, 149.685
        %v648 = vmul.f32 %v599, 149.685
        %v649 = vmul.f32 %v600, 149.685
        %v650 = vmul.f32 %v601, 149.685
        %v651 = vmul.f32 %v602, 149.685
        %v652 = vmul.f32 %v603, 149.685
        %v653 = vmul.f32 %v604, 149.685
        %v654 = vadd.f32 %v622, %v638
        %v655 = vadd.f32 %v623, %v639
        %v656 = vadd.f32 %v624, %v640
        %v657 = vadd.f32 %v625, %v641
        %v658 = vadd.f32 %v626, %v642
        %v659 = vadd.f32 %v627, %v643
        %v660 = vadd.f32 %v628, %v644
        %v661 = vadd.f32 %v629, %v645
        %v662 = vadd.f32 %v630, %v646
        %v663 = vadd.f32 %v631, %v647
        %v664 = vadd.f32 %v632, %v648
        %v665 = vadd.f32 %v633, %v649
        %v666 = vadd.f32 %v634, %v650
        %v667 = vadd.f32 %v635, %v651
        %v668 = vadd.f32 %v636, %v652
        %v669 = vadd.f32 %v637, %v653
        %v670 = vmul.f32 %v606, 29.07
        %v671 = vmul.f32 %v607, 29.07
        %v672 = vmul.f32 %v608, 29.07
        %v673 = vmul.f32 %v609, 29.07
        %v674 = vmul.f32 %v610, 29.07
        %v675 = vmul.f32 %v611, 29.07
        %v676 = vmul.f32 %v612, 29.07
        %v677 = vmul.f32 %v613, 29.07
        %v678 = vmul.f32 %v614, 29.07
        %v679 = vmul.f32 %v615, 29.07
        %v680 = vmul.f32 %v616, 29.07
        %v681 = vmul.f32 %v617, 29.07
        %v682 = vmul.f32 %v618, 29.07
        %v683 = vmul.f32 %v619, 29.07
        %v684 = vmul.f32 %v620, 29.07
        %v685 = vmul.f32 %v621, 29.07
        %v686 = vadd.f32 %v654, %v670
        %v687 = vadd.f32 %v655, %v671
        %v688 = vadd.f32 %v656, %v672
        %v689 = vadd.f32 %v657, %v673
        %v690 = vadd.f32 %v658, %v674
        %v691 = vadd.f32 %v659, %v675
        %v692 = vadd.f32 %v660, %v676
        %v693 = vadd.f32 %v661, %v677
        %v694 = vadd.f32 %v662, %v678
        %v695 = vadd.f32 %v663, %v679
        %v696 = vadd.f32 %v664, %v680
        %v697 = vadd.f32 %v665, %v681
        %v698 = vadd.f32 %v666, %v682
        %v699 = vadd.f32 %v667, %v683
        %v700 = vadd.f32 %v668, %v684
        %v701 = vadd.f32 %v669, %v685
        %v702 = vsub.f32 %v686, 128.0
        %v703 = vsub.f32 %v687, 128.0
        %v704 = vsub.f32 %v688, 128.0
        %v705 = vsub.f32 %v689, 128.0
        %v706 = vsub.f32 %v690, 128.0
        %v707 = vsub.f32 %v691, 128.0
        %v708 = vsub.f32 %v692, 128.0
        %v709 = vsub.f32 %v693, 128.0
        %v710 = vsub.f32 %v694, 128.0
        %v711 = vsub.f32 %v695, 128.0
        %v712 = vsub.f32 %v696, 128.0
        %v713 = vsub.f32 %v697, 128.0
        %v714 = vsub.f32 %v698, 128.0
        %v715 = vsub.f32 %v699, 128.0
        %v716 = vsub.f32 %v700, 128.0
        %v717 = vsub.f32 %v701, 128.0
        %v718 = vmul.f32 %v572, -43.02768
        %v719 = vmul.f32 %v573, -43.02768
        %v720 = vmul.f32 %v574, -43.02768
        %v721 = vmul.f32 %v575, -43.02768
        %v722 = vmul.f32 %v576, -43.02768
        %v723 = vmul.f32 %v577, -43.02768
        %v724 = vmul.f32 %v578, -43.02768
        %v725 = vmul.f32 %v579, -43.02768
        %v726 = vmul.f32 %v580, -43.02768
        %v727 = vmul.f32 %v581, -43.02768
        %v728 = vmul.f32 %v582, -43.02768
        %v729 = vmul.f32 %v583, -43.02768
        %v730 = vmul.f32 %v584, -43.02768
        %v731 = vmul.f32 %v585, -43.02768
        %v732 = vmul.f32 %v586, -43.02768
        %v733 = vmul.f32 %v587, -43.02768
        %v734 = vmul.f32 %v589, -84.47232
        %v735 = vmul.f32 %v590, -84.47232
        %v736 = vmul.f32 %v591, -84.47232
        %v737 = vmul.f32 %v592, -84.47232
        %v738 = vmul.f32 %v593, -84.47232
        %v739 = vmul.f32 %v594, -84.47232
        %v740 = vmul.f32 %v595, -84.47232
        %v741 = vmul.f32 %v596, -84.47232
        %v742 = vmul.f32 %v597, -84.47232
        %v743 = vmul.f32 %v598, -84.47232
        %v744 = vmul.f32 %v599, -84.47232
        %v745 = vmul.f32 %v600, -84.47232
        %v746 = vmul.f32 %v601, -84.47232
        %v747 = vmul.f32 %v602, -84.47232
        %v748 = vmul.f32 %v603, -84.47232
        %v749 = vmul.f32 %v604, -84.47232
        %v750 = vadd.f32 %v718, %v734
        %v751 = vadd.f32 %v719, %v735
        %v752 = vadd.f32 %v720, %v736
        %v753 = vadd.f32 %v721, %v737
        %v754 = vadd.f32 %v722, %v738
        %v755 = vadd.f32 %v723, %v739
        %v756 = vadd.f32 %v724, %v740
        %v757 = vadd.f32 %v725, %v741
        %v758 = vadd.f32 %v726, %v742
        %v759 = vadd.f32 %v727, %v743
        %v760 = vadd.f32 %v728, %v744
        %v761 = vadd.f32 %v729, %v745
        %v762 = vadd.f32 %v730, %v746
        %v763 = vadd.f32 %v731, %v747
        %v764 = vadd.f32 %v732, %v748
        %v765 = vadd.f32 %v733, %v749
        %v766 = vmul.f32 %v606, 127.5
        %v767 = vmul.f32 %v607, 127.5
        %v768 = vmul.f32 %v608, 127.5
        %v769 = vmul.f32 %v609, 127.5
        %v770 = vmul.f32 %v610, 127.5
        %v771 = vmul.f32 %v611, 127.5
        %v772 = vmul.f32 %v612, 127.5
        %v773 = vmul.f32 %v613, 127.5
        %v774 = vmul.f32 %v614, 127.5
        %v775 = vmul.f32 %v615, 127.5
        %v776 = vmul.f32 %v616, 127.5
        %v777 = vmul.f32 %v617, 127.5
        %v778 = vmul.f32 %v618, 127.5
        %v779 = vmul.f32 %v619, 127.5
        %v780 = vmul.f32 %v620, 127.5
        %v781 = vmul.f32 %v621, 127.5
        %v782 = vadd.f32 %v750, %v766
        %v783 = vadd.f32 %v751, %v767
        %v784 = vadd.f32 %v752, %v768
        %v785 = vadd.f32 %v753, %v769
        %v786 = vadd.f32 %v754, %v770
        %v787 = vadd.f32 %v755, %v771
        %v788 = vadd.f32 %v756, %v772
        %v789 = vadd.f32 %v757, %v773
        %v790 = vadd.f32 %v758, %v774
        %v791 = vadd.f32 %v759, %v775
        %v792 = vadd.f32 %v760, %v776
        %v793 = vadd.f32 %v761, %v777
        %v794 = vadd.f32 %v762, %v778
        %v795 = vadd.f32 %v763, %v779
        %v796 = vadd.f32 %v764, %v780
        %v797 = vadd.f32 %v765, %v781
        %v798 = vmul.f32 %v572, 127.5
        %v799 = vmul.f32 %v573, 127.5
        %v800 = vmul.f32 %v574, 127.5
        %v801 = vmul.f32 %v575, 127.5
        %v802 = vmul.f32 %v576, 127.5
        %v803 = vmul.f32 %v577, 127.5
        %v804 = vmul.f32 %v578, 127.5
        %v805 = vmul.f32 %v579, 127.5
        %v806 = vmul.f32 %v580, 127.5
        %v807 = vmul.f32 %v581, 127.5
        %v808 = vmul.f32 %v582, 127.5
        %v809 = vmul.f32 %v583, 127.5
        %v810 = vmul.f32 %v584, 127.5
        %v811 = vmul.f32 %v585, 127.5
        %v812 = vmul.f32 %v586, 127.5
        %v813 = vmul.f32 %v587, 127.5
        %v814 = vmul.f32 %v589, -106.76544
        %v815 = vmul.f32 %v590, -106.76544
        %v816 = vmul.f32 %v591, -106.76544
        %v817 = vmul.f32 %v592, -106.76544
        %v818 = vmul.f32 %v593, -106.76544
        %v819 = vmul.f32 %v594, -106.76544
        %v820 = vmul.f32 %v595, -106.76544
        %v821 = vmul.f32 %v596, -106.76544
        %v822 = vmul.f32 %v597, -106.76544
        %v823 = vmul.f32 %v598, -106.76544
        %v824 = vmul.f32 %v599, -106.76544
        %v825 = vmul.f32 %v600, -106.76544
        %v826 = vmul.f32 %v601, -106.76544
        %v827 = vmul.f32 %v602, -106.76544
        %v828 = vmul.f32 %v603, -106.76544
        %v829 = vmul.f32 %v604, -106.76544
        %v830 = vadd.f32 %v798, %v814
        %v831 = vadd.f32 %v799, %v815
        %v832 = vadd.f32 %v800, %v816
        %v833 = vadd.f32 %v801, %v817
        %v834 = vadd.f32 %v802, %v818
        %v835 = vadd.f32 %v803, %v819
        %v836 = vadd.f32 %v804, %v820
        %v837 = vadd.f32 %v805, %v821
        %v838 = vadd.f32 %v806, %v822
        %v839 = vadd.f32 %v807, %v823
        %v840 = vadd.f32 %v808, %v824
        %v841 = vadd.f32 %v809, %v825
        %v842 = vadd.f32 %v810, %v826
        %v843 = vadd.f32 %v811, %v827
        %v844 = vadd.f32 %v812, %v828
        %v845 = vadd.f32 %v813, %v829
        %v846 = vmul.f32 %v606, -20.73456
        %v847 = vmul.f32 %v607, -20.73456
        %v848 = vmul.f32 %v608, -20.73456
        %v849 = vmul.f32 %v609, -20.73456
        %v850 = vmul.f32 %v610, -20.73456
        %v851 = vmul.f32 %v611, -20.73456
        %v852 = vmul.f32 %v612, -20.73456
        %v853 = vmul.f32 %v613, -20.73456
        %v854 = vmul.f32 %v614, -20.73456
        %v855 = vmul.f32 %v615, -20.73456
        %v856 = vmul.f32 %v616, -20.73456
        %v857 = vmul.f32 %v617, -20.73456
        %v858 = vmul.f32 %v618, -20.73456
        %v859 = vmul.f32 %v619, -20.73456
        %v860 = vmul.f32 %v620, -20.73456
        %v861 = vmul.f32 %v621, -20.73456
        %v862 = vadd.f32 %v830, %v846
        %v863 = vadd.f32 %v831, %v847
        %v864 = vadd.f32 %v832, %v848
        %v865 = vadd.f32 %v833, %v849
        %v866 = vadd.f32 %v834, %v850
        %v867 = vadd.f32 %v835, %v851
        %v868 = vadd.f32 %v836, %v852
        %v869 = vadd.f32 %v837, %v853
        %v870 = vadd.f32 %v838, %v854
        %v871 = vadd.f32 %v839, %v855
        %v872 = vadd.f32 %v840, %v856
        %v873 = vadd.f32 %v841, %v857
        %v874 = vadd.f32 %v842, %v858
        %v875 = vadd.f32 %v843, %v859
        %v876 = vadd.f32 %v844, %v860
        %v877 = vadd.f32 %v845, %v861
        %v878 = vld [vmem:[#allocation13] sm:$0xff]
        %v879 = vld [vmem:[#allocation13 + $0x8] sm:$0xff]
        %v880 = vld [vmem:[#allocation13 + $0x10] sm:$0xff]
        %v881 = vld [vmem:[#allocation13 + $0x18] sm:$0xff]
        %v882 = vld [vmem:[#allocation13 + $0x20] sm:$0xff]
        %v883 = vld [vmem:[#allocation13 + $0x28] sm:$0xff]
        %v884 = vld [vmem:[#allocation13 + $0x30] sm:$0xff]
        %v885 = vld [vmem:[#allocation13 + $0x38] sm:$0xff]
        %886 = vmatpush.msra.mxu0 %v797
        %887 = vmatpush.msra.mxu0 %v796
        %888 = vmatpush.msra.mxu0 %v795
        %889 = vmatpush.msra.mxu0 %v794
        %890 = vmatpush.msra.mxu0 %v793
        %891 = vmatpush.msra.mxu0 %v792
        %892 = vmatpush.msra.mxu0 %v791
        %893 = vmatpush.msra.mxu0 %v790
        %894 = vmatpush.msra.mxu0 %v789
        %895 = vmatpush.msra.mxu0 %v788
        %896 = vmatpush.msra.mxu0 %v787
        %897 = vmatpush.msra.mxu0 %v786
        %898 = vmatpush.msra.mxu0 %v785
        %899 = vmatpush.msra.mxu0 %v784
        %900 = vmatpush.msra.mxu0 %v783
        %901 = vmatpush.msra.mxu0 %v782
        %902 = vmatmul.f32.gmra.mxu0 %v878
        %v903 = vpop.f32.mrf.mxu0
        %v904 = vadd.f32 0.0, %v903
        %905 = vmatmul.f32.gmra.mxu0 %v879
        %v906 = vpop.f32.mrf.mxu0
        %v907 = vadd.f32 0.0, %v906
        %908 = vmatmul.f32.gmra.mxu0 %v880
        %v909 = vpop.f32.mrf.mxu0
        %v910 = vadd.f32 0.0, %v909
        %911 = vmatmul.f32.gmra.mxu0 %v881
        %v912 = vpop.f32.mrf.mxu0
        %v913 = vadd.f32 0.0, %v912
        %914 = vmatmul.f32.gmra.mxu0 %v882
        %v915 = vpop.f32.mrf.mxu0
        %v916 = vadd.f32 0.0, %v915
        %917 = vmatmul.f32.gmra.mxu0 %v883
        %v918 = vpop.f32.mrf.mxu0
        %v919 = vadd.f32 0.0, %v918
        %920 = vmatmul.f32.gmra.mxu0 %v884
        %v921 = vpop.f32.mrf.mxu0
        %v922 = vadd.f32 0.0, %v921
        %923 = vmatmul.f32.gmra.mxu0 %v885
        %v924 = vpop.f32.mrf.mxu0
        %v925 = vadd.f32 0.0, %v924
        %926 = vdwg.mxu0
        %927 = vmatpush.msra.mxu0 %v877
        %928 = vmatpush.msra.mxu0 %v876
        %929 = vmatpush.msra.mxu0 %v875
        %930 = vmatpush.msra.mxu0 %v874
        %931 = vmatpush.msra.mxu0 %v873
        %932 = vmatpush.msra.mxu0 %v872
        %933 = vmatpush.msra.mxu0 %v871
        %934 = vmatpush.msra.mxu0 %v870
        %935 = vmatpush.msra.mxu0 %v869
        %936 = vmatpush.msra.mxu0 %v868
        %937 = vmatpush.msra.mxu0 %v867
        %938 = vmatpush.msra.mxu0 %v866
        %939 = vmatpush.msra.mxu0 %v865
        %940 = vmatpush.msra.mxu0 %v864
        %941 = vmatpush.msra.mxu0 %v863
        %942 = vmatpush.msra.mxu0 %v862
        %943 = vmatmul.f32.gmra.mxu0 %v878
        %v944 = vpop.f32.mrf.mxu0
        %v945 = vadd.f32 0.0, %v944
        %946 = vmatmul.f32.gmra.mxu0 %v879
        %v947 = vpop.f32.mrf.mxu0
        %v948 = vadd.f32 0.0, %v947
        %949 = vmatmul.f32.gmra.mxu0 %v880
        %v950 = vpop.f32.mrf.mxu0
        %v951 = vadd.f32 0.0, %v950
        %952 = vmatmul.f32.gmra.mxu0 %v881
        %v953 = vpop.f32.mrf.mxu0
        %v954 = vadd.f32 0.0, %v953
        %955 = vmatmul.f32.gmra.mxu0 %v882
        %v956 = vpop.f32.mrf.mxu0
        %v957 = vadd.f32 0.0, %v956
        %958 = vmatmul.f32.gmra.mxu0 %v883
        %v959 = vpop.f32.mrf.mxu0
        %v960 = vadd.f32 0.0, %v959
        %961 = vmatmul.f32.gmra.mxu0 %v884
        %v962 = vpop.f32.mrf.mxu0
        %v963 = vadd.f32 0.0, %v962
        %964 = vmatmul.f32.gmra.mxu0 %v885
        %v965 = vpop.f32.mrf.mxu0
        %v966 = vadd.f32 0.0, %v965
        %967 = vdwg.mxu0
        %v968 = vld [vmem:[#allocation14] sm:$0xff]
        %v969 = vld [vmem:[#allocation14 + $0x8] sm:$0xff]
        %v970 = vld [vmem:[#allocation14 + $0x10] sm:$0xff]
        %v971 = vld [vmem:[#allocation14 + $0x18] sm:$0xff]
        %v972 = vld [vmem:[#allocation14 + $0x20] sm:$0xff]
        %v973 = vld [vmem:[#allocation14 + $0x28] sm:$0xff]
        %v974 = vld [vmem:[#allocation14 + $0x30] sm:$0xff]
        %v975 = vld [vmem:[#allocation14 + $0x38] sm:$0xff]
        %v976 = vld [vmem:[#allocation14 + $0x40] sm:$0xff]
        %v977 = vld [vmem:[#allocation14 + $0x48] sm:$0xff]
        %v978 = vld [vmem:[#allocation14 + $0x50] sm:$0xff]
        %v979 = vld [vmem:[#allocation14 + $0x58] sm:$0xff]
        %v980 = vld [vmem:[#allocation14 + $0x60] sm:$0xff]
        %v981 = vld [vmem:[#allocation14 + $0x68] sm:$0xff]
        %v982 = vld [vmem:[#allocation14 + $0x70] sm:$0xff]
        %v983 = vld [vmem:[#allocation14 + $0x78] sm:$0xff]
        %v984 = vld [vmem:[#allocation14 + $0x80] sm:$0xff]
        %v985 = vld [vmem:[#allocation14 + $0x88] sm:$0xff]
        %v986 = vld [vmem:[#allocation14 + $0x90] sm:$0xff]
        %v987 = vld [vmem:[#allocation14 + $0x98] sm:$0xff]
        %v988 = vld [vmem:[#allocation14 + $0xa0] sm:$0xff]
        %v989 = vld [vmem:[#allocation14 + $0xa8] sm:$0xff]
        %v990 = vld [vmem:[#allocation14 + $0xb0] sm:$0xff]
        %v991 = vld [vmem:[#allocation14 + $0xb8] sm:$0xff]
        %v992 = vld [vmem:[#allocation14 + $0xc0] sm:$0xff]
        %v993 = vld [vmem:[#allocation14 + $0xc8] sm:$0xff]
        %v994 = vld [vmem:[#allocation14 + $0xd0] sm:$0xff]
        %v995 = vld [vmem:[#allocation14 + $0xd8] sm:$0xff]
        %v996 = vld [vmem:[#allocation14 + $0xe0] sm:$0xff]
        %v997 = vld [vmem:[#allocation14 + $0xe8] sm:$0xff]
        %v998 = vld [vmem:[#allocation14 + $0xf0] sm:$0xff]
        %v999 = vld [vmem:[#allocation14 + $0xf8] sm:$0xff]
        %1000 = vmatpush.msra.mxu0 %v983
        %1001 = vmatpush.msra.mxu0 %v982
        %1002 = vmatpush.msra.mxu0 %v981
        %1003 = vmatpush.msra.mxu0 %v980
        %1004 = vmatpush.msra.mxu0 %v979
        %1005 = vmatpush.msra.mxu0 %v978
        %1006 = vmatpush.msra.mxu0 %v977
        %1007 = vmatpush.msra.mxu0 %v976
        %1008 = vmatpush.msra.mxu0 %v975
        %1009 = vmatpush.msra.mxu0 %v974
        %1010 = vmatpush.msra.mxu0 %v973
        %1011 = vmatpush.msra.mxu0 %v972
        %1012 = vmatpush.msra.mxu0 %v971
        %1013 = vmatpush.msra.mxu0 %v970
        %1014 = vmatpush.msra.mxu0 %v969
        %1015 = vmatpush.msra.mxu0 %v968
        %1016 = vmatmul.f32.gmra.mxu0 %v904
        %v1017 = vpop.f32.mrf.mxu0
        %v1018 = vadd.f32 0.0, %v1017
        %1019 = vmatmul.f32.gmra.mxu0 %v907
        %v1020 = vpop.f32.mrf.mxu0
        %v1021 = vadd.f32 0.0, %v1020
        %1022 = vmatmul.f32.gmra.mxu0 %v910
        %v1023 = vpop.f32.mrf.mxu0
        %v1024 = vadd.f32 0.0, %v1023
        %1025 = vmatmul.f32.gmra.mxu0 %v913
        %v1026 = vpop.f32.mrf.mxu0
        %v1027 = vadd.f32 0.0, %v1026
        %1028 = vmatmul.f32.gmra.mxu0 %v916
        %v1029 = vpop.f32.mrf.mxu0
        %v1030 = vadd.f32 0.0, %v1029
        %1031 = vmatmul.f32.gmra.mxu0 %v919
        %v1032 = vpop.f32.mrf.mxu0
        %v1033 = vadd.f32 0.0, %v1032
        %1034 = vmatmul.f32.gmra.mxu0 %v922
        %v1035 = vpop.f32.mrf.mxu0
        %v1036 = vadd.f32 0.0, %v1035
        %1037 = vmatmul.f32.gmra.mxu0 %v925
        %v1038 = vpop.f32.mrf.mxu0
        %v1039 = vadd.f32 0.0, %v1038
        %1040 = vdwg.mxu0
        %1041 = vmatpush.msra.mxu0 %v999
        %1042 = vmatpush.msra.mxu0 %v998
        %1043 = vmatpush.msra.mxu0 %v997
        %1044 = vmatpush.msra.mxu0 %v996
        %1045 = vmatpush.msra.mxu0 %v995
        %1046 = vmatpush.msra.mxu0 %v994
        %1047 = vmatpush.msra.mxu0 %v993
        %1048 = vmatpush.msra.mxu0 %v992
        %1049 = vmatpush.msra.mxu0 %v991
        %1050 = vmatpush.msra.mxu0 %v990
        %1051 = vmatpush.msra.mxu0 %v989
        %1052 = vmatpush.msra.mxu0 %v988
        %1053 = vmatpush.msra.mxu0 %v987
        %1054 = vmatpush.msra.mxu0 %v986
        %1055 = vmatpush.msra.mxu0 %v985
        %1056 = vmatpush.msra.mxu0 %v984
        %1057 = vmatmul.f32.gmra.mxu0 %v945
        %v1058 = vpop.f32.mrf.mxu0
        %v1059 = vadd.f32 %v1018, %v1058
        %1060 = vmatmul.f32.gmra.mxu0 %v948
        %v1061 = vpop.f32.mrf.mxu0
        %v1062 = vadd.f32 %v1021, %v1061
        %1063 = vmatmul.f32.gmra.mxu0 %v951
        %v1064 = vpop.f32.mrf.mxu0
        %v1065 = vadd.f32 %v1024, %v1064
        %1066 = vmatmul.f32.gmra.mxu0 %v954
        %v1067 = vpop.f32.mrf.mxu0
        %v1068 = vadd.f32 %v1027, %v1067
        %1069 = vmatmul.f32.gmra.mxu0 %v957
        %v1070 = vpop.f32.mrf.mxu0
        %v1071 = vadd.f32 %v1030, %v1070
        %1072 = vmatmul.f32.gmra.mxu0 %v960
        %v1073 = vpop.f32.mrf.mxu0
        %v1074 = vadd.f32 %v1033, %v1073
        %1075 = vmatmul.f32.gmra.mxu0 %v963
        %v1076 = vpop.f32.mrf.mxu0
        %v1077 = vadd.f32 %v1036, %v1076
        %1078 = vmatmul.f32.gmra.mxu0 %v966
        %v1079 = vpop.f32.mrf.mxu0
        %v1080 = vadd.f32 %v1039, %v1079
        %1081 = vdwg.mxu0
        %v1082 = vld [vmem:[#allocation5] sm:$0xff]
        %v1083 = vld [vmem:[#allocation5 + $0x8] sm:$0xff]
        %v1084 = vld [vmem:[#allocation5 + $0x10] sm:$0xff]
        %v1085 = vld [vmem:[#allocation5 + $0x18] sm:$0xff]
        %v1086 = vld [vmem:[#allocation5 + $0x20] sm:$0xff]
        %v1087 = vld [vmem:[#allocation5 + $0x28] sm:$0xff]
        %v1088 = vld [vmem:[#allocation5 + $0x30] sm:$0xff]
        %v1089 = vld [vmem:[#allocation5 + $0x38] sm:$0xff]
        %v1090 = vld [vmem:[#allocation5 + $0x40] sm:$0xff]
        %v1091 = vld [vmem:[#allocation5 + $0x48] sm:$0xff]
        %v1092 = vld [vmem:[#allocation5 + $0x50] sm:$0xff]
        %v1093 = vld [vmem:[#allocation5 + $0x58] sm:$0xff]
        %v1094 = vld [vmem:[#allocation5 + $0x60] sm:$0xff]
        %v1095 = vld [vmem:[#allocation5 + $0x68] sm:$0xff]
        %v1096 = vld [vmem:[#allocation5 + $0x70] sm:$0xff]
        %v1097 = vld [vmem:[#allocation5 + $0x78] sm:$0xff]
        %v1098 = vld [vmem:[#allocation5 + $0x80] sm:$0xff]
        %v1099 = vld [vmem:[#allocation5 + $0x88] sm:$0xff]
        %v1100 = vld [vmem:[#allocation5 + $0x90] sm:$0xff]
        %v1101 = vld [vmem:[#allocation5 + $0x98] sm:$0xff]
        %v1102 = vld [vmem:[#allocation5 + $0xa0] sm:$0xff]
        %v1103 = vld [vmem:[#allocation5 + $0xa8] sm:$0xff]
        %v1104 = vld [vmem:[#allocation5 + $0xb0] sm:$0xff]
        %v1105 = vld [vmem:[#allocation5 + $0xb8] sm:$0xff]
        %v1106 = vld [vmem:[#allocation5 + $0xc0] sm:$0xff]
        %v1107 = vld [vmem:[#allocation5 + $0xc8] sm:$0xff]
        %v1108 = vld [vmem:[#allocation5 + $0xd0] sm:$0xff]
        %v1109 = vld [vmem:[#allocation5 + $0xd8] sm:$0xff]
        %v1110 = vld [vmem:[#allocation5 + $0xe0] sm:$0xff]
        %v1111 = vld [vmem:[#allocation5 + $0xe8] sm:$0xff]
        %v1112 = vld [vmem:[#allocation5 + $0xf0] sm:$0xff]
        %v1113 = vld [vmem:[#allocation5 + $0xf8] sm:$0xff]
        %v1114 = vld [vmem:[#allocation5 + $0x100] sm:$0xff]
        %v1115 = vld [vmem:[#allocation5 + $0x108] sm:$0xff]
        %v1116 = vld [vmem:[#allocation5 + $0x110] sm:$0xff]
        %v1117 = vld [vmem:[#allocation5 + $0x118] sm:$0xff]
        %v1118 = vld [vmem:[#allocation5 + $0x120] sm:$0xff]
        %v1119 = vld [vmem:[#allocation5 + $0x128] sm:$0xff]
        %v1120 = vld [vmem:[#allocation5 + $0x130] sm:$0xff]
        %v1121 = vld [vmem:[#allocation5 + $0x138] sm:$0xff]
        %v1122 = vld [vmem:[#allocation5 + $0x140] sm:$0xff]
        %v1123 = vld [vmem:[#allocation5 + $0x148] sm:$0xff]
        %v1124 = vld [vmem:[#allocation5 + $0x150] sm:$0xff]
        %v1125 = vld [vmem:[#allocation5 + $0x158] sm:$0xff]
        %v1126 = vld [vmem:[#allocation5 + $0x160] sm:$0xff]
        %v1127 = vld [vmem:[#allocation5 + $0x168] sm:$0xff]
        %v1128 = vld [vmem:[#allocation5 + $0x170] sm:$0xff]
        %v1129 = vld [vmem:[#allocation5 + $0x178] sm:$0xff]
        %vm1130 = vcmask 523264
        %v1132 = vsel %vm1130, %v1083, 0
        %v1135 = vsel %vm1130, %v1085, 0
        %v1138 = vsel %vm1130, %v1087, 0
        %v1141 = vsel %vm1130, %v1089, 0
        %v1144 = vsel %vm1130, %v1091, 0
        %v1147 = vsel %vm1130, %v1093, 0
        %v1150 = vsel %vm1130, %v1095, 0
        %v1153 = vsel %vm1130, %v1097, 0
        %v1156 = vsel %vm1130, %v1099, 0
        %v1159 = vsel %vm1130, %v1101, 0
        %v1162 = vsel %vm1130, %v1103, 0
        %v1165 = vsel %vm1130, %v1105, 0
        %v1168 = vsel %vm1130, %v1107, 0
        %v1171 = vsel %vm1130, %v1109, 0
        %v1174 = vsel %vm1130, %v1111, 0
        %v1177 = vsel %vm1130, %v1113, 0
        %v1180 = vsel %vm1130, %v1115, 0
        %v1183 = vsel %vm1130, %v1117, 0
        %v1186 = vsel %vm1130, %v1119, 0
        %v1189 = vsel %vm1130, %v1121, 0
        %v1192 = vsel %vm1130, %v1123, 0
        %v1195 = vsel %vm1130, %v1125, 0
        %v1198 = vsel %vm1130, %v1127, 0
        %v1201 = vsel %vm1130, %v1129, 0
        %1203 = vmatpush.msra.mxu0 %v717
        %1204 = vmatpush.msra.mxu0 %v716
        %1205 = vmatpush.msra.mxu0 %v715
        %1206 = vmatpush.msra.mxu0 %v714
        %1207 = vmatpush.msra.mxu0 %v713
        %1208 = vmatpush.msra.mxu0 %v712
        %1209 = vmatpush.msra.mxu0 %v711
        %1210 = vmatpush.msra.mxu0 %v710
        %1211 = vmatpush.msra.mxu0 %v709
        %1212 = vmatpush.msra.mxu0 %v708
        %1213 = vmatpush.msra.mxu0 %v707
        %1214 = vmatpush.msra.mxu0 %v706
        %1215 = vmatpush.msra.mxu0 %v705
        %1216 = vmatpush.msra.mxu0 %v704
        %1217 = vmatpush.msra.mxu0 %v703
        %1218 = vmatpush.msra.mxu0 %v702
        %1219 = vmatmul.f32.gmra.mxu0 %v1082
        %v1220 = vpop.f32.mrf.mxu0
        %v1221 = vadd.f32 0.0, %v1220
        %1222 = vmatmul.f32.gmra.mxu0 %v1084
        %v1223 = vpop.f32.mrf.mxu0
        %v1224 = vadd.f32 0.0, %v1223
        %1225 = vmatmul.f32.gmra.mxu0 %v1086
        %v1226 = vpop.f32.mrf.mxu0
        %v1227 = vadd.f32 0.0, %v1226
        %1228 = vmatmul.f32.gmra.mxu0 %v1088
        %v1229 = vpop.f32.mrf.mxu0
        %v1230 = vadd.f32 0.0, %v1229
        %1231 = vmatmul.f32.gmra.mxu0 %v1090
        %v1232 = vpop.f32.mrf.mxu0
        %v1233 = vadd.f32 0.0, %v1232
        %1234 = vmatmul.f32.gmra.mxu0 %v1092
        %v1235 = vpop.f32.mrf.mxu0
        %v1236 = vadd.f32 0.0, %v1235
        %1237 = vmatmul.f32.gmra.mxu0 %v1094
        %v1238 = vpop.f32.mrf.mxu0
        %v1239 = vadd.f32 0.0, %v1238
        %1240 = vmatmul.f32.gmra.mxu0 %v1096
        %v1241 = vpop.f32.mrf.mxu0
        %v1242 = vadd.f32 0.0, %v1241
        %1243 = vmatmul.f32.gmra.mxu0 %v1098
        %v1244 = vpop.f32.mrf.mxu0
        %v1245 = vadd.f32 0.0, %v1244
        %1246 = vmatmul.f32.gmra.mxu0 %v1100
        %v1247 = vpop.f32.mrf.mxu0
        %v1248 = vadd.f32 0.0, %v1247
        %1249 = vmatmul.f32.gmra.mxu0 %v1102
        %v1250 = vpop.f32.mrf.mxu0
        %v1251 = vadd.f32 0.0, %v1250
        %1252 = vmatmul.f32.gmra.mxu0 %v1104
        %v1253 = vpop.f32.mrf.mxu0
        %v1254 = vadd.f32 0.0, %v1253
        %1255 = vmatmul.f32.gmra.mxu0 %v1106
        %v1256 = vpop.f32.mrf.mxu0
        %v1257 = vadd.f32 0.0, %v1256
        %1258 = vmatmul.f32.gmra.mxu0 %v1108
        %v1259 = vpop.f32.mrf.mxu0
        %v1260 = vadd.f32 0.0, %v1259
        %1261 = vmatmul.f32.gmra.mxu0 %v1110
        %v1262 = vpop.f32.mrf.mxu0
        %v1263 = vadd.f32 0.0, %v1262
        %1264 = vmatmul.f32.gmra.mxu0 %v1112
        %v1265 = vpop.f32.mrf.mxu0
        %v1266 = vadd.f32 0.0, %v1265
        %1267 = vmatmul.f32.gmra.mxu0 %v1114
        %v1268 = vpop.f32.mrf.mxu0
        %v1269 = vadd.f32 0.0, %v1268
        %1270 = vmatmul.f32.gmra.mxu0 %v1116
        %v1271 = vpop.f32.mrf.mxu0
        %v1272 = vadd.f32 0.0, %v1271
        %1273 = vmatmul.f32.gmra.mxu0 %v1118
        %v1274 = vpop.f32.mrf.mxu0
        %v1275 = vadd.f32 0.0, %v1274
        %1276 = vmatmul.f32.gmra.mxu0 %v1120
        %v1277 = vpop.f32.mrf.mxu0
        %v1278 = vadd.f32 0.0, %v1277
        %1279 = vmatmul.f32.gmra.mxu0 %v1122
        %v1280 = vpop.f32.mrf.mxu0
        %v1281 = vadd.f32 0.0, %v1280
        %1282 = vmatmul.f32.gmra.mxu0 %v1124
        %v1283 = vpop.f32.mrf.mxu0
        %v1284 = vadd.f32 0.0, %v1283
        %1285 = vmatmul.f32.gmra.mxu0 %v1126
        %v1286 = vpop.f32.mrf.mxu0
        %v1287 = vadd.f32 0.0, %v1286
        %1288 = vmatmul.f32.gmra.mxu0 %v1128
        %v1289 = vpop.f32.mrf.mxu0
        %v1290 = vadd.f32 0.0, %v1289
        %1291 = vdwg.mxu0
        %1292 = vmatpush.msra.mxu0 0.0
        %1293 = vmatpush.msra.mxu0 0.0
        %1294 = vmatpush.msra.mxu0 0.0
        %1295 = vmatpush.msra.mxu0 0.0
        %1296 = vmatpush.msra.mxu0 0.0
        %1297 = vmatpush.msra.mxu0 0.0
        %1298 = vmatpush.msra.mxu0 0.0
        %1299 = vmatpush.msra.mxu0 0.0
        %1300 = vmatpush.msra.mxu0 %v1080
        %1301 = vmatpush.msra.mxu0 %v1077
        %1302 = vmatpush.msra.mxu0 %v1074
        %1303 = vmatpush.msra.mxu0 %v1071
        %1304 = vmatpush.msra.mxu0 %v1068
        %1305 = vmatpush.msra.mxu0 %v1065
        %1306 = vmatpush.msra.mxu0 %v1062
        %1307 = vmatpush.msra.mxu0 %v1059
        %1308 = vmatmul.f32.gmra.mxu0 %v1132
        %v1309 = vpop.f32.mrf.mxu0
        %v1310 = vadd.f32 %v1221, %v1309
        %1311 = vmatmul.f32.gmra.mxu0 %v1135
        %v1312 = vpop.f32.mrf.mxu0
        %v1313 = vadd.f32 %v1224, %v1312
        %1314 = vmatmul.f32.gmra.mxu0 %v1138
        %v1315 = vpop.f32.mrf.mxu0
        %v1316 = vadd.f32 %v1227, %v1315
        %1317 = vmatmul.f32.gmra.mxu0 %v1141
        %v1318 = vpop.f32.mrf.mxu0
        %v1319 = vadd.f32 %v1230, %v1318
        %1320 = vmatmul.f32.gmra.mxu0 %v1144
        %v1321 = vpop.f32.mrf.mxu0
        %v1322 = vadd.f32 %v1233, %v1321
        %1323 = vmatmul.f32.gmra.mxu0 %v1147
        %v1324 = vpop.f32.mrf.mxu0
        %v1325 = vadd.f32 %v1236, %v1324
        %1326 = vmatmul.f32.gmra.mxu0 %v1150
        %v1327 = vpop.f32.mrf.mxu0
        %v1328 = vadd.f32 %v1239, %v1327
        %1329 = vmatmul.f32.gmra.mxu0 %v1153
        %v1330 = vpop.f32.mrf.mxu0
        %v1331 = vadd.f32 %v1242, %v1330
        %1332 = vmatmul.f32.gmra.mxu0 %v1156
        %v1333 = vpop.f32.mrf.mxu0
        %v1334 = vadd.f32 %v1245, %v1333
        %1335 = vmatmul.f32.gmra.mxu0 %v1159
        %v1336 = vpop.f32.mrf.mxu0
        %v1337 = vadd.f32 %v1248, %v1336
        %1338 = vmatmul.f32.gmra.mxu0 %v1162
        %v1339 = vpop.f32.mrf.mxu0
        %v1340 = vadd.f32 %v1251, %v1339
        %1341 = vmatmul.f32.gmra.mxu0 %v1165
        %v1342 = vpop.f32.mrf.mxu0
        %v1343 = vadd.f32 %v1254, %v1342
        %1344 = vmatmul.f32.gmra.mxu0 %v1168
        %v1345 = vpop.f32.mrf.mxu0
        %v1346 = vadd.f32 %v1257, %v1345
        %1347 = vmatmul.f32.gmra.mxu0 %v1171
        %v1348 = vpop.f32.mrf.mxu0
        %v1349 = vadd.f32 %v1260, %v1348
        %1350 = vmatmul.f32.gmra.mxu0 %v1174
        %v1351 = vpop.f32.mrf.mxu0
        %v1352 = vadd.f32 %v1263, %v1351
        %1353 = vmatmul.f32.gmra.mxu0 %v1177
        %v1354 = vpop.f32.mrf.mxu0
        %v1355 = vadd.f32 %v1266, %v1354
        %1356 = vmatmul.f32.gmra.mxu0 %v1180
        %v1357 = vpop.f32.mrf.mxu0
        %v1358 = vadd.f32 %v1269, %v1357
        %1359 = vmatmul.f32.gmra.mxu0 %v1183
        %v1360 = vpop.f32.mrf.mxu0
        %v1361 = vadd.f32 %v1272, %v1360
        %1362 = vmatmul.f32.gmra.mxu0 %v1186
        %v1363 = vpop.f32.mrf.mxu0
        %v1364 = vadd.f32 %v1275, %v1363
        %1365 = vmatmul.f32.gmra.mxu0 %v1189
        %v1366 = vpop.f32.mrf.mxu0
        %v1367 = vadd.f32 %v1278, %v1366
        %1368 = vmatmul.f32.gmra.mxu0 %v1192
        %v1369 = vpop.f32.mrf.mxu0
        %v1370 = vadd.f32 %v1281, %v1369
        %1371 = vmatmul.f32.gmra.mxu0 %v1195
        %v1372 = vpop.f32.mrf.mxu0
        %v1373 = vadd.f32 %v1284, %v1372
        %1374 = vmatmul.f32.gmra.mxu0 %v1198
        %v1375 = vpop.f32.mrf.mxu0
        %v1376 = vadd.f32 %v1287, %v1375
        %1377 = vmatmul.f32.gmra.mxu0 %v1201
        %v1378 = vpop.f32.mrf.mxu0
        %v1379 = vadd.f32 %v1290, %v1378
        %1380 = vdwg.mxu0
        %v1381 = vld [vmem:[#allocation7] sm:$0xff]
        %v1382 = vld [vmem:[#allocation7 + $0x8] sm:$0xff]
        %v1383 = vld [vmem:[#allocation7 + $0x10] sm:$0xff]
        %v1384 = vld [vmem:[#allocation7 + $0x18] sm:$0xff]
        %v1385 = vld [vmem:[#allocation7 + $0x20] sm:$0xff]
        %v1386 = vld [vmem:[#allocation7 + $0x28] sm:$0xff]
        %v1387 = vld [vmem:[#allocation7 + $0x30] sm:$0xff]
        %v1388 = vld [vmem:[#allocation7 + $0x38] sm:$0xff]
        %v1389 = vld [vmem:[#allocation7 + $0x40] sm:$0xff]
        %v1390 = vld [vmem:[#allocation7 + $0x48] sm:$0xff]
        %v1391 = vld [vmem:[#allocation7 + $0x50] sm:$0xff]
        %v1392 = vld [vmem:[#allocation7 + $0x58] sm:$0xff]
        %v1393 = vld [vmem:[#allocation7 + $0x60] sm:$0xff]
        %v1394 = vld [vmem:[#allocation7 + $0x68] sm:$0xff]
        %v1395 = vld [vmem:[#allocation7 + $0x70] sm:$0xff]
        %v1396 = vld [vmem:[#allocation7 + $0x78] sm:$0xff]
        %1397 = vmatpush.msra.mxu0 %v1396
        %1398 = vmatpush.msra.mxu0 %v1395
        %1399 = vmatpush.msra.mxu0 %v1394
        %1400 = vmatpush.msra.mxu0 %v1393
        %1401 = vmatpush.msra.mxu0 %v1392
        %1402 = vmatpush.msra.mxu0 %v1391
        %1403 = vmatpush.msra.mxu0 %v1390
        %1404 = vmatpush.msra.mxu0 %v1389
        %1405 = vmatpush.msra.mxu0 %v1388
        %1406 = vmatpush.msra.mxu0 %v1387
        %1407 = vmatpush.msra.mxu0 %v1386
        %1408 = vmatpush.msra.mxu0 %v1385
        %1409 = vmatpush.msra.mxu0 %v1384
        %1410 = vmatpush.msra.mxu0 %v1383
        %1411 = vmatpush.msra.mxu0 %v1382
        %1412 = vmatpush.msra.mxu0 %v1381
        %1413 = vmatmul.f32.gmra.mxu0 %v1310
        %v1414 = vpop.f32.mrf.mxu0
        %v1415 = vadd.f32 0.0, %v1414
        %1416 = vmatmul.f32.gmra.mxu0 %v1313
        %v1417 = vpop.f32.mrf.mxu0
        %v1418 = vadd.f32 0.0, %v1417
        %1419 = vmatmul.f32.gmra.mxu0 %v1316
        %v1420 = vpop.f32.mrf.mxu0
        %v1421 = vadd.f32 0.0, %v1420
        %1422 = vmatmul.f32.gmra.mxu0 %v1319
        %v1423 = vpop.f32.mrf.mxu0
        %v1424 = vadd.f32 0.0, %v1423
        %1425 = vmatmul.f32.gmra.mxu0 %v1322
        %v1426 = vpop.f32.mrf.mxu0
        %v1427 = vadd.f32 0.0, %v1426
        %1428 = vmatmul.f32.gmra.mxu0 %v1325
        %v1429 = vpop.f32.mrf.mxu0
        %v1430 = vadd.f32 0.0, %v1429
        %1431 = vmatmul.f32.gmra.mxu0 %v1328
        %v1432 = vpop.f32.mrf.mxu0
        %v1433 = vadd.f32 0.0, %v1432
        %1434 = vmatmul.f32.gmra.mxu0 %v1331
        %v1435 = vpop.f32.mrf.mxu0
        %v1436 = vadd.f32 0.0, %v1435
        %1437 = vmatmul.f32.gmra.mxu0 %v1334
        %v1438 = vpop.f32.mrf.mxu0
        %v1439 = vadd.f32 0.0, %v1438
        %1440 = vmatmul.f32.gmra.mxu0 %v1337
        %v1441 = vpop.f32.mrf.mxu0
        %v1442 = vadd.f32 0.0, %v1441
        %1443 = vmatmul.f32.gmra.mxu0 %v1340
        %v1444 = vpop.f32.mrf.mxu0
        %v1445 = vadd.f32 0.0, %v1444
        %1446 = vmatmul.f32.gmra.mxu0 %v1343
        %v1447 = vpop.f32.mrf.mxu0
        %v1448 = vadd.f32 0.0, %v1447
        %1449 = vmatmul.f32.gmra.mxu0 %v1346
        %v1450 = vpop.f32.mrf.mxu0
        %v1451 = vadd.f32 0.0, %v1450
        %1452 = vmatmul.f32.gmra.mxu0 %v1349
        %v1453 = vpop.f32.mrf.mxu0
        %v1454 = vadd.f32 0.0, %v1453
        %1455 = vmatmul.f32.gmra.mxu0 %v1352
        %v1456 = vpop.f32.mrf.mxu0
        %v1457 = vadd.f32 0.0, %v1456
        %1458 = vmatmul.f32.gmra.mxu0 %v1355
        %v1459 = vpop.f32.mrf.mxu0
        %v1460 = vadd.f32 0.0, %v1459
        %1461 = vmatmul.f32.gmra.mxu0 %v1358
        %v1462 = vpop.f32.mrf.mxu0
        %v1463 = vadd.f32 0.0, %v1462
        %1464 = vmatmul.f32.gmra.mxu0 %v1361
        %v1465 = vpop.f32.mrf.mxu0
        %v1466 = vadd.f32 0.0, %v1465
        %1467 = vmatmul.f32.gmra.mxu0 %v1364
        %v1468 = vpop.f32.mrf.mxu0
        %v1469 = vadd.f32 0.0, %v1468
        %1470 = vmatmul.f32.gmra.mxu0 %v1367
        %v1471 = vpop.f32.mrf.mxu0
        %v1472 = vadd.f32 0.0, %v1471
        %1473 = vmatmul.f32.gmra.mxu0 %v1370
        %v1474 = vpop.f32.mrf.mxu0
        %v1475 = vadd.f32 0.0, %v1474
        %1476 = vmatmul.f32.gmra.mxu0 %v1373
        %v1477 = vpop.f32.mrf.mxu0
        %v1478 = vadd.f32 0.0, %v1477
        %1479 = vmatmul.f32.gmra.mxu0 %v1376
        %v1480 = vpop.f32.mrf.mxu0
        %v1481 = vadd.f32 0.0, %v1480
        %1482 = vmatmul.f32.gmra.mxu0 %v1379
        %v1483 = vpop.f32.mrf.mxu0
        %v1484 = vadd.f32 0.0, %v1483
        %1485 = vdwg.mxu0
        %v1486 = vld [vmem:[#allocation10] sm:$0xff]
        %v1487 = vld [vmem:[#allocation10 + $0x8] sm:$0xff]
        %v1488 = vld [vmem:[#allocation10 + $0x10] sm:$0xff]
        %v1489 = vld [vmem:[#allocation10 + $0x18] sm:$0xff]
        %v1490 = vld [vmem:[#allocation10 + $0x20] sm:$0xff]
        %v1491 = vld [vmem:[#allocation10 + $0x28] sm:$0xff]
        %v1492 = vld [vmem:[#allocation10 + $0x30] sm:$0xff]
        %v1493 = vld [vmem:[#allocation10 + $0x38] sm:$0xff]
        %v1494 = vld [vmem:[#allocation10 + $0x40] sm:$0xff]
        %v1495 = vld [vmem:[#allocation10 + $0x48] sm:$0xff]
        %v1496 = vld [vmem:[#allocation10 + $0x50] sm:$0xff]
        %v1497 = vld [vmem:[#allocation10 + $0x58] sm:$0xff]
        %v1498 = vld [vmem:[#allocation10 + $0x60] sm:$0xff]
        %v1499 = vld [vmem:[#allocation10 + $0x68] sm:$0xff]
        %v1500 = vld [vmem:[#allocation10 + $0x70] sm:$0xff]
        %v1501 = vld [vmem:[#allocation10 + $0x78] sm:$0xff]
        %v1502 = vld [vmem:[#allocation10 + $0x80] sm:$0xff]
        %v1503 = vld [vmem:[#allocation10 + $0x88] sm:$0xff]
        %v1504 = vld [vmem:[#allocation10 + $0x90] sm:$0xff]
        %v1505 = vld [vmem:[#allocation10 + $0x98] sm:$0xff]
        %v1506 = vld [vmem:[#allocation10 + $0xa0] sm:$0xff]
        %v1507 = vld [vmem:[#allocation10 + $0xa8] sm:$0xff]
        %v1508 = vld [vmem:[#allocation10 + $0xb0] sm:$0xff]
        %v1509 = vld [vmem:[#allocation10 + $0xb8] sm:$0xff]
        %v1510 = vmul.f32 %v1415, %v1486
        %v1511 = vmul.f32 %v1418, %v1487
        %v1512 = vmul.f32 %v1421, %v1488
        %v1513 = vmul.f32 %v1424, %v1489
        %v1514 = vmul.f32 %v1427, %v1490
        %v1515 = vmul.f32 %v1430, %v1491
        %v1516 = vmul.f32 %v1433, %v1492
        %v1517 = vmul.f32 %v1436, %v1493
        %v1518 = vmul.f32 %v1439, %v1494
        %v1519 = vmul.f32 %v1442, %v1495
        %v1520 = vmul.f32 %v1445, %v1496
        %v1521 = vmul.f32 %v1448, %v1497
        %v1522 = vmul.f32 %v1451, %v1498
        %v1523 = vmul.f32 %v1454, %v1499
        %v1524 = vmul.f32 %v1457, %v1500
        %v1525 = vmul.f32 %v1460, %v1501
        %v1526 = vmul.f32 %v1463, %v1502
        %v1527 = vmul.f32 %v1466, %v1503
        %v1528 = vmul.f32 %v1469, %v1504
        %v1529 = vmul.f32 %v1472, %v1505
        %v1530 = vmul.f32 %v1475, %v1506
        %v1531 = vmul.f32 %v1478, %v1507
        %v1532 = vmul.f32 %v1481, %v1508
        %v1533 = vmul.f32 %v1484, %v1509
        %v1534 = vround.ne.pseudo %v1510
        %v1535 = vround.ne.pseudo %v1511
        %v1536 = vround.ne.pseudo %v1512
        %v1537 = vround.ne.pseudo %v1513
        %v1538 = vround.ne.pseudo %v1514
        %v1539 = vround.ne.pseudo %v1515
        %v1540 = vround.ne.pseudo %v1516
        %v1541 = vround.ne.pseudo %v1517
        %v1542 = vround.ne.pseudo %v1518
        %v1543 = vround.ne.pseudo %v1519
        %v1544 = vround.ne.pseudo %v1520
        %v1545 = vround.ne.pseudo %v1521
        %v1546 = vround.ne.pseudo %v1522
        %v1547 = vround.ne.pseudo %v1523
        %v1548 = vround.ne.pseudo %v1524
        %v1549 = vround.ne.pseudo %v1525
        %v1550 = vround.ne.pseudo %v1526
        %v1551 = vround.ne.pseudo %v1527
        %v1552 = vround.ne.pseudo %v1528
        %v1553 = vround.ne.pseudo %v1529
        %v1554 = vround.ne.pseudo %v1530
        %v1555 = vround.ne.pseudo %v1531
        %v1556 = vround.ne.pseudo %v1532
        %v1557 = vround.ne.pseudo %v1533
        %v1558 = vsub.f32 %v1510, %v1534
        %v1559 = vsub.f32 %v1511, %v1535
        %v1560 = vsub.f32 %v1512, %v1536
        %v1561 = vsub.f32 %v1513, %v1537
        %v1562 = vsub.f32 %v1514, %v1538
        %v1563 = vsub.f32 %v1515, %v1539
        %v1564 = vsub.f32 %v1516, %v1540
        %v1565 = vsub.f32 %v1517, %v1541
        %v1566 = vsub.f32 %v1518, %v1542
        %v1567 = vsub.f32 %v1519, %v1543
        %v1568 = vsub.f32 %v1520, %v1544
        %v1569 = vsub.f32 %v1521, %v1545
        %v1570 = vsub.f32 %v1522, %v1546
        %v1571 = vsub.f32 %v1523, %v1547
        %v1572 = vsub.f32 %v1524, %v1548
        %v1573 = vsub.f32 %v1525, %v1549
        %v1574 = vsub.f32 %v1526, %v1550
        %v1575 = vsub.f32 %v1527, %v1551
        %v1576 = vsub.f32 %v1528, %v1552
        %v1577 = vsub.f32 %v1529, %v1553
        %v1578 = vsub.f32 %v1530, %v1554
        %v1579 = vsub.f32 %v1531, %v1555
        %v1580 = vsub.f32 %v1532, %v1556
        %v1581 = vsub.f32 %v1533, %v1557
        %v1582 = vmul.f32 %v1558, %v1558
        %v1583 = vmul.f32 %v1559, %v1559
        %v1584 = vmul.f32 %v1560, %v1560
        %v1585 = vmul.f32 %v1561, %v1561
        %v1586 = vmul.f32 %v1562, %v1562
        %v1587 = vmul.f32 %v1563, %v1563
        %v1588 = vmul.f32 %v1564, %v1564
        %v1589 = vmul.f32 %v1565, %v1565
        %v1590 = vmul.f32 %v1566, %v1566
        %v1591 = vmul.f32 %v1567, %v1567
        %v1592 = vmul.f32 %v1568, %v1568
        %v1593 = vmul.f32 %v1569, %v1569
        %v1594 = vmul.f32 %v1570, %v1570
        %v1595 = vmul.f32 %v1571, %v1571
        %v1596 = vmul.f32 %v1572, %v1572
        %v1597 = vmul.f32 %v1573, %v1573
        %v1598 = vmul.f32 %v1574, %v1574
        %v1599 = vmul.f32 %v1575, %v1575
        %v1600 = vmul.f32 %v1576, %v1576
        %v1601 = vmul.f32 %v1577, %v1577
        %v1602 = vmul.f32 %v1578, %v1578
        %v1603 = vmul.f32 %v1579, %v1579
        %v1604 = vmul.f32 %v1580, %v1580
        %v1605 = vmul.f32 %v1581, %v1581
        %v1606 = vmul.f32 %v1582, %v1558
        %v1607 = vmul.f32 %v1583, %v1559
        %v1608 = vmul.f32 %v1584, %v1560
        %v1609 = vmul.f32 %v1585, %v1561
        %v1610 = vmul.f32 %v1586, %v1562
        %v1611 = vmul.f32 %v1587, %v1563
        %v1612 = vmul.f32 %v1588, %v1564
        %v1613 = vmul.f32 %v1589, %v1565
        %v1614 = vmul.f32 %v1590, %v1566
        %v1615 = vmul.f32 %v1591, %v1567
        %v1616 = vmul.f32 %v1592, %v1568
        %v1617 = vmul.f32 %v1593, %v1569
        %v1618 = vmul.f32 %v1594, %v1570
        %v1619 = vmul.f32 %v1595, %v1571
        %v1620 = vmul.f32 %v1596, %v1572
        %v1621 = vmul.f32 %v1597, %v1573
        %v1622 = vmul.f32 %v1598, %v1574
        %v1623 = vmul.f32 %v1599, %v1575
        %v1624 = vmul.f32 %v1600, %v1576
        %v1625 = vmul.f32 %v1601, %v1577
        %v1626 = vmul.f32 %v1602, %v1578
        %v1627 = vmul.f32 %v1603, %v1579
        %v1628 = vmul.f32 %v1604, %v1580
        %v1629 = vmul.f32 %v1605, %v1581
        %v1630 = vadd.f32 %v1534, %v1606
        %v1631 = vadd.f32 %v1535, %v1607
        %v1632 = vadd.f32 %v1536, %v1608
        %v1633 = vadd.f32 %v1537, %v1609
        %v1634 = vadd.f32 %v1538, %v1610
        %v1635 = vadd.f32 %v1539, %v1611
        %v1636 = vadd.f32 %v1540, %v1612
        %v1637 = vadd.f32 %v1541, %v1613
        %v1638 = vadd.f32 %v1542, %v1614
        %v1639 = vadd.f32 %v1543, %v1615
        %v1640 = vadd.f32 %v1544, %v1616
        %v1641 = vadd.f32 %v1545, %v1617
        %v1642 = vadd.f32 %v1546, %v1618
        %v1643 = vadd.f32 %v1547, %v1619
        %v1644 = vadd.f32 %v1548, %v1620
        %v1645 = vadd.f32 %v1549, %v1621
        %v1646 = vadd.f32 %v1550, %v1622
        %v1647 = vadd.f32 %v1551, %v1623
        %v1648 = vadd.f32 %v1552, %v1624
        %v1649 = vadd.f32 %v1553, %v1625
        %v1650 = vadd.f32 %v1554, %v1626
        %v1651 = vadd.f32 %v1555, %v1627
        %v1652 = vadd.f32 %v1556, %v1628
        %v1653 = vadd.f32 %v1557, %v1629
        %v1654 = vld [vmem:[#allocation11] sm:$0xff]
        %v1655 = vld [vmem:[#allocation11 + $0x8] sm:$0xff]
        %v1656 = vld [vmem:[#allocation11 + $0x10] sm:$0xff]
        %v1657 = vld [vmem:[#allocation11 + $0x18] sm:$0xff]
        %v1658 = vld [vmem:[#allocation11 + $0x20] sm:$0xff]
        %v1659 = vld [vmem:[#allocation11 + $0x28] sm:$0xff]
        %v1660 = vld [vmem:[#allocation11 + $0x30] sm:$0xff]
        %v1661 = vld [vmem:[#allocation11 + $0x38] sm:$0xff]
        %v1662 = vld [vmem:[#allocation11 + $0x40] sm:$0xff]
        %v1663 = vld [vmem:[#allocation11 + $0x48] sm:$0xff]
        %v1664 = vld [vmem:[#allocation11 + $0x50] sm:$0xff]
        %v1665 = vld [vmem:[#allocation11 + $0x58] sm:$0xff]
        %v1666 = vld [vmem:[#allocation11 + $0x60] sm:$0xff]
        %v1667 = vld [vmem:[#allocation11 + $0x68] sm:$0xff]
        %v1668 = vld [vmem:[#allocation11 + $0x70] sm:$0xff]
        %v1669 = vld [vmem:[#allocation11 + $0x78] sm:$0xff]
        %v1670 = vld [vmem:[#allocation11 + $0x80] sm:$0xff]
        %v1671 = vld [vmem:[#allocation11 + $0x88] sm:$0xff]
        %v1672 = vld [vmem:[#allocation11 + $0x90] sm:$0xff]
        %v1673 = vld [vmem:[#allocation11 + $0x98] sm:$0xff]
        %v1674 = vld [vmem:[#allocation11 + $0xa0] sm:$0xff]
        %v1675 = vld [vmem:[#allocation11 + $0xa8] sm:$0xff]
        %v1676 = vld [vmem:[#allocation11 + $0xb0] sm:$0xff]
        %v1677 = vld [vmem:[#allocation11 + $0xb8] sm:$0xff]
        %v1678 = vmul.f32 %v1630, %v1654
        %v1679 = vmul.f32 %v1631, %v1655
        %v1680 = vmul.f32 %v1632, %v1656
        %v1681 = vmul.f32 %v1633, %v1657
        %v1682 = vmul.f32 %v1634, %v1658
        %v1683 = vmul.f32 %v1635, %v1659
        %v1684 = vmul.f32 %v1636, %v1660
        %v1685 = vmul.f32 %v1637, %v1661
        %v1686 = vmul.f32 %v1638, %v1662
        %v1687 = vmul.f32 %v1639, %v1663
        %v1688 = vmul.f32 %v1640, %v1664
        %v1689 = vmul.f32 %v1641, %v1665
        %v1690 = vmul.f32 %v1642, %v1666
        %v1691 = vmul.f32 %v1643, %v1667
        %v1692 = vmul.f32 %v1644, %v1668
        %v1693 = vmul.f32 %v1645, %v1669
        %v1694 = vmul.f32 %v1646, %v1670
        %v1695 = vmul.f32 %v1647, %v1671
        %v1696 = vmul.f32 %v1648, %v1672
        %v1697 = vmul.f32 %v1649, %v1673
        %v1698 = vmul.f32 %v1650, %v1674
        %v1699 = vmul.f32 %v1651, %v1675
        %v1700 = vmul.f32 %v1652, %v1676
        %v1701 = vmul.f32 %v1653, %v1677
        %v1702 = vld [vmem:[#allocation8] sm:$0xff]
        %v1703 = vld [vmem:[#allocation8 + $0x8] sm:$0xff]
        %v1704 = vld [vmem:[#allocation8 + $0x10] sm:$0xff]
        %v1705 = vld [vmem:[#allocation8 + $0x18] sm:$0xff]
        %v1706 = vld [vmem:[#allocation8 + $0x20] sm:$0xff]
        %v1707 = vld [vmem:[#allocation8 + $0x28] sm:$0xff]
        %v1708 = vld [vmem:[#allocation8 + $0x30] sm:$0xff]
        %v1709 = vld [vmem:[#allocation8 + $0x38] sm:$0xff]
        %v1710 = vld [vmem:[#allocation8 + $0x40] sm:$0xff]
        %v1711 = vld [vmem:[#allocation8 + $0x48] sm:$0xff]
        %v1712 = vld [vmem:[#allocation8 + $0x50] sm:$0xff]
        %v1713 = vld [vmem:[#allocation8 + $0x58] sm:$0xff]
        %v1714 = vld [vmem:[#allocation8 + $0x60] sm:$0xff]
        %v1715 = vld [vmem:[#allocation8 + $0x68] sm:$0xff]
        %v1716 = vld [vmem:[#allocation8 + $0x70] sm:$0xff]
        %v1717 = vld [vmem:[#allocation8 + $0x78] sm:$0xff]
        %v1718 = vld [vmem:[#allocation8 + $0x80] sm:$0xff]
        %v1719 = vld [vmem:[#allocation8 + $0x88] sm:$0xff]
        %v1720 = vld [vmem:[#allocation8 + $0x90] sm:$0xff]
        %v1721 = vld [vmem:[#allocation8 + $0x98] sm:$0xff]
        %v1722 = vld [vmem:[#allocation8 + $0xa0] sm:$0xff]
        %v1723 = vld [vmem:[#allocation8 + $0xa8] sm:$0xff]
        %v1724 = vld [vmem:[#allocation8 + $0xb0] sm:$0xff]
        %v1725 = vld [vmem:[#allocation8 + $0xb8] sm:$0xff]
        %v1726 = vpack.c.bf16 %v1679, %v1678
        %v1727 = vpack.c.bf16 %v1681, %v1680
        %v1728 = vpack.c.bf16 %v1683, %v1682
        %v1729 = vpack.c.bf16 %v1685, %v1684
        %v1730 = vpack.c.bf16 %v1687, %v1686
        %v1731 = vpack.c.bf16 %v1689, %v1688
        %v1732 = vpack.c.bf16 %v1691, %v1690
        %v1733 = vpack.c.bf16 %v1693, %v1692
        %v1734 = vpack.c.bf16 %v1695, %v1694
        %v1735 = vpack.c.bf16 %v1697, %v1696
        %v1736 = vpack.c.bf16 %v1699, %v1698
        %v1737 = vpack.c.bf16 %v1701, %v1700
        %v1762 = vunpack.c.l.b16 %v1702
        %v1763 = vunpack.c.h.b16 %v1702
        %v1764 = vunpack.c.l.b16 %v1703
        %v1765 = vunpack.c.h.b16 %v1703
        %v1766 = vunpack.c.l.b16 %v1704
        %v1767 = vunpack.c.h.b16 %v1704
        %v1768 = vunpack.c.l.b16 %v1705
        %v1769 = vunpack.c.h.b16 %v1705
        %v1770 = vunpack.c.l.b16 %v1706
        %v1771 = vunpack.c.h.b16 %v1706
        %v1772 = vunpack.c.l.b16 %v1707
        %v1773 = vunpack.c.h.b16 %v1707
        %v1774 = vunpack.c.l.b16 %v1708
        %v1775 = vunpack.c.h.b16 %v1708
        %v1776 = vunpack.c.l.b16 %v1709
        %v1777 = vunpack.c.h.b16 %v1709
        %v1778 = vunpack.c.l.b16 %v1710
        %v1779 = vunpack.c.h.b16 %v1710
        %v1780 = vunpack.c.l.b16 %v1711
        %v1781 = vunpack.c.h.b16 %v1711
        %v1782 = vunpack.c.l.b16 %v1712
        %v1783 = vunpack.c.h.b16 %v1712
        %v1784 = vunpack.c.l.b16 %v1713
        %v1785 = vunpack.c.h.b16 %v1713
        %v1786 = vunpack.c.l.b16 %v1714
        %v1787 = vunpack.c.h.b16 %v1714
        %v1788 = vunpack.c.l.b16 %v1715
        %v1789 = vunpack.c.h.b16 %v1715
        %v1790 = vunpack.c.l.b16 %v1716
        %v1791 = vunpack.c.h.b16 %v1716
        %v1792 = vunpack.c.l.b16 %v1717
        %v1793 = vunpack.c.h.b16 %v1717
        %v1794 = vunpack.c.l.b16 %v1718
        %v1795 = vunpack.c.h.b16 %v1718
        %v1796 = vunpack.c.l.b16 %v1719
        %v1797 = vunpack.c.h.b16 %v1719
        %v1798 = vunpack.c.l.b16 %v1720
        %v1799 = vunpack.c.h.b16 %v1720
        %v1800 = vunpack.c.l.b16 %v1721
        %v1801 = vunpack.c.h.b16 %v1721
        %v1802 = vunpack.c.l.b16 %v1722
        %v1803 = vunpack.c.h.b16 %v1722
        %v1804 = vunpack.c.l.b16 %v1723
        %v1805 = vunpack.c.h.b16 %v1723
        %v1806 = vunpack.c.l.b16 %v1724
        %v1807 = vunpack.c.h.b16 %v1724
        %v1808 = vunpack.c.l.b16 %v1725
        %v1809 = vunpack.c.h.b16 %v1725
        %v1810 = vpack.c.b16 %v1764, %v1762
        %v1811 = vpack.c.b16 %v1765, %v1763
        %v1812 = vpack.c.b16 %v1768, %v1766
        %v1813 = vpack.c.b16 %v1769, %v1767
        %v1814 = vpack.c.b16 %v1772, %v1770
        %v1815 = vpack.c.b16 %v1773, %v1771
        %v1816 = vpack.c.b16 %v1776, %v1774
        %v1817 = vpack.c.b16 %v1777, %v1775
        %v1818 = vpack.c.b16 %v1780, %v1778
        %v1819 = vpack.c.b16 %v1781, %v1779
        %v1820 = vpack.c.b16 %v1784, %v1782
        %v1821 = vpack.c.b16 %v1785, %v1783
        %v1822 = vpack.c.b16 %v1788, %v1786
        %v1823 = vpack.c.b16 %v1789, %v1787
        %v1824 = vpack.c.b16 %v1792, %v1790
        %v1825 = vpack.c.b16 %v1793, %v1791
        %v1826 = vpack.c.b16 %v1796, %v1794
        %v1827 = vpack.c.b16 %v1797, %v1795
        %v1828 = vpack.c.b16 %v1800, %v1798
        %v1829 = vpack.c.b16 %v1801, %v1799
        %v1830 = vpack.c.b16 %v1804, %v1802
        %v1831 = vpack.c.b16 %v1805, %v1803
        %v1832 = vpack.c.b16 %v1808, %v1806
        %v1833 = vpack.c.b16 %v1809, %v1807
        %v1847 = vsel %vm1130, %v1811, 0
        %v1850 = vsel %vm1130, %v1813, 0
        %v1853 = vsel %vm1130, %v1815, 0
        %v1856 = vsel %vm1130, %v1817, 0
        %v1859 = vsel %vm1130, %v1819, 0
        %v1862 = vsel %vm1130, %v1821, 0
        %v1865 = vsel %vm1130, %v1823, 0
        %v1868 = vsel %vm1130, %v1825, 0
        %v1871 = vsel %vm1130, %v1827, 0
        %v1874 = vsel %vm1130, %v1829, 0
        %v1877 = vsel %vm1130, %v1831, 0
        %v1880 = vsel %vm1130, %v1833, 0
        %1882 = vmatpush.bf16.msra.mxu0 %v1733
        %1883 = vmatpush.bf16.msra.mxu0 %v1732
        %1884 = vmatpush.bf16.msra.mxu0 %v1731
        %1885 = vmatpush.bf16.msra.mxu0 %v1730
        %1886 = vmatpush.bf16.msra.mxu0 %v1729
        %1887 = vmatpush.bf16.msra.mxu0 %v1728
        %1888 = vmatpush.bf16.msra.mxu0 %v1727
        %1889 = vmatpush.bf16.msra.mxu0 %v1726
        %1890 = vmatmul.bf16.gmra.mxu0 %v1810
        %v1891 = vpop.f32.mrf.mxu0
        %v1892 = vadd.f32 0.0, %v1891
        %v1893 = vpop.f32.mrf.mxu0
        %v1894 = vadd.f32 0.0, %v1893
        %1895 = vmatmul.bf16.gmra.mxu0 %v1812
        %v1896 = vpop.f32.mrf.mxu0
        %v1897 = vadd.f32 0.0, %v1896
        %v1898 = vpop.f32.mrf.mxu0
        %v1899 = vadd.f32 0.0, %v1898
        %1900 = vmatmul.bf16.gmra.mxu0 %v1814
        %v1901 = vpop.f32.mrf.mxu0
        %v1902 = vadd.f32 0.0, %v1901
        %v1903 = vpop.f32.mrf.mxu0
        %v1904 = vadd.f32 0.0, %v1903
        %1905 = vmatmul.bf16.gmra.mxu0 %v1816
        %v1906 = vpop.f32.mrf.mxu0
        %v1907 = vadd.f32 0.0, %v1906
        %v1908 = vpop.f32.mrf.mxu0
        %v1909 = vadd.f32 0.0, %v1908
        %1910 = vmatmul.bf16.gmra.mxu0 %v1818
        %v1911 = vpop.f32.mrf.mxu0
        %v1912 = vadd.f32 0.0, %v1911
        %v1913 = vpop.f32.mrf.mxu0
        %v1914 = vadd.f32 0.0, %v1913
        %1915 = vmatmul.bf16.gmra.mxu0 %v1820
        %v1916 = vpop.f32.mrf.mxu0
        %v1917 = vadd.f32 0.0, %v1916
        %v1918 = vpop.f32.mrf.mxu0
        %v1919 = vadd.f32 0.0, %v1918
        %1920 = vmatmul.bf16.gmra.mxu0 %v1822
        %v1921 = vpop.f32.mrf.mxu0
        %v1922 = vadd.f32 0.0, %v1921
        %v1923 = vpop.f32.mrf.mxu0
        %v1924 = vadd.f32 0.0, %v1923
        %1925 = vmatmul.bf16.gmra.mxu0 %v1824
        %v1926 = vpop.f32.mrf.mxu0
        %v1927 = vadd.f32 0.0, %v1926
        %v1928 = vpop.f32.mrf.mxu0
        %v1929 = vadd.f32 0.0, %v1928
        %1930 = vmatmul.bf16.gmra.mxu0 %v1826
        %v1931 = vpop.f32.mrf.mxu0
        %v1932 = vadd.f32 0.0, %v1931
        %v1933 = vpop.f32.mrf.mxu0
        %v1934 = vadd.f32 0.0, %v1933
        %1935 = vmatmul.bf16.gmra.mxu0 %v1828
        %v1936 = vpop.f32.mrf.mxu0
        %v1937 = vadd.f32 0.0, %v1936
        %v1938 = vpop.f32.mrf.mxu0
        %v1939 = vadd.f32 0.0, %v1938
        %1940 = vmatmul.bf16.gmra.mxu0 %v1830
        %v1941 = vpop.f32.mrf.mxu0
        %v1942 = vadd.f32 0.0, %v1941
        %v1943 = vpop.f32.mrf.mxu0
        %v1944 = vadd.f32 0.0, %v1943
        %1945 = vmatmul.bf16.gmra.mxu0 %v1832
        %v1946 = vpop.f32.mrf.mxu0
        %v1947 = vadd.f32 0.0, %v1946
        %v1948 = vpop.f32.mrf.mxu0
        %v1949 = vadd.f32 0.0, %v1948
        %1950 = vdwg.mxu0
        %1951 = vmatpush.bf16.msra.mxu0 0
        %1952 = vmatpush.bf16.msra.mxu0 0
        %1953 = vmatpush.bf16.msra.mxu0 0
        %1954 = vmatpush.bf16.msra.mxu0 0
        %1955 = vmatpush.bf16.msra.mxu0 %v1737
        %1956 = vmatpush.bf16.msra.mxu0 %v1736
        %1957 = vmatpush.bf16.msra.mxu0 %v1735
        %1958 = vmatpush.bf16.msra.mxu0 %v1734
        %1959 = vmatmul.bf16.gmra.mxu0 %v1847
        %v1960 = vpop.f32.mrf.mxu0
        %v1961 = vadd.f32 %v1892, %v1960
        %v1962 = vpop.f32.mrf.mxu0
        %v1963 = vadd.f32 %v1894, %v1962
        %1964 = vmatmul.bf16.gmra.mxu0 %v1850
        %v1965 = vpop.f32.mrf.mxu0
        %v1966 = vadd.f32 %v1897, %v1965
        %v1967 = vpop.f32.mrf.mxu0
        %v1968 = vadd.f32 %v1899, %v1967
        %1969 = vmatmul.bf16.gmra.mxu0 %v1853
        %v1970 = vpop.f32.mrf.mxu0
        %v1971 = vadd.f32 %v1902, %v1970
        %v1972 = vpop.f32.mrf.mxu0
        %v1973 = vadd.f32 %v1904, %v1972
        %1974 = vmatmul.bf16.gmra.mxu0 %v1856
        %v1975 = vpop.f32.mrf.mxu0
        %v1976 = vadd.f32 %v1907, %v1975
        %v1977 = vpop.f32.mrf.mxu0
        %v1978 = vadd.f32 %v1909, %v1977
        %1979 = vmatmul.bf16.gmra.mxu0 %v1859
        %v1980 = vpop.f32.mrf.mxu0
        %v1981 = vadd.f32 %v1912, %v1980
        %v1982 = vpop.f32.mrf.mxu0
        %v1983 = vadd.f32 %v1914, %v1982
        %1984 = vmatmul.bf16.gmra.mxu0 %v1862
        %v1985 = vpop.f32.mrf.mxu0
        %v1986 = vadd.f32 %v1917, %v1985
        %v1987 = vpop.f32.mrf.mxu0
        %v1988 = vadd.f32 %v1919, %v1987
        %1989 = vmatmul.bf16.gmra.mxu0 %v1865
        %v1990 = vpop.f32.mrf.mxu0
        %v1991 = vadd.f32 %v1922, %v1990
        %v1992 = vpop.f32.mrf.mxu0
        %v1993 = vadd.f32 %v1924, %v1992
        %1994 = vmatmul.bf16.gmra.mxu0 %v1868
        %v1995 = vpop.f32.mrf.mxu0
        %v1996 = vadd.f32 %v1927, %v1995
        %v1997 = vpop.f32.mrf.mxu0
        %v1998 = vadd.f32 %v1929, %v1997
        %1999 = vmatmul.bf16.gmra.mxu0 %v1871
        %v2000 = vpop.f32.mrf.mxu0
        %v2001 = vadd.f32 %v1932, %v2000
        %v2002 = vpop.f32.mrf.mxu0
        %v2003 = vadd.f32 %v1934, %v2002
        %2004 = vmatmul.bf16.gmra.mxu0 %v1874
        %v2005 = vpop.f32.mrf.mxu0
        %v2006 = vadd.f32 %v1937, %v2005
        %v2007 = vpop.f32.mrf.mxu0
        %v2008 = vadd.f32 %v1939, %v2007
        %2009 = vmatmul.bf16.gmra.mxu0 %v1877
        %v2010 = vpop.f32.mrf.mxu0
        %v2011 = vadd.f32 %v1942, %v2010
        %v2012 = vpop.f32.mrf.mxu0
        %v2013 = vadd.f32 %v1944, %v2012
        %2014 = vmatmul.bf16.gmra.mxu0 %v1880
        %v2015 = vpop.f32.mrf.mxu0
        %v2016 = vadd.f32 %v1947, %v2015
        %v2017 = vpop.f32.mrf.mxu0
        %v2018 = vadd.f32 %v1949, %v2017
        %2019 = vdwg.mxu0
        %v2020 = vld [vmem:[%s4] sm:$0xf]
        %v2021 = vld [vmem:[%s4 + $0x4] sm:$0xf]
        %v2022 = vld [vmem:[%s4 + $0x8] sm:$0xf]
        %v2023 = vld [vmem:[%s4 + $0xc] sm:$0xf]
        %v2024 = vld [vmem:[%s4 + $0x10] sm:$0xf]
        %v2025 = vld [vmem:[%s4 + $0x14] sm:$0xf]
        %v2026 = vld [vmem:[%s4 + $0x18] sm:$0xf]
        %v2027 = vld [vmem:[%s4 + $0x1c] sm:$0xf]
        %v2028 = vld [vmem:[%s4 + $0x20] sm:$0xf]
        %v2029 = vld [vmem:[%s4 + $0x24] sm:$0xf]
        %v2030 = vld [vmem:[%s4 + $0x28] sm:$0xf]
        %v2031 = vld [vmem:[%s4 + $0x2c] sm:$0xf]
        %v2032 = vld [vmem:[%s4 + $0x30] sm:$0xf]
        %v2033 = vld [vmem:[%s4 + $0x34] sm:$0xf]
        %v2034 = vld [vmem:[%s4 + $0x38] sm:$0xf]
        %v2035 = vld [vmem:[%s4 + $0x3c] sm:$0xf]
        %v2036 = vpack.c.bf16 %v1963, %v1961
        %v2037 = vpack.c.bf16 %v1968, %v1966
        %v2038 = vpack.c.bf16 %v1973, %v1971
        %v2039 = vpack.c.bf16 %v1978, %v1976
        %v2040 = vpack.c.bf16 %v1983, %v1981
        %v2041 = vpack.c.bf16 %v1988, %v1986
        %v2042 = vpack.c.bf16 %v1993, %v1991
        %v2043 = vpack.c.bf16 %v1998, %v1996
        %v2044 = vpack.c.bf16 %v2003, %v2001
        %v2045 = vpack.c.bf16 %v2008, %v2006
        %v2046 = vpack.c.bf16 %v2013, %v2011
        %v2047 = vpack.c.bf16 %v2018, %v2016
        %v2064 = vunpack.c.l.b16 %v2020
        %v2065 = vunpack.c.l.b16 %v2021
        %v2066 = vunpack.c.l.b16 %v2022
        %v2067 = vunpack.c.l.b16 %v2023
        %v2068 = vunpack.c.l.b16 %v2024
        %v2069 = vunpack.c.l.b16 %v2025
        %v2070 = vunpack.c.l.b16 %v2026
        %v2071 = vunpack.c.l.b16 %v2027
        %v2072 = vunpack.c.l.b16 %v2028
        %v2073 = vunpack.c.l.b16 %v2029
        %v2074 = vunpack.c.l.b16 %v2030
        %v2075 = vunpack.c.l.b16 %v2031
        %v2076 = vunpack.c.l.b16 %v2032
        %v2077 = vunpack.c.l.b16 %v2033
        %v2078 = vunpack.c.l.b16 %v2034
        %v2079 = vunpack.c.l.b16 %v2035
        %v2080 = vpack.c.b16 %v2065, %v2064
        %v2081 = vpack.c.b16 %v2067, %v2066
        %v2082 = vpack.c.b16 %v2069, %v2068
        %v2083 = vpack.c.b16 %v2071, %v2070
        %v2084 = vpack.c.b16 %v2073, %v2072
        %v2085 = vpack.c.b16 %v2075, %v2074
        %v2086 = vpack.c.b16 %v2077, %v2076
        %v2087 = vpack.c.b16 %v2079, %v2078
        %2096 = vmatpush.bf16.msra.mxu0 %v2087
        %2097 = vmatpush.bf16.msra.mxu0 %v2086
        %2098 = vmatpush.bf16.msra.mxu0 %v2085
        %2099 = vmatpush.bf16.msra.mxu0 %v2084
        %2100 = vmatpush.bf16.msra.mxu0 %v2083
        %2101 = vmatpush.bf16.msra.mxu0 %v2082
        %2102 = vmatpush.bf16.msra.mxu0 %v2081
        %2103 = vmatpush.bf16.msra.mxu0 %v2080
        %2104 = vmatmul.bf16.gmra.mxu0 %v2036
        %v2105 = vpop.f32.mrf.mxu0
        %v2106 = vadd.f32 0.0, %v2105
        %v2107 = vpop.f32.mrf.mxu0
        %v2108 = vadd.f32 0.0, %v2107
        %2109 = vmatmul.bf16.gmra.mxu0 %v2037
        %v2110 = vpop.f32.mrf.mxu0
        %v2111 = vadd.f32 0.0, %v2110
        %v2112 = vpop.f32.mrf.mxu0
        %v2113 = vadd.f32 0.0, %v2112
        %2114 = vmatmul.bf16.gmra.mxu0 %v2038
        %v2115 = vpop.f32.mrf.mxu0
        %v2116 = vadd.f32 0.0, %v2115
        %v2117 = vpop.f32.mrf.mxu0
        %v2118 = vadd.f32 0.0, %v2117
        %2119 = vmatmul.bf16.gmra.mxu0 %v2039
        %v2120 = vpop.f32.mrf.mxu0
        %v2121 = vadd.f32 0.0, %v2120
        %v2122 = vpop.f32.mrf.mxu0
        %v2123 = vadd.f32 0.0, %v2122
        %2124 = vmatmul.bf16.gmra.mxu0 %v2040
        %v2125 = vpop.f32.mrf.mxu0
        %v2126 = vadd.f32 0.0, %v2125
        %v2127 = vpop.f32.mrf.mxu0
        %v2128 = vadd.f32 0.0, %v2127
        %2129 = vmatmul.bf16.gmra.mxu0 %v2041
        %v2130 = vpop.f32.mrf.mxu0
        %v2131 = vadd.f32 0.0, %v2130
        %v2132 = vpop.f32.mrf.mxu0
        %v2133 = vadd.f32 0.0, %v2132
        %2134 = vmatmul.bf16.gmra.mxu0 %v2042
        %v2135 = vpop.f32.mrf.mxu0
        %v2136 = vadd.f32 0.0, %v2135
        %v2137 = vpop.f32.mrf.mxu0
        %v2138 = vadd.f32 0.0, %v2137
        %2139 = vmatmul.bf16.gmra.mxu0 %v2043
        %v2140 = vpop.f32.mrf.mxu0
        %v2141 = vadd.f32 0.0, %v2140
        %v2142 = vpop.f32.mrf.mxu0
        %v2143 = vadd.f32 0.0, %v2142
        %2144 = vmatmul.bf16.gmra.mxu0 %v2044
        %v2145 = vpop.f32.mrf.mxu0
        %v2146 = vadd.f32 0.0, %v2145
        %v2147 = vpop.f32.mrf.mxu0
        %v2148 = vadd.f32 0.0, %v2147
        %2149 = vmatmul.bf16.gmra.mxu0 %v2045
        %v2150 = vpop.f32.mrf.mxu0
        %v2151 = vadd.f32 0.0, %v2150
        %v2152 = vpop.f32.mrf.mxu0
        %v2153 = vadd.f32 0.0, %v2152
        %2154 = vmatmul.bf16.gmra.mxu0 %v2046
        %v2155 = vpop.f32.mrf.mxu0
        %v2156 = vadd.f32 0.0, %v2155
        %v2157 = vpop.f32.mrf.mxu0
        %v2158 = vadd.f32 0.0, %v2157
        %2159 = vmatmul.bf16.gmra.mxu0 %v2047
        %v2160 = vpop.f32.mrf.mxu0
        %v2161 = vadd.f32 0.0, %v2160
        %v2162 = vpop.f32.mrf.mxu0
        %v2163 = vadd.f32 0.0, %v2162
        %2164 = vdwg.mxu0
        %v2165 = vld [vmem:[%s9] sm:$0xf]
        %v2166 = vld [vmem:[%s9 + $0x4] sm:$0xf]
        %v2167 = vld [vmem:[%s9 + $0x8] sm:$0xf]
        %v2168 = vld [vmem:[%s9 + $0xc] sm:$0xf]
        %v2169 = vld [vmem:[%s9 + $0x10] sm:$0xf]
        %v2170 = vld [vmem:[%s9 + $0x14] sm:$0xf]
        %v2171 = vld [vmem:[%s9 + $0x18] sm:$0xf]
        %v2172 = vld [vmem:[%s9 + $0x1c] sm:$0xf]
        %v2173 = vld [vmem:[%s9 + $0x20] sm:$0xf]
        %v2174 = vld [vmem:[%s9 + $0x24] sm:$0xf]
        %v2175 = vld [vmem:[%s9 + $0x28] sm:$0xf]
        %v2176 = vld [vmem:[%s9 + $0x2c] sm:$0xf]
        %v2177 = vld [vmem:[%s9 + $0x30] sm:$0xf]
        %v2178 = vld [vmem:[%s9 + $0x34] sm:$0xf]
        %v2179 = vld [vmem:[%s9 + $0x38] sm:$0xf]
        %v2180 = vld [vmem:[%s9 + $0x3c] sm:$0xf]
        %v2181 = vpack.c.bf16 %v2148, %v2146
        %v2182 = vpack.c.bf16 %v2153, %v2151
        %v2183 = vpack.c.bf16 %v2158, %v2156
        %v2184 = vpack.c.bf16 %v2163, %v2161
        %v2201 = vunpack.c.l.b16 %v2165
        %v2202 = vunpack.c.l.b16 %v2166
        %v2203 = vunpack.c.l.b16 %v2167
        %v2204 = vunpack.c.l.b16 %v2168
        %v2205 = vunpack.c.l.b16 %v2169
        %v2206 = vunpack.c.l.b16 %v2170
        %v2207 = vunpack.c.l.b16 %v2171
        %v2208 = vunpack.c.l.b16 %v2172
        %v2209 = vunpack.c.l.b16 %v2173
        %v2210 = vunpack.c.l.b16 %v2174
        %v2211 = vunpack.c.l.b16 %v2175
        %v2212 = vunpack.c.l.b16 %v2176
        %v2213 = vunpack.c.l.b16 %v2177
        %v2214 = vunpack.c.l.b16 %v2178
        %v2215 = vunpack.c.l.b16 %v2179
        %v2216 = vunpack.c.l.b16 %v2180
        %v2217 = vpack.c.b16 %v2202, %v2201
        %v2218 = vpack.c.b16 %v2204, %v2203
        %v2219 = vpack.c.b16 %v2206, %v2205
        %v2220 = vpack.c.b16 %v2208, %v2207
        %v2221 = vpack.c.b16 %v2210, %v2209
        %v2222 = vpack.c.b16 %v2212, %v2211
        %v2223 = vpack.c.b16 %v2214, %v2213
        %v2224 = vpack.c.b16 %v2216, %v2215
        %v2226 = vsel %vm1130, %v2217, 0
        %v2229 = vsel %vm1130, %v2218, 0
        %v2232 = vsel %vm1130, %v2219, 0
        %v2235 = vsel %vm1130, %v2220, 0
        %v2238 = vsel %vm1130, %v2221, 0
        %v2241 = vsel %vm1130, %v2222, 0
        %v2244 = vsel %vm1130, %v2223, 0
        %v2247 = vsel %vm1130, %v2224, 0
        %2249 = vmatpush.bf16.msra.mxu0 0
        %2250 = vmatpush.bf16.msra.mxu0 0
        %2251 = vmatpush.bf16.msra.mxu0 0
        %2252 = vmatpush.bf16.msra.mxu0 0
        %2253 = vmatpush.bf16.msra.mxu0 %v2184
        %2254 = vmatpush.bf16.msra.mxu0 %v2183
        %2255 = vmatpush.bf16.msra.mxu0 %v2182
        %2256 = vmatpush.bf16.msra.mxu0 %v2181
        %2257 = vmatmul.bf16.gmra.mxu0 %v2226
        %v2258 = vpop.f32.mrf.mxu0
        %v2259 = vadd.f32 0.0, %v2258
        %v2260 = vpop.f32.mrf.mxu0
        %v2261 = vadd.f32 0.0, %v2260
        %2262 = vmatmul.bf16.gmra.mxu0 %v2229
        %v2263 = vpop.f32.mrf.mxu0
        %v2264 = vadd.f32 0.0, %v2263
        %v2265 = vpop.f32.mrf.mxu0
        %v2266 = vadd.f32 0.0, %v2265
        %2267 = vmatmul.bf16.gmra.mxu0 %v2232
        %v2268 = vpop.f32.mrf.mxu0
        %v2269 = vadd.f32 0.0, %v2268
        %v2270 = vpop.f32.mrf.mxu0
        %v2271 = vadd.f32 0.0, %v2270
        %2272 = vmatmul.bf16.gmra.mxu0 %v2235
        %v2273 = vpop.f32.mrf.mxu0
        %v2274 = vadd.f32 0.0, %v2273
        %v2275 = vpop.f32.mrf.mxu0
        %v2276 = vadd.f32 0.0, %v2275
        %2277 = vmatmul.bf16.gmra.mxu0 %v2238
        %v2278 = vpop.f32.mrf.mxu0
        %v2279 = vadd.f32 0.0, %v2278
        %v2280 = vpop.f32.mrf.mxu0
        %v2281 = vadd.f32 0.0, %v2280
        %2282 = vmatmul.bf16.gmra.mxu0 %v2241
        %v2283 = vpop.f32.mrf.mxu0
        %v2284 = vadd.f32 0.0, %v2283
        %v2285 = vpop.f32.mrf.mxu0
        %v2286 = vadd.f32 0.0, %v2285
        %2287 = vmatmul.bf16.gmra.mxu0 %v2244
        %v2288 = vpop.f32.mrf.mxu0
        %v2289 = vadd.f32 0.0, %v2288
        %v2290 = vpop.f32.mrf.mxu0
        %v2291 = vadd.f32 0.0, %v2290
        %2292 = vmatmul.bf16.gmra.mxu0 %v2247
        %v2293 = vpop.f32.mrf.mxu0
        %v2294 = vadd.f32 0.0, %v2293
        %v2295 = vpop.f32.mrf.mxu0
        %v2296 = vadd.f32 0.0, %v2295
        %2297 = vdwg.mxu0
        %v2298 = vld [vmem:[#allocation16] sm:$0xff]
        %v2299 = vld [vmem:[#allocation16 + $0x8] sm:$0xff]
        %v2300 = vld [vmem:[#allocation16 + $0x10] sm:$0xff]
        %v2301 = vld [vmem:[#allocation16 + $0x18] sm:$0xff]
        %v2302 = vld [vmem:[#allocation16 + $0x20] sm:$0xff]
        %v2303 = vld [vmem:[#allocation16 + $0x28] sm:$0xff]
        %v2304 = vld [vmem:[#allocation16 + $0x30] sm:$0xff]
        %v2305 = vld [vmem:[#allocation16 + $0x38] sm:$0xff]
        %v2306 = vld [vmem:[#allocation16 + $0x40] sm:$0xff]
        %v2307 = vld [vmem:[#allocation16 + $0x48] sm:$0xff]
        %v2308 = vld [vmem:[#allocation16 + $0x50] sm:$0xff]
        %v2309 = vld [vmem:[#allocation16 + $0x58] sm:$0xff]
        %v2310 = vld [vmem:[#allocation16 + $0x60] sm:$0xff]
        %v2311 = vld [vmem:[#allocation16 + $0x68] sm:$0xff]
        %v2312 = vld [vmem:[#allocation16 + $0x70] sm:$0xff]
        %v2313 = vld [vmem:[#allocation16 + $0x78] sm:$0xff]
        %v2314 = vpack.c.bf16 %v2261, %v2259
        %v2315 = vpack.c.bf16 %v2266, %v2264
        %v2316 = vpack.c.bf16 %v2271, %v2269
        %v2317 = vpack.c.bf16 %v2276, %v2274
        %v2318 = vpack.c.bf16 %v2281, %v2279
        %v2319 = vpack.c.bf16 %v2286, %v2284
        %v2320 = vpack.c.bf16 %v2291, %v2289
        %v2321 = vpack.c.bf16 %v2296, %v2294
        %v2338 = vunpack.c.l.b16 %v2298
        %v2339 = vunpack.c.h.b16 %v2298
        %v2340 = vunpack.c.l.b16 %v2299
        %v2341 = vunpack.c.h.b16 %v2299
        %v2342 = vunpack.c.l.b16 %v2300
        %v2343 = vunpack.c.h.b16 %v2300
        %v2344 = vunpack.c.l.b16 %v2301
        %v2345 = vunpack.c.h.b16 %v2301
        %v2346 = vunpack.c.l.b16 %v2302
        %v2347 = vunpack.c.h.b16 %v2302
        %v2348 = vunpack.c.l.b16 %v2303
        %v2349 = vunpack.c.h.b16 %v2303
        %v2350 = vunpack.c.l.b16 %v2304
        %v2351 = vunpack.c.h.b16 %v2304
        %v2352 = vunpack.c.l.b16 %v2305
        %v2353 = vunpack.c.h.b16 %v2305
        %v2354 = vunpack.c.l.b16 %v2306
        %v2355 = vunpack.c.h.b16 %v2306
        %v2356 = vunpack.c.l.b16 %v2307
        %v2357 = vunpack.c.h.b16 %v2307
        %v2358 = vunpack.c.l.b16 %v2308
        %v2359 = vunpack.c.h.b16 %v2308
        %v2360 = vunpack.c.l.b16 %v2309
        %v2361 = vunpack.c.h.b16 %v2309
        %v2362 = vunpack.c.l.b16 %v2310
        %v2363 = vunpack.c.h.b16 %v2310
        %v2364 = vunpack.c.l.b16 %v2311
        %v2365 = vunpack.c.h.b16 %v2311
        %v2366 = vunpack.c.l.b16 %v2312
        %v2367 = vunpack.c.h.b16 %v2312
        %v2368 = vunpack.c.l.b16 %v2313
        %v2369 = vunpack.c.h.b16 %v2313
        %v2370 = vpack.c.b16 %v2340, %v2338
        %v2371 = vpack.c.b16 %v2341, %v2339
        %v2372 = vpack.c.b16 %v2344, %v2342
        %v2373 = vpack.c.b16 %v2345, %v2343
        %v2374 = vpack.c.b16 %v2348, %v2346
        %v2375 = vpack.c.b16 %v2349, %v2347
        %v2376 = vpack.c.b16 %v2352, %v2350
        %v2377 = vpack.c.b16 %v2353, %v2351
        %v2378 = vpack.c.b16 %v2356, %v2354
        %v2379 = vpack.c.b16 %v2357, %v2355
        %v2380 = vpack.c.b16 %v2360, %v2358
        %v2381 = vpack.c.b16 %v2361, %v2359
        %v2382 = vpack.c.b16 %v2364, %v2362
        %v2383 = vpack.c.b16 %v2365, %v2363
        %v2384 = vpack.c.b16 %v2368, %v2366
        %v2385 = vpack.c.b16 %v2369, %v2367
        %2402 = vmatpush.bf16.msra.mxu0 %v2384
        %2403 = vmatpush.bf16.msra.mxu0 %v2382
        %2404 = vmatpush.bf16.msra.mxu0 %v2380
        %2405 = vmatpush.bf16.msra.mxu0 %v2378
        %2406 = vmatpush.bf16.msra.mxu0 %v2376
        %2407 = vmatpush.bf16.msra.mxu0 %v2374
        %2408 = vmatpush.bf16.msra.mxu0 %v2372
        %2409 = vmatpush.bf16.msra.mxu0 %v2370
        %2410 = vmatmul.bf16.gmra.mxu0 %v2314
        %v2411 = vpop.f32.mrf.mxu0
        %v2412 = vadd.f32 0.0, %v2411
        %v2413 = vpop.f32.mrf.mxu0
        %v2414 = vadd.f32 0.0, %v2413
        %2415 = vmatmul.bf16.gmra.mxu0 %v2315
        %v2416 = vpop.f32.mrf.mxu0
        %v2417 = vadd.f32 0.0, %v2416
        %v2418 = vpop.f32.mrf.mxu0
        %v2419 = vadd.f32 0.0, %v2418
        %2420 = vmatmul.bf16.gmra.mxu0 %v2316
        %v2421 = vpop.f32.mrf.mxu0
        %v2422 = vadd.f32 0.0, %v2421
        %v2423 = vpop.f32.mrf.mxu0
        %v2424 = vadd.f32 0.0, %v2423
        %2425 = vmatmul.bf16.gmra.mxu0 %v2317
        %v2426 = vpop.f32.mrf.mxu0
        %v2427 = vadd.f32 0.0, %v2426
        %v2428 = vpop.f32.mrf.mxu0
        %v2429 = vadd.f32 0.0, %v2428
        %2430 = vmatmul.bf16.gmra.mxu0 %v2318
        %v2431 = vpop.f32.mrf.mxu0
        %v2432 = vadd.f32 0.0, %v2431
        %v2433 = vpop.f32.mrf.mxu0
        %v2434 = vadd.f32 0.0, %v2433
        %2435 = vmatmul.bf16.gmra.mxu0 %v2319
        %v2436 = vpop.f32.mrf.mxu0
        %v2437 = vadd.f32 0.0, %v2436
        %v2438 = vpop.f32.mrf.mxu0
        %v2439 = vadd.f32 0.0, %v2438
        %2440 = vmatmul.bf16.gmra.mxu0 %v2320
        %v2441 = vpop.f32.mrf.mxu0
        %v2442 = vadd.f32 0.0, %v2441
        %v2443 = vpop.f32.mrf.mxu0
        %v2444 = vadd.f32 0.0, %v2443
        %2445 = vmatmul.bf16.gmra.mxu0 %v2321
        %v2446 = vpop.f32.mrf.mxu0
        %v2447 = vadd.f32 0.0, %v2446
        %v2448 = vpop.f32.mrf.mxu0
        %v2449 = vadd.f32 0.0, %v2448
        %2450 = vdwg.mxu0
        %2451 = vmatpush.bf16.msra.mxu0 %v2385
        %2452 = vmatpush.bf16.msra.mxu0 %v2383
        %2453 = vmatpush.bf16.msra.mxu0 %v2381
        %2454 = vmatpush.bf16.msra.mxu0 %v2379
        %2455 = vmatpush.bf16.msra.mxu0 %v2377
        %2456 = vmatpush.bf16.msra.mxu0 %v2375
        %2457 = vmatpush.bf16.msra.mxu0 %v2373
        %2458 = vmatpush.bf16.msra.mxu0 %v2371
        %2459 = vmatmul.bf16.gmra.mxu0 %v2314
        %v2460 = vpop.f32.mrf.mxu0
        %v2461 = vadd.f32 0.0, %v2460
        %v2462 = vpop.f32.mrf.mxu0
        %v2463 = vadd.f32 0.0, %v2462
        %2464 = vmatmul.bf16.gmra.mxu0 %v2315
        %v2465 = vpop.f32.mrf.mxu0
        %v2466 = vadd.f32 0.0, %v2465
        %v2467 = vpop.f32.mrf.mxu0
        %v2468 = vadd.f32 0.0, %v2467
        %2469 = vmatmul.bf16.gmra.mxu0 %v2316
        %v2470 = vpop.f32.mrf.mxu0
        %v2471 = vadd.f32 0.0, %v2470
        %v2472 = vpop.f32.mrf.mxu0
        %v2473 = vadd.f32 0.0, %v2472
        %2474 = vmatmul.bf16.gmra.mxu0 %v2317
        %v2475 = vpop.f32.mrf.mxu0
        %v2476 = vadd.f32 0.0, %v2475
        %v2477 = vpop.f32.mrf.mxu0
        %v2478 = vadd.f32 0.0, %v2477
        %2479 = vmatmul.bf16.gmra.mxu0 %v2318
        %v2480 = vpop.f32.mrf.mxu0
        %v2481 = vadd.f32 0.0, %v2480
        %v2482 = vpop.f32.mrf.mxu0
        %v2483 = vadd.f32 0.0, %v2482
        %2484 = vmatmul.bf16.gmra.mxu0 %v2319
        %v2485 = vpop.f32.mrf.mxu0
        %v2486 = vadd.f32 0.0, %v2485
        %v2487 = vpop.f32.mrf.mxu0
        %v2488 = vadd.f32 0.0, %v2487
        %2489 = vmatmul.bf16.gmra.mxu0 %v2320
        %v2490 = vpop.f32.mrf.mxu0
        %v2491 = vadd.f32 0.0, %v2490
        %v2492 = vpop.f32.mrf.mxu0
        %v2493 = vadd.f32 0.0, %v2492
        %2494 = vmatmul.bf16.gmra.mxu0 %v2321
        %v2495 = vpop.f32.mrf.mxu0
        %v2496 = vadd.f32 0.0, %v2495
        %v2497 = vpop.f32.mrf.mxu0
        %v2498 = vadd.f32 0.0, %v2497
        %2499 = vdwg.mxu0
        %v2500 = vmul.f32 %v2461, 1.402
        %v2501 = vmul.f32 %v2463, 1.402
        %v2502 = vmul.f32 %v2466, 1.402
        %v2503 = vmul.f32 %v2468, 1.402
        %v2504 = vmul.f32 %v2471, 1.402
        %v2505 = vmul.f32 %v2473, 1.402
        %v2506 = vmul.f32 %v2476, 1.402
        %v2507 = vmul.f32 %v2478, 1.402
        %v2508 = vmul.f32 %v2481, 1.402
        %v2509 = vmul.f32 %v2483, 1.402
        %v2510 = vmul.f32 %v2486, 1.402
        %v2511 = vmul.f32 %v2488, 1.402
        %v2512 = vmul.f32 %v2491, 1.402
        %v2513 = vmul.f32 %v2493, 1.402
        %v2514 = vmul.f32 %v2496, 1.402
        %v2515 = vmul.f32 %v2498, 1.402
        %v2516 = vadd.f32 %v2106, %v2500
        %v2517 = vadd.f32 %v2108, %v2501
        %v2518 = vadd.f32 %v2111, %v2502
        %v2519 = vadd.f32 %v2113, %v2503
        %v2520 = vadd.f32 %v2116, %v2504
        %v2521 = vadd.f32 %v2118, %v2505
        %v2522 = vadd.f32 %v2121, %v2506
        %v2523 = vadd.f32 %v2123, %v2507
        %v2524 = vadd.f32 %v2126, %v2508
        %v2525 = vadd.f32 %v2128, %v2509
        %v2526 = vadd.f32 %v2131, %v2510
        %v2527 = vadd.f32 %v2133, %v2511
        %v2528 = vadd.f32 %v2136, %v2512
        %v2529 = vadd.f32 %v2138, %v2513
        %v2530 = vadd.f32 %v2141, %v2514
        %v2531 = vadd.f32 %v2143, %v2515
        %v2532 = vadd.f32 %v2516, 0.5019608
        %v2533 = vadd.f32 %v2517, 0.5019608
        %v2534 = vadd.f32 %v2518, 0.5019608
        %v2535 = vadd.f32 %v2519, 0.5019608
        %v2536 = vadd.f32 %v2520, 0.5019608
        %v2537 = vadd.f32 %v2521, 0.5019608
        %v2538 = vadd.f32 %v2522, 0.5019608
        %v2539 = vadd.f32 %v2523, 0.5019608
        %v2540 = vadd.f32 %v2524, 0.5019608
        %v2541 = vadd.f32 %v2525, 0.5019608
        %v2542 = vadd.f32 %v2526, 0.5019608
        %v2543 = vadd.f32 %v2527, 0.5019608
        %v2544 = vadd.f32 %v2528, 0.5019608
        %v2545 = vadd.f32 %v2529, 0.5019608
        %v2546 = vadd.f32 %v2530, 0.5019608
        %v2547 = vadd.f32 %v2531, 0.5019608
        %v2548 = vmul.f32 %v2412, 0.344136
        %v2549 = vmul.f32 %v2414, 0.344136
        %v2550 = vmul.f32 %v2417, 0.344136
        %v2551 = vmul.f32 %v2419, 0.344136
        %v2552 = vmul.f32 %v2422, 0.344136
        %v2553 = vmul.f32 %v2424, 0.344136
        %v2554 = vmul.f32 %v2427, 0.344136
        %v2555 = vmul.f32 %v2429, 0.344136
        %v2556 = vmul.f32 %v2432, 0.344136
        %v2557 = vmul.f32 %v2434, 0.344136
        %v2558 = vmul.f32 %v2437, 0.344136
        %v2559 = vmul.f32 %v2439, 0.344136
        %v2560 = vmul.f32 %v2442, 0.344136
        %v2561 = vmul.f32 %v2444, 0.344136
        %v2562 = vmul.f32 %v2447, 0.344136
        %v2563 = vmul.f32 %v2449, 0.344136
        %v2564 = vsub.f32 %v2106, %v2548
        %v2565 = vsub.f32 %v2108, %v2549
        %v2566 = vsub.f32 %v2111, %v2550
        %v2567 = vsub.f32 %v2113, %v2551
        %v2568 = vsub.f32 %v2116, %v2552
        %v2569 = vsub.f32 %v2118, %v2553
        %v2570 = vsub.f32 %v2121, %v2554
        %v2571 = vsub.f32 %v2123, %v2555
        %v2572 = vsub.f32 %v2126, %v2556
        %v2573 = vsub.f32 %v2128, %v2557
        %v2574 = vsub.f32 %v2131, %v2558
        %v2575 = vsub.f32 %v2133, %v2559
        %v2576 = vsub.f32 %v2136, %v2560
        %v2577 = vsub.f32 %v2138, %v2561
        %v2578 = vsub.f32 %v2141, %v2562
        %v2579 = vsub.f32 %v2143, %v2563
        %v2580 = vmul.f32 %v2461, 0.714136
        %v2581 = vmul.f32 %v2463, 0.714136
        %v2582 = vmul.f32 %v2466, 0.714136
        %v2583 = vmul.f32 %v2468, 0.714136
        %v2584 = vmul.f32 %v2471, 0.714136
        %v2585 = vmul.f32 %v2473, 0.714136
        %v2586 = vmul.f32 %v2476, 0.714136
        %v2587 = vmul.f32 %v2478, 0.714136
        %v2588 = vmul.f32 %v2481, 0.714136
        %v2589 = vmul.f32 %v2483, 0.714136
        %v2590 = vmul.f32 %v2486, 0.714136
        %v2591 = vmul.f32 %v2488, 0.714136
        %v2592 = vmul.f32 %v2491, 0.714136
        %v2593 = vmul.f32 %v2493, 0.714136
        %v2594 = vmul.f32 %v2496, 0.714136
        %v2595 = vmul.f32 %v2498, 0.714136
        %v2596 = vsub.f32 %v2564, %v2580
        %v2597 = vsub.f32 %v2565, %v2581
        %v2598 = vsub.f32 %v2566, %v2582
        %v2599 = vsub.f32 %v2567, %v2583
        %v2600 = vsub.f32 %v2568, %v2584
        %v2601 = vsub.f32 %v2569, %v2585
        %v2602 = vsub.f32 %v2570, %v2586
        %v2603 = vsub.f32 %v2571, %v2587
        %v2604 = vsub.f32 %v2572, %v2588
        %v2605 = vsub.f32 %v2573, %v2589
        %v2606 = vsub.f32 %v2574, %v2590
        %v2607 = vsub.f32 %v2575, %v2591
        %v2608 = vsub.f32 %v2576, %v2592
        %v2609 = vsub.f32 %v2577, %v2593
        %v2610 = vsub.f32 %v2578, %v2594
        %v2611 = vsub.f32 %v2579, %v2595
        %v2612 = vadd.f32 %v2596, 0.5019608
        %v2613 = vadd.f32 %v2597, 0.5019608
        %v2614 = vadd.f32 %v2598, 0.5019608
        %v2615 = vadd.f32 %v2599, 0.5019608
        %v2616 = vadd.f32 %v2600, 0.5019608
        %v2617 = vadd.f32 %v2601, 0.5019608
        %v2618 = vadd.f32 %v2602, 0.5019608
        %v2619 = vadd.f32 %v2603, 0.5019608
        %v2620 = vadd.f32 %v2604, 0.5019608
        %v2621 = vadd.f32 %v2605, 0.5019608
        %v2622 = vadd.f32 %v2606, 0.5019608
        %v2623 = vadd.f32 %v2607, 0.5019608
        %v2624 = vadd.f32 %v2608, 0.5019608
        %v2625 = vadd.f32 %v2609, 0.5019608
        %v2626 = vadd.f32 %v2610, 0.5019608
        %v2627 = vadd.f32 %v2611, 0.5019608
        %v2628 = vmul.f32 %v2412, 1.772
        %v2629 = vmul.f32 %v2414, 1.772
        %v2630 = vmul.f32 %v2417, 1.772
        %v2631 = vmul.f32 %v2419, 1.772
        %v2632 = vmul.f32 %v2422, 1.772
        %v2633 = vmul.f32 %v2424, 1.772
        %v2634 = vmul.f32 %v2427, 1.772
        %v2635 = vmul.f32 %v2429, 1.772
        %v2636 = vmul.f32 %v2432, 1.772
        %v2637 = vmul.f32 %v2434, 1.772
        %v2638 = vmul.f32 %v2437, 1.772
        %v2639 = vmul.f32 %v2439, 1.772
        %v2640 = vmul.f32 %v2442, 1.772
        %v2641 = vmul.f32 %v2444, 1.772
        %v2642 = vmul.f32 %v2447, 1.772
        %v2643 = vmul.f32 %v2449, 1.772
        %v2644 = vadd.f32 %v2106, %v2628
        %v2645 = vadd.f32 %v2108, %v2629
        %v2646 = vadd.f32 %v2111, %v2630
        %v2647 = vadd.f32 %v2113, %v2631
        %v2648 = vadd.f32 %v2116, %v2632
        %v2649 = vadd.f32 %v2118, %v2633
        %v2650 = vadd.f32 %v2121, %v2634
        %v2651 = vadd.f32 %v2123, %v2635
        %v2652 = vadd.f32 %v2126, %v2636
        %v2653 = vadd.f32 %v2128, %v2637
        %v2654 = vadd.f32 %v2131, %v2638
        %v2655 = vadd.f32 %v2133, %v2639
        %v2656 = vadd.f32 %v2136, %v2640
        %v2657 = vadd.f32 %v2138, %v2641
        %v2658 = vadd.f32 %v2141, %v2642
        %v2659 = vadd.f32 %v2143, %v2643
        %v2660 = vadd.f32 %v2644, 0.5019608
        %v2661 = vadd.f32 %v2645, 0.5019608
        %v2662 = vadd.f32 %v2646, 0.5019608
        %v2663 = vadd.f32 %v2647, 0.5019608
        %v2664 = vadd.f32 %v2648, 0.5019608
        %v2665 = vadd.f32 %v2649, 0.5019608
        %v2666 = vadd.f32 %v2650, 0.5019608
        %v2667 = vadd.f32 %v2651, 0.5019608
        %v2668 = vadd.f32 %v2652, 0.5019608
        %v2669 = vadd.f32 %v2653, 0.5019608
        %v2670 = vadd.f32 %v2654, 0.5019608
        %v2671 = vadd.f32 %v2655, 0.5019608
        %v2672 = vadd.f32 %v2656, 0.5019608
        %v2673 = vadd.f32 %v2657, 0.5019608
        %v2674 = vadd.f32 %v2658, 0.5019608
        %v2675 = vadd.f32 %v2659, 0.5019608
        %v2676 = vmax.f32 %v2532, 0.0
        %v2677 = vmax.f32 %v2533, 0.0
        %v2678 = vmax.f32 %v2534, 0.0
        %v2679 = vmax.f32 %v2535, 0.0
        %v2680 = vmax.f32 %v2536, 0.0
        %v2681 = vmax.f32 %v2537, 0.0
        %v2682 = vmax.f32 %v2538, 0.0
        %v2683 = vmax.f32 %v2539, 0.0
        %v2684 = vmax.f32 %v2540, 0.0
        %v2685 = vmax.f32 %v2541, 0.0
        %v2686 = vmax.f32 %v2542, 0.0
        %v2687 = vmax.f32 %v2543, 0.0
        %v2688 = vmax.f32 %v2544, 0.0
        %v2689 = vmax.f32 %v2545, 0.0
        %v2690 = vmax.f32 %v2546, 0.0
        %v2691 = vmax.f32 %v2547, 0.0
        %v2692 = vmin.f32 %v2676, 1.0
        %v2693 = vmin.f32 %v2677, 1.0
        %v2694 = vmin.f32 %v2678, 1.0
        %v2695 = vmin.f32 %v2679, 1.0
        %v2696 = vmin.f32 %v2680, 1.0
        %v2697 = vmin.f32 %v2681, 1.0
        %v2698 = vmin.f32 %v2682, 1.0
        %v2699 = vmin.f32 %v2683, 1.0
        %v2700 = vmin.f32 %v2684, 1.0
        %v2701 = vmin.f32 %v2685, 1.0
        %v2702 = vmin.f32 %v2686, 1.0
        %v2703 = vmin.f32 %v2687, 1.0
        %v2704 = vmin.f32 %v2688, 1.0
        %v2705 = vmin.f32 %v2689, 1.0
        %v2706 = vmin.f32 %v2690, 1.0
        %v2707 = vmin.f32 %v2691, 1.0
        %2708 = vst [vmem:[%s568] sm:$0xff] %v2692
        %2709 = vst [vmem:[%s568 + $0x8] sm:$0xff] %v2693
        %2710 = vst [vmem:[%s568 + $0x10] sm:$0xff] %v2694
        %2711 = vst [vmem:[%s568 + $0x18] sm:$0xff] %v2695
        %2712 = vst [vmem:[%s568 + $0x20] sm:$0xff] %v2696
        %2713 = vst [vmem:[%s568 + $0x28] sm:$0xff] %v2697
        %2714 = vst [vmem:[%s568 + $0x30] sm:$0xff] %v2698
        %2715 = vst [vmem:[%s568 + $0x38] sm:$0xff] %v2699
        %2716 = vst [vmem:[%s568 + $0x40] sm:$0xff] %v2700
        %2717 = vst [vmem:[%s568 + $0x48] sm:$0xff] %v2701
        %2718 = vst [vmem:[%s568 + $0x50] sm:$0xff] %v2702
        %2719 = vst [vmem:[%s568 + $0x58] sm:$0xff] %v2703
        %2720 = vst [vmem:[%s568 + $0x60] sm:$0xff] %v2704
        %2721 = vst [vmem:[%s568 + $0x68] sm:$0xff] %v2705
        %2722 = vst [vmem:[%s568 + $0x70] sm:$0xff] %v2706
        %2723 = vst [vmem:[%s568 + $0x78] sm:$0xff] %v2707
        %v2724 = vmax.f32 %v2612, 0.0
        %v2725 = vmax.f32 %v2613, 0.0
        %v2726 = vmax.f32 %v2614, 0.0
        %v2727 = vmax.f32 %v2615, 0.0
        %v2728 = vmax.f32 %v2616, 0.0
        %v2729 = vmax.f32 %v2617, 0.0
        %v2730 = vmax.f32 %v2618, 0.0
        %v2731 = vmax.f32 %v2619, 0.0
        %v2732 = vmax.f32 %v2620, 0.0
        %v2733 = vmax.f32 %v2621, 0.0
        %v2734 = vmax.f32 %v2622, 0.0
        %v2735 = vmax.f32 %v2623, 0.0
        %v2736 = vmax.f32 %v2624, 0.0
        %v2737 = vmax.f32 %v2625, 0.0
        %v2738 = vmax.f32 %v2626, 0.0
        %v2739 = vmax.f32 %v2627, 0.0
        %v2740 = vmin.f32 %v2724, 1.0
        %v2741 = vmin.f32 %v2725, 1.0
        %v2742 = vmin.f32 %v2726, 1.0
        %v2743 = vmin.f32 %v2727, 1.0
        %v2744 = vmin.f32 %v2728, 1.0
        %v2745 = vmin.f32 %v2729, 1.0
        %v2746 = vmin.f32 %v2730, 1.0
        %v2747 = vmin.f32 %v2731, 1.0
        %v2748 = vmin.f32 %v2732, 1.0
        %v2749 = vmin.f32 %v2733, 1.0
        %v2750 = vmin.f32 %v2734, 1.0
        %v2751 = vmin.f32 %v2735, 1.0
        %v2752 = vmin.f32 %v2736, 1.0
        %v2753 = vmin.f32 %v2737, 1.0
        %v2754 = vmin.f32 %v2738, 1.0
        %v2755 = vmin.f32 %v2739, 1.0
        %s2756 = scalar_lea.vmem %s568, 128 [#allocation17]
        %2757 = vst [vmem:[%s2756] sm:$0xff] %v2740
        %2758 = vst [vmem:[%s2756 + $0x8] sm:$0xff] %v2741
        %2759 = vst [vmem:[%s2756 + $0x10] sm:$0xff] %v2742
        %2760 = vst [vmem:[%s2756 + $0x18] sm:$0xff] %v2743
        %2761 = vst [vmem:[%s2756 + $0x20] sm:$0xff] %v2744
        %2762 = vst [vmem:[%s2756 + $0x28] sm:$0xff] %v2745
        %2763 = vst [vmem:[%s2756 + $0x30] sm:$0xff] %v2746
        %2764 = vst [vmem:[%s2756 + $0x38] sm:$0xff] %v2747
        %2765 = vst [vmem:[%s2756 + $0x40] sm:$0xff] %v2748
        %2766 = vst [vmem:[%s2756 + $0x48] sm:$0xff] %v2749
        %2767 = vst [vmem:[%s2756 + $0x50] sm:$0xff] %v2750
        %2768 = vst [vmem:[%s2756 + $0x58] sm:$0xff] %v2751
        %2769 = vst [vmem:[%s2756 + $0x60] sm:$0xff] %v2752
        %2770 = vst [vmem:[%s2756 + $0x68] sm:$0xff] %v2753
        %2771 = vst [vmem:[%s2756 + $0x70] sm:$0xff] %v2754
        %2772 = vst [vmem:[%s2756 + $0x78] sm:$0xff] %v2755
        %v2773 = vmax.f32 %v2660, 0.0
        %v2774 = vmax.f32 %v2661, 0.0
        %v2775 = vmax.f32 %v2662, 0.0
        %v2776 = vmax.f32 %v2663, 0.0
        %v2777 = vmax.f32 %v2664, 0.0
        %v2778 = vmax.f32 %v2665, 0.0
        %v2779 = vmax.f32 %v2666, 0.0
        %v2780 = vmax.f32 %v2667, 0.0
        %v2781 = vmax.f32 %v2668, 0.0
        %v2782 = vmax.f32 %v2669, 0.0
        %v2783 = vmax.f32 %v2670, 0.0
        %v2784 = vmax.f32 %v2671, 0.0
        %v2785 = vmax.f32 %v2672, 0.0
        %v2786 = vmax.f32 %v2673, 0.0
        %v2787 = vmax.f32 %v2674, 0.0
        %v2788 = vmax.f32 %v2675, 0.0
        %v2789 = vmin.f32 %v2773, 1.0
        %v2790 = vmin.f32 %v2774, 1.0
        %v2791 = vmin.f32 %v2775, 1.0
        %v2792 = vmin.f32 %v2776, 1.0
        %v2793 = vmin.f32 %v2777, 1.0
        %v2794 = vmin.f32 %v2778, 1.0
        %v2795 = vmin.f32 %v2779, 1.0
        %v2796 = vmin.f32 %v2780, 1.0
        %v2797 = vmin.f32 %v2781, 1.0
        %v2798 = vmin.f32 %v2782, 1.0
        %v2799 = vmin.f32 %v2783, 1.0
        %v2800 = vmin.f32 %v2784, 1.0
        %v2801 = vmin.f32 %v2785, 1.0
        %v2802 = vmin.f32 %v2786, 1.0
        %v2803 = vmin.f32 %v2787, 1.0
        %v2804 = vmin.f32 %v2788, 1.0
        %s2805 = scalar_lea.vmem %s568, 256 [#allocation17]
        %2806 = vst [vmem:[%s2805] sm:$0xff] %v2789
        %2807 = vst [vmem:[%s2805 + $0x8] sm:$0xff] %v2790
        %2808 = vst [vmem:[%s2805 + $0x10] sm:$0xff] %v2791
        %2809 = vst [vmem:[%s2805 + $0x18] sm:$0xff] %v2792
        %2810 = vst [vmem:[%s2805 + $0x20] sm:$0xff] %v2793
        %2811 = vst [vmem:[%s2805 + $0x28] sm:$0xff] %v2794
        %2812 = vst [vmem:[%s2805 + $0x30] sm:$0xff] %v2795
        %2813 = vst [vmem:[%s2805 + $0x38] sm:$0xff] %v2796
        %2814 = vst [vmem:[%s2805 + $0x40] sm:$0xff] %v2797
        %2815 = vst [vmem:[%s2805 + $0x48] sm:$0xff] %v2798
        %2816 = vst [vmem:[%s2805 + $0x50] sm:$0xff] %v2799
        %2817 = vst [vmem:[%s2805 + $0x58] sm:$0xff] %v2800
        %2818 = vst [vmem:[%s2805 + $0x60] sm:$0xff] %v2801
        %2819 = vst [vmem:[%s2805 + $0x68] sm:$0xff] %v2802
        %2820 = vst [vmem:[%s2805 + $0x70] sm:$0xff] %v2803
        %2821 = vst [vmem:[%s2805 + $0x78] sm:$0xff] %v2804
        %s2822 = sand.u32 %s303, 1
        %s2823 = scalar_lea.sflag [#allocation4], %s2822
        %s2824 = sand.u32 %s303, 1
        %s2825 = smul.addr %s2824, 384
        %s2826 = scalar_lea.vmem [#allocation17], %s2825
        // Predicated region
        $region101: #{tpu_custom_call.1} parent=63 // pred_check
          %p2827 = pneg %p313
        $region102: #{tpu_custom_call.1} parent=63 // pred_check_branch
          %2829 = sbr.rel (%p2827) target = $region104
        $region103: #{tpu_custom_call.1} parent=63 // pred_region
          %s2830 = smul.u32 16, %s38
          %2832 = vsyncadd %s2823, 0
          %s2833 = sadd.s32 %s39, %s2830
          %s2834 = smul.addr %s37, 48
          %s2835 = sadd.s32 %s2833, %s2834
          %s2836 = smul.addr %s2835, 8
          %s2837 = scalar_lea.hbm %s11, %s2836
          %s2838 = sshll.u32 %s2826, 4
          %s2839 = int_to_ptr.vmem [resolvable:$true] %s2838
          %s2840 = sshll.u32 %s2837, 4
          %s2841 = int_to_ptr.hbm [resolvable:$true] %s2840
          %2846 = dma.vmem_to_hbm [thread:$0]  %s2839, 6144, %s2841, %s2823, 128, 128, 8
        $region104: #{tpu_custom_call.1} parent=63 // pred_fallthru
          _
      $region64: #{tpu_custom_call.1} parent=5 // pred_fallthru
        _
      %p2847 = scmp.le.s32.totalorder 2, %s27
      // Predicated region
      $region105: #{tpu_custom_call.1} parent=5 // pred_check
        %p2848 = pneg %p2847
      $region106: #{tpu_custom_call.1} parent=5 // pred_check_branch
        %2850 = sbr.rel (%p2848) target = $region108
      $region107: #{tpu_custom_call.1} parent=5 // pred_region
        %s2851 = ssub.s32 %s27, 2
        // Predicated region
        $region109: #{tpu_custom_call.1} parent=107 // pred_check
          %p2852 = pneg %p319
        $region110: #{tpu_custom_call.1} parent=107 // pred_check_branch
          %2854 = sbr.rel (%p2852) target = $region112
        $region111: #{tpu_custom_call.1} parent=107 // pred_region
          %s2855 = sand.u32 %s304, 1
          %s2856 = scalar_lea.sflag [#allocation4], %s2855
          %s2857 = sand.u32 %s304, 1
          %s2858 = smul.addr %s2857, 384
          %s2859 = scalar_lea.vmem [#allocation17], %s2858
          %2861 = dma.done %s2856, 6144
        $region112: #{tpu_custom_call.1} parent=107 // pred_fallthru
          _
      $region108: #{tpu_custom_call.1} parent=5 // pred_fallthru
        _
    $region6: #{tpu_custom_call.1} parent=1 // loop_footer
      %s31 = sadd.s32 1, %s27
    $region7: #{tpu_custom_call.1} parent=1 // loop_footer_branch
      %26 = sbr.rel target = $region3
    $region8: #{tpu_custom_call.1} parent=1 // loop_exit
      _
    %2862 = vsyncpa [#allocation3], 1
    %s2863 = scalar_lea.sflag [#allocation3], 1
    %2864 = vsyncpa %s2863, 1
    %2865 = vsyncpa [#allocation6], 1
    %2866 = vsyncpa [#allocation9], 1
    %2867 = vsyncpa [#allocation12], 1
    %2868 = vsyncpa [#allocation15], 1
    %2869 = vsyncpa [#allocation4], 1
    %s2870 = scalar_lea.sflag [#allocation4], 1
    %2871 = vsyncpa %s2870, 1

// kernel: tpu_custom_call.1
$region0: #{tpu_custom_call.1}
  #allocation0 [shape = 'u32[]', space=smem, size = 0x4, offset = 0x4, fixed_abs, tag = 'smem constant byte address 0x4 - core index']
  #allocation1 [shape = 'u32[72,128]{1,0:T(1,128)}', space=vmem, size = 0x9000, scoped, tag = 'internal scratch']
  %s0 = inlined_call_operand.hbm [shape: f32[2,3,128,128], index: 0, kind: input, shape index: {}]
  %s1 = inlined_call_operand.hbm [shape: f32[192,192], index: 1, kind: input, shape index: {}]
  %s2 = inlined_call_operand.hbm [shape: f32[128,128], index: 2, kind: input, shape index: {}]
  %s3 = inlined_call_operand.hbm [shape: bf16[192,192], index: 3, kind: input, shape index: {}]
  %s4 = inlined_call_operand.vmem [shape: bf16[128,128], index: 4, kind: input, shape index: {}]
  %s5 = inlined_call_operand.hbm [shape: f32[192,128], index: 5, kind: input, shape index: {}]
  %s6 = inlined_call_operand.hbm [shape: f32[192,128], index: 6, kind: input, shape index: {}]
  %s7 = inlined_call_operand.hbm [shape: f32[64,128], index: 7, kind: input, shape index: {}]
  %s8 = inlined_call_operand.hbm [shape: f32[256,128], index: 8, kind: input, shape index: {}]
  %s9 = inlined_call_operand.vmem [shape: bf16[128,64], index: 9, kind: input, shape index: {}]
  %s10 = inlined_call_operand.hbm [shape: bf16[128,256], index: 10, kind: input, shape index: {}]
  %s11 = inlined_call_operand.hbm [shape: f32[2,3,128,128], index: 11, kind: output, shape index: {}]
  %s12 = sld [smem:[#allocation0]]
  $region113: #{tpu_custom_call.1} parent=0
    _
  %s14 = ssub.s32 1, %s12
  %s15 = scalar_select 0, %s14, %s12
  $region1: #{tpu_custom_call.1} parent=0
    #allocation2 [shape = 'u8[393216]{0}', space=vmem, size = 0x60000, scoped, tag = 'input window, operand 0']
    #allocation3 [shape = 's32[2]{0}', space=sflag, size = 0x8, scoped, tag = 'scoped memory for tpu_custom_call.1']
    #allocation4 [shape = 's32[2]{0}', space=sflag, size = 0x8, scoped, tag = 'scoped memory for tpu_custom_call.1']
    #allocation5 [shape = 'u8[196608]{0}', space=vmem, size = 0x30000, scoped, tag = 'input window, operand 1, single buffered']
    #allocation6 [shape = 's32[1]{0}', space=sflag, size = 0x4, scoped, tag = 'scoped memory for tpu_custom_call.1']
    #allocation7 [shape = 'u8[65536]{0}', space=vmem, size = 0x10000, scoped, tag = 'input window, operand 2, single buffered']
    #allocation8 [shape = 'u8[98304]{0}', space=vmem, size = 0x18000, scoped, tag = 'input window, operand 3, single buffered']
    #allocation9 [shape = 's32[1]{0}', space=sflag, size = 0x4, scoped, tag = 'scoped memory for tpu_custom_call.1']
    #allocation10 [shape = 'u8[98304]{0}', space=vmem, size = 0x18000, scoped, tag = 'input window, operand 5, single buffered']
    #allocation11 [shape = 'u8[98304]{0}', space=vmem, size = 0x18000, scoped, tag = 'input window, operand 6, single buffered']
    #allocation12 [shape = 's32[1]{0}', space=sflag, size = 0x4, scoped, tag = 'scoped memory for tpu_custom_call.1']
    #allocation13 [shape = 'u8[32768]{0}', space=vmem, size = 0x8000, scoped, tag = 'input window, operand 7, single buffered']
    #allocation14 [shape = 'u8[131072]{0}', space=vmem, size = 0x20000, scoped, tag = 'input window, operand 8, single buffered']
    #allocation15 [shape = 's32[1]{0}', space=sflag, size = 0x4, scoped, tag = 'scoped memory for tpu_custom_call.1']
    #allocation16 [shape = 'u8[65536]{0}', space=vmem, size = 0x10000, scoped, tag = 'input window, operand 10, single buffered']
    #allocation17 [shape = 'u8[393216]{0}', space=vmem, size = 0x60000, scoped, tag = 'output window, operand 0']
    %16 = vsyncpa [#allocation3], 0
    %s17 = scalar_lea.sflag [#allocation3], 1
    %18 = vsyncpa %s17, 0
    %19 = vsyncpa [#allocation6], 0
    %20 = vsyncpa [#allocation9], 0
    %21 = vsyncpa [#allocation12], 0
    %22 = vsyncpa [#allocation15], 0
    %23 = vsyncpa [#allocation4], 0
    %s24 = scalar_lea.sflag [#allocation4], 1
    %25 = vsyncpa %s24, 0
    loop: start=0, step=1, limit=4
    $region2: #{tpu_custom_call.1} parent=1 // loop_pre_header
      _
    $region3: #{tpu_custom_call.1} parent=1 // loop_header
      %s27 = sphi 0, %s31
      %p28 = scmp.ge.s32.totalorder %s27, 4
      %s34 = sphi 0, %s53
      %s35 = sphi 0, %s49
      %s36 = sphi 0, %s45
      %s37 = sphi 0, %s34
      %s38 = sphi 0, %s35
      %s39 = sphi 0, %s36
      %s40 = sphi 0, %s37
      %s41 = sphi 0, %s38
      %s42 = sphi 0, %s39
      %s60 = sphi 0, %s62
      %s63 = sphi 0, %s60
      %s64 = sphi 0, %s63
      %s80 = sphi 0, %s64
      %s84 = sphi 0, %s84
      %s86 = sphi 0, %s84
      %s87 = sphi 0, %s86
      %s101 = sphi 0, %s87
      %s105 = sphi 0, %s105
      %s107 = sphi 0, %s105
      %s108 = sphi 0, %s107
      %s122 = sphi 0, %s108
      %s126 = sphi 0, %s126
      %s128 = sphi 0, %s126
      %s129 = sphi 0, %s128
      %s143 = sphi 0, %s129
      %s147 = sphi 0, %s147
      %s149 = sphi 0, %s147
      %s150 = sphi 0, %s149
      %s164 = sphi 0, %s150
      %s168 = sphi 0, %s168
      %s170 = sphi 0, %s168
      %s171 = sphi 0, %s170
      %s185 = sphi 0, %s171
      %s189 = sphi 0, %s189
      %s191 = sphi 0, %s189
      %s192 = sphi 0, %s191
      %s206 = sphi 0, %s192
      %s210 = sphi 0, %s210
      %s212 = sphi 0, %s210
      %s213 = sphi 0, %s212
      %s227 = sphi 0, %s213
      %s231 = sphi 0, %s231
      %s233 = sphi 0, %s231
      %s234 = sphi 0, %s233
      %s248 = sphi 0, %s234
      %s252 = sphi 0, %s252
      %s254 = sphi 0, %s252
      %s255 = sphi 0, %s254
      %s269 = sphi 0, %s255
      %s273 = sphi 0, %s273
      %s275 = sphi 0, %s273
      %s276 = sphi 0, %s275
      %s290 = sphi 0, %s276
      %s300 = sphi 0, %s302
      %s303 = sphi 0, %s300
      %s304 = sphi 0, %s303
      %s320 = sphi 0, %s304
    $region4: #{tpu_custom_call.1} parent=1 // loop_header_branch
      %30 = sbr.rel (%p28) target = $region8
    $region5: #{tpu_custom_call.1} parent=1 // loop_body
      %s32 = ssub.s32 %s27, 1
      %s33 = ssub.s32 %s27, 2
      %s43 = sadd.s32 1, %s36
      %p44 = scmp.ge.s32.totalorder %s43, 1
      %s45 = scalar_select %p44, 0, %s43
      %s46 = sadd.s32 1, %s35
      %s47 = scalar_select %p44, %s46, %s35
      %p48 = scmp.ge.s32.totalorder %s47, 1
      %s49 = scalar_select %p48, 0, %s47
      %s50 = sadd.s32 1, %s34
      %s51 = scalar_select %p48, %s50, %s34
      %p52 = scmp.ge.s32.totalorder %s51, 2
      %s53 = scalar_select %p52, 0, %s51
      %s54 = ssub.s32 %s34, %s53
      %s55 = ssub.s32 %s35, %s49
      %s56 = sor.u32 %s54, %s55
      %s57 = ssub.s32 %s36, %s45
      %s58 = sor.u32 %s56, %s57
      %p59 = scmp.eq.s32.totalorder %s58, 0
      %s61 = sadd.s32 %s60, 1
      %s62 = scalar_select %p59, %s60, %s61
      %p65 = pneg %p59
      %p66 = scmp.eq.s32.totalorder %s27, 1
      %p67 = por %p65, %p66
      %p68 = scmp.ne.s32.totalorder %s60, %s63
      %p69 = scmp.eq.s32.totalorder %s27, 0
      %p70 = por %p68, %p69
      %p71 = scmp.ne.s32.totalorder %s60, %s63
      %p72 = scmp.eq.s32.totalorder %s32, 1
      %p73 = por %p71, %p72
      %p74 = scmp.ne.s32.totalorder %s63, %s64
      %p75 = scmp.eq.s32.totalorder %s32, 0
      %p76 = por %p74, %p75
      %p77 = scmp.ne.s32.totalorder %s63, %s64
      %p78 = scmp.eq.s32.totalorder %s33, 1
      %p79 = por %p77, %p78
      %p81 = scmp.ne.s32.totalorder %s64, %s80
      %p82 = scmp.eq.s32.totalorder %s33, 0
      %p83 = por %p81, %p82
      %s85 = sadd.s32 %s84, 1
      %p88 = scmp.eq.s32.totalorder %s27, 1
      %p89 = scmp.ne.s32.totalorder %s84, %s86
      %p90 = scmp.eq.s32.totalorder %s27, 0
      %p91 = por %p89, %p90
      %p92 = scmp.ne.s32.totalorder %s84, %s86
      %p93 = scmp.eq.s32.totalorder %s32, 1
      %p94 = por %p92, %p93
      %p95 = scmp.ne.s32.totalorder %s86, %s87
      %p96 = scmp.eq.s32.totalorder %s32, 0
      %p97 = por %p95, %p96
      %p98 = scmp.ne.s32.totalorder %s86, %s87
      %p99 = scmp.eq.s32.totalorder %s33, 1
      %p100 = por %p98, %p99
      %p102 = scmp.ne.s32.totalorder %s87, %s101
      %p103 = scmp.eq.s32.totalorder %s33, 0
      %p104 = por %p102, %p103
      %s106 = sadd.s32 %s105, 1
      %p109 = scmp.eq.s32.totalorder %s27, 1
      %p110 = scmp.ne.s32.totalorder %s105, %s107
      %p111 = scmp.eq.s32.totalorder %s27, 0
      %p112 = por %p110, %p111
      %p113 = scmp.ne.s32.totalorder %s105, %s107
      %p114 = scmp.eq.s32.totalorder %s32, 1
      %p115 = por %p113, %p114
      %p116 = scmp.ne.s32.totalorder %s107, %s108
      %p117 = scmp.eq.s32.totalorder %s32, 0
      %p118 = por %p116, %p117
      %p119 = scmp.ne.s32.totalorder %s107, %s108
      %p120 = scmp.eq.s32.totalorder %s33, 1
      %p121 = por %p119, %p120
      %p123 = scmp.ne.s32.totalorder %s108, %s122
      %p124 = scmp.eq.s32.totalorder %s33, 0
      %p125 = por %p123, %p124
      %s127 = sadd.s32 %s126, 1
      %p130 = scmp.eq.s32.totalorder %s27, 1
      %p131 = scmp.ne.s32.totalorder %s126, %s128
      %p132 = scmp.eq.s32.totalorder %s27, 0
      %p133 = por %p131, %p132
      %p134 = scmp.ne.s32.totalorder %s126, %s128
      %p135 = scmp.eq.s32.totalorder %s32, 1
      %p136 = por %p134, %p135
      %p137 = scmp.ne.s32.totalorder %s128, %s129
      %p138 = scmp.eq.s32.totalorder %s32, 0
      %p139 = por %p137, %p138
      %p140 = scmp.ne.s32.totalorder %s128, %s129
      %p141 = scmp.eq.s32.totalorder %s33, 1
      %p142 = por %p140, %p141
      %p144 = scmp.ne.s32.totalorder %s129, %s143
      %p145 = scmp.eq.s32.totalorder %s33, 0
      %p146 = por %p144, %p145
      %s148 = sadd.s32 %s147, 1
      %p151 = scmp.eq.s32.totalorder %s27, 1
      %p152 = scmp.ne.s32.totalorder %s147, %s149
      %p153 = scmp.eq.s32.totalorder %s27, 0
      %p154 = por %p152, %p153
      %p155 = scmp.ne.s32.totalorder %s147, %s149
      %p156 = scmp.eq.s32.totalorder %s32, 1
      %p157 = por %p155, %p156
      %p158 = scmp.ne.s32.totalorder %s149, %s150
      %p159 = scmp.eq.s32.totalorder %s32, 0
      %p160 = por %p158, %p159
      %p161 = scmp.ne.s32.totalorder %s149, %s150
      %p162 = scmp.eq.s32.totalorder %s33, 1
      %p163 = por %p161, %p162
      %p165 = scmp.ne.s32.totalorder %s150, %s164
      %p166 = scmp.eq.s32.totalorder %s33, 0
      %p167 = por %p165, %p166
      %s169 = sadd.s32 %s168, 1
      %p172 = scmp.eq.s32.totalorder %s27, 1
      %p173 = scmp.ne.s32.totalorder %s168, %s170
      %p174 = scmp.eq.s32.totalorder %s27, 0
      %p175 = por %p173, %p174
      %p176 = scmp.ne.s32.totalorder %s168, %s170
      %p177 = scmp.eq.s32.totalorder %s32, 1
      %p178 = por %p176, %p177
      %p179 = scmp.ne.s32.totalorder %s170, %s171
      %p180 = scmp.eq.s32.totalorder %s32, 0
      %p181 = por %p179, %p180
      %p182 = scmp.ne.s32.totalorder %s170, %s171
      %p183 = scmp.eq.s32.totalorder %s33, 1
      %p184 = por %p182, %p183
      %p186 = scmp.ne.s32.totalorder %s171, %s185
      %p187 = scmp.eq.s32.totalorder %s33, 0
      %p188 = por %p186, %p187
      %s190 = sadd.s32 %s189, 1
      %p193 = scmp.eq.s32.totalorder %s27, 1
      %p194 = scmp.ne.s32.totalorder %s189, %s191
      %p195 = scmp.eq.s32.totalorder %s27, 0
      %p196 = por %p194, %p195
      %p197 = scmp.ne.s32.totalorder %s189, %s191
      %p198 = scmp.eq.s32.totalorder %s32, 1
      %p199 = por %p197, %p198
      %p200 = scmp.ne.s32.totalorder %s191, %s192
      %p201 = scmp.eq.s32.totalorder %s32, 0
      %p202 = por %p200, %p201
      %p203 = scmp.ne.s32.totalorder %s191, %s192
      %p204 = scmp.eq.s32.totalorder %s33, 1
      %p205 = por %p203, %p204
      %p207 = scmp.ne.s32.totalorder %s192, %s206
      %p208 = scmp.eq.s32.totalorder %s33, 0
      %p209 = por %p207, %p208
      %s211 = sadd.s32 %s210, 1
      %p214 = scmp.eq.s32.totalorder %s27, 1
      %p215 = scmp.ne.s32.totalorder %s210, %s212
      %p216 = scmp.eq.s32.totalorder %s27, 0
      %p217 = por %p215, %p216
      %p218 = scmp.ne.s32.totalorder %s210, %s212
      %p219 = scmp.eq.s32.totalorder %s32, 1
      %p220 = por %p218, %p219
      %p221 = scmp.ne.s32.totalorder %s212, %s213
      %p222 = scmp.eq.s32.totalorder %s32, 0
      %p223 = por %p221, %p222
      %p224 = scmp.ne.s32.totalorder %s212, %s213
      %p225 = scmp.eq.s32.totalorder %s33, 1
      %p226 = por %p224, %p225
      %p228 = scmp.ne.s32.totalorder %s213, %s227
      %p229 = scmp.eq.s32.totalorder %s33, 0
      %p230 = por %p228, %p229
      %s232 = sadd.s32 %s231, 1
      %p235 = scmp.eq.s32.totalorder %s27, 1
      %p236 = scmp.ne.s32.totalorder %s231, %s233
      %p237 = scmp.eq.s32.totalorder %s27, 0
      %p238 = por %p236, %p237
      %p239 = scmp.ne.s32.totalorder %s231, %s233
      %p240 = scmp.eq.s32.totalorder %s32, 1
      %p241 = por %p239, %p240
      %p242 = scmp.ne.s32.totalorder %s233, %s234
      %p243 = scmp.eq.s32.totalorder %s32, 0
      %p244 = por %p242, %p243
      %p245 = scmp.ne.s32.totalorder %s233, %s234
      %p246 = scmp.eq.s32.totalorder %s33, 1
      %p247 = por %p245, %p246
      %p249 = scmp.ne.s32.totalorder %s234, %s248
      %p250 = scmp.eq.s32.totalorder %s33, 0
      %p251 = por %p249, %p250
      %s253 = sadd.s32 %s252, 1
      %p256 = scmp.eq.s32.totalorder %s27, 1
      %p257 = scmp.ne.s32.totalorder %s252, %s254
      %p258 = scmp.eq.s32.totalorder %s27, 0
      %p259 = por %p257, %p258
      %p260 = scmp.ne.s32.totalorder %s252, %s254
      %p261 = scmp.eq.s32.totalorder %s32, 1
      %p262 = por %p260, %p261
      %p263 = scmp.ne.s32.totalorder %s254, %s255
      %p264 = scmp.eq.s32.totalorder %s32, 0
      %p265 = por %p263, %p264
      %p266 = scmp.ne.s32.totalorder %s254, %s255
      %p267 = scmp.eq.s32.totalorder %s33, 1
      %p268 = por %p266, %p267
      %p270 = scmp.ne.s32.totalorder %s255, %s269
      %p271 = scmp.eq.s32.totalorder %s33, 0
      %p272 = por %p270, %p271
      %s274 = sadd.s32 %s273, 1
      %p277 = scmp.eq.s32.totalorder %s27, 1
      %p278 = scmp.ne.s32.totalorder %s273, %s275
      %p279 = scmp.eq.s32.totalorder %s27, 0
      %p280 = por %p278, %p279
      %p281 = scmp.ne.s32.totalorder %s273, %s275
      %p282 = scmp.eq.s32.totalorder %s32, 1
      %p283 = por %p281, %p282
      %p284 = scmp.ne.s32.totalorder %s275, %s276
      %p285 = scmp.eq.s32.totalorder %s32, 0
      %p286 = por %p284, %p285
      %p287 = scmp.ne.s32.totalorder %s275, %s276
      %p288 = scmp.eq.s32.totalorder %s33, 1
      %p289 = por %p287, %p288
      %p291 = scmp.ne.s32.totalorder %s276, %s290
      %p292 = scmp.eq.s32.totalorder %s33, 0
      %p293 = por %p291, %p292
      %s294 = ssub.s32 %s34, %s53
      %s295 = ssub.s32 %s35, %s49
      %s296 = sor.u32 %s294, %s295
      %s297 = ssub.s32 %s36, %s45
      %s298 = sor.u32 %s296, %s297
      %p299 = scmp.eq.s32.totalorder %s298, 0
      %s301 = sadd.s32 %s300, 1
      %s302 = scalar_select %p299, %s300, %s301
      %p305 = pneg %p299
      %p306 = scmp.eq.s32.totalorder %s27, 1
      %p307 = por %p305, %p306
      %p308 = scmp.ne.s32.totalorder %s300, %s303
      %p309 = scmp.eq.s32.totalorder %s27, 0
      %p310 = por %p308, %p309
      %p311 = scmp.ne.s32.totalorder %s300, %s303
      %p312 = scmp.eq.s32.totalorder %s32, 1
      %p313 = por %p311, %p312
      %p314 = scmp.ne.s32.totalorder %s303, %s304
      %p315 = scmp.eq.s32.totalorder %s32, 0
      %p316 = por %p314, %p315
      %p317 = scmp.ne.s32.totalorder %s303, %s304
      %p318 = scmp.eq.s32.totalorder %s33, 1
      %p319 = por %p317, %p318
      %p321 = scmp.ne.s32.totalorder %s304, %s320
      %p322 = scmp.eq.s32.totalorder %s33, 0
      %p323 = por %p321, %p322
      %p324 = scmp.le.s32.totalorder 1, %s27
      %p325 = scmp.lt.s32.totalorder %s27, 3
      %p326 = pnand %p324, %p325
      %p327 = pneg %p326
      // Predicated region
      $region9: #{tpu_custom_call.1} parent=5 // pred_check
        _
      $region10: #{tpu_custom_call.1} parent=5 // pred_check_branch
        %329 = sbr.rel (%p326) target = $region12
      $region11: #{tpu_custom_call.1} parent=5 // pred_region
        %s330 = ssub.s32 %s27, 1
        // Predicated region
        $region13: #{tpu_custom_call.1} parent=11 // pred_check
          %p331 = pneg %p97
        $region14: #{tpu_custom_call.1} parent=11 // pred_check_branch
          %333 = sbr.rel (%p331) target = $region16
        $region15: #{tpu_custom_call.1} parent=11 // pred_region
          %335 = vsyncadd [#allocation6], 0
          %s336 = sshll.u32 %s1, 4
          %s337 = int_to_ptr.hbm [resolvable:$true] %s336
          %s338 = sshll.u32 [#allocation5], 4
          %s339 = int_to_ptr.vmem [resolvable:$true] %s338
          %344 = dma.hbm_to_vmem [thread:$0]  %s337, 6144, %s339, [#allocation6], 256, 256, 16
        $region16: #{tpu_custom_call.1} parent=11 // pred_fallthru
          _
        // Predicated region
        $region17: #{tpu_custom_call.1} parent=11 // pred_check
          %p345 = pneg %p118
        $region18: #{tpu_custom_call.1} parent=11 // pred_check_branch
          %347 = sbr.rel (%p345) target = $region20
        $region19: #{tpu_custom_call.1} parent=11 // pred_region
          %349 = vsyncadd [#allocation6], 0
          %s350 = sshll.u32 %s2, 4
          %s351 = int_to_ptr.hbm [resolvable:$true] %s350
          %s352 = sshll.u32 [#allocation7], 4
          %s353 = int_to_ptr.vmem [resolvable:$true] %s352
          %358 = dma.hbm_to_vmem [thread:$0]  %s351, 2048, %s353, [#allocation6], 128, 128, 8
        $region20: #{tpu_custom_call.1} parent=11 // pred_fallthru
          _
        // Predicated region
        $region21: #{tpu_custom_call.1} parent=11 // pred_check
          %p359 = pneg %p139
        $region22: #{tpu_custom_call.1} parent=11 // pred_check_branch
          %361 = sbr.rel (%p359) target = $region24
        $region23: #{tpu_custom_call.1} parent=11 // pred_region
          %363 = vsyncadd [#allocation9], 0
          %s364 = sshll.u32 %s3, 4
          %s365 = int_to_ptr.hbm [resolvable:$true] %s364
          %s366 = sshll.u32 [#allocation8], 4
          %s367 = int_to_ptr.vmem [resolvable:$true] %s366
          %372 = dma.hbm_to_vmem [thread:$0]  %s365, 3072, %s367, [#allocation9], 128, 128, 8
        $region24: #{tpu_custom_call.1} parent=11 // pred_fallthru
          _
        // Predicated region
        $region25: #{tpu_custom_call.1} parent=11 // pred_check
          %p373 = pneg %p160
        $region26: #{tpu_custom_call.1} parent=11 // pred_check_branch
          %375 = sbr.rel (%p373) target = $region28
        $region27: #{tpu_custom_call.1} parent=11 // pred_region
          _
        $region28: #{tpu_custom_call.1} parent=11 // pred_fallthru
          _
        // Predicated region
        $region29: #{tpu_custom_call.1} parent=11 // pred_check
          %p376 = pneg %p181
        $region30: #{tpu_custom_call.1} parent=11 // pred_check_branch
          %378 = sbr.rel (%p376) target = $region32
        $region31: #{tpu_custom_call.1} parent=11 // pred_region
          %380 = vsyncadd [#allocation9], 0
          %s381 = sshll.u32 %s5, 4
          %s382 = int_to_ptr.hbm [resolvable:$true] %s381
          %s383 = sshll.u32 [#allocation10], 4
          %s384 = int_to_ptr.vmem [resolvable:$true] %s383
          %389 = dma.hbm_to_vmem [thread:$0]  %s382, 3072, %s384, [#allocation9], 128, 128, 8
        $region32: #{tpu_custom_call.1} parent=11 // pred_fallthru
          _
        // Predicated region
        $region33: #{tpu_custom_call.1} parent=11 // pred_check
          %p390 = pneg %p202
        $region34: #{tpu_custom_call.1} parent=11 // pred_check_branch
          %392 = sbr.rel (%p390) target = $region36
        $region35: #{tpu_custom_call.1} parent=11 // pred_region
          %394 = vsyncadd [#allocation12], 0
          %s395 = sshll.u32 %s6, 4
          %s396 = int_to_ptr.hbm [resolvable:$true] %s395
          %s397 = sshll.u32 [#allocation11], 4
          %s398 = int_to_ptr.vmem [resolvable:$true] %s397
          %403 = dma.hbm_to_vmem [thread:$0]  %s396, 3072, %s398, [#allocation12], 128, 128, 8
        $region36: #{tpu_custom_call.1} parent=11 // pred_fallthru
          _
        // Predicated region
        $region37: #{tpu_custom_call.1} parent=11 // pred_check
          %p404 = pneg %p223
        $region38: #{tpu_custom_call.1} parent=11 // pred_check_branch
          %406 = sbr.rel (%p404) target = $region40
        $region39: #{tpu_custom_call.1} parent=11 // pred_region
          %408 = vsyncadd [#allocation12], 0
          %s409 = sshll.u32 %s7, 4
          %s410 = int_to_ptr.hbm [resolvable:$true] %s409
          %s411 = sshll.u32 [#allocation13], 4
          %s412 = int_to_ptr.vmem [resolvable:$true] %s411
          %417 = dma.hbm_to_vmem [thread:$0]  %s410, 1024, %s412, [#allocation12], 128, 128, 8
        $region40: #{tpu_custom_call.1} parent=11 // pred_fallthru
          _
        // Predicated region
        $region41: #{tpu_custom_call.1} parent=11 // pred_check
          %p418 = pneg %p244
        $region42: #{tpu_custom_call.1} parent=11 // pred_check_branch
          %420 = sbr.rel (%p418) target = $region44
        $region43: #{tpu_custom_call.1} parent=11 // pred_region
          %422 = vsyncadd [#allocation15], 0
          %s423 = sshll.u32 %s8, 4
          %s424 = int_to_ptr.hbm [resolvable:$true] %s423
          %s425 = sshll.u32 [#allocation14], 4
          %s426 = int_to_ptr.vmem [resolvable:$true] %s425
          %431 = dma.hbm_to_vmem [thread:$0]  %s424, 4096, %s426, [#allocation15], 128, 128, 8
        $region44: #{tpu_custom_call.1} parent=11 // pred_fallthru
          _
        // Predicated region
        $region45: #{tpu_custom_call.1} parent=11 // pred_check
          %p432 = pneg %p265
        $region46: #{tpu_custom_call.1} parent=11 // pred_check_branch
          %434 = sbr.rel (%p432) target = $region48
        $region47: #{tpu_custom_call.1} parent=11 // pred_region
          _
        $region48: #{tpu_custom_call.1} parent=11 // pred_fallthru
          _
        // Predicated region
        $region49: #{tpu_custom_call.1} parent=11 // pred_check
          %p435 = pneg %p286
        $region50: #{tpu_custom_call.1} parent=11 // pred_check_branch
          %437 = sbr.rel (%p435) target = $region52
        $region51: #{tpu_custom_call.1} parent=11 // pred_region
          %439 = vsyncadd [#allocation15], 0
          %s440 = sshll.u32 %s10, 4
          %s441 = int_to_ptr.hbm [resolvable:$true] %s440
          %s442 = sshll.u32 [#allocation16], 4
          %s443 = int_to_ptr.vmem [resolvable:$true] %s442
          %448 = dma.hbm_to_vmem [thread:$0]  %s441, 2048, %s443, [#allocation15], 128, 128, 8
        $region52: #{tpu_custom_call.1} parent=11 // pred_fallthru
          _
      $region12: #{tpu_custom_call.1} parent=5 // pred_fallthru
        _
      %p449 = scmp.lt.s32.totalorder %s27, 2
      // Predicated region
      $region53: #{tpu_custom_call.1} parent=5 // pred_check
        %p450 = pneg %p449
      $region54: #{tpu_custom_call.1} parent=5 // pred_check_branch
        %452 = sbr.rel (%p450) target = $region56
      $region55: #{tpu_custom_call.1} parent=5 // pred_region
        // Predicated region
        $region57: #{tpu_custom_call.1} parent=55 // pred_check
          %p453 = pneg %p70
        $region58: #{tpu_custom_call.1} parent=55 // pred_check_branch
          %455 = sbr.rel (%p453) target = $region60
        $region59: #{tpu_custom_call.1} parent=55 // pred_region
          %s456 = sand.u32 %s60, 1
          %s457 = scalar_lea.sflag [#allocation3], %s456
          %s458 = sand.u32 %s60, 1
          %s459 = smul.addr %s458, 384
          %s460 = scalar_lea.vmem [#allocation2], %s459
          %s461 = smul.u32 16, %s35
          %463 = vsyncadd %s457, 0
          %s464 = sadd.s32 %s36, %s461
          %s465 = smul.addr %s34, 48
          %s466 = sadd.s32 %s464, %s465
          %s467 = smul.addr %s466, 8
          %s468 = scalar_lea.hbm %s0, %s467
          %s469 = sshll.u32 %s468, 4
          %s470 = int_to_ptr.hbm [resolvable:$true] %s469
          %s471 = sshll.u32 %s460, 4
          %s472 = int_to_ptr.vmem [resolvable:$true] %s471
          %477 = dma.hbm_to_vmem [thread:$0]  %s470, 6144, %s472, %s457, 128, 128, 8
        $region60: #{tpu_custom_call.1} parent=55 // pred_fallthru
          _
      $region56: #{tpu_custom_call.1} parent=5 // pred_fallthru
        _
      %p478 = scmp.le.s32.totalorder 1, %s27
      %p479 = scmp.lt.s32.totalorder %s27, 3
      %p480 = pnand %p478, %p479
      %p481 = pneg %p480
      // Predicated region
      $region61: #{tpu_custom_call.1} parent=5 // pred_check
        _
      $region62: #{tpu_custom_call.1} parent=5 // pred_check_branch
        %483 = sbr.rel (%p480) target = $region64
      $region63: #{tpu_custom_call.1} parent=5 // pred_region
        %s484 = ssub.s32 %s27, 1
        %s485 = sand.u32 %s63, 1
        %s486 = scalar_lea.sflag [#allocation3], %s485
        %s487 = sand.u32 %s63, 1
        %s488 = smul.addr %s487, 384
        %s489 = scalar_lea.vmem [#allocation2], %s488
        // Predicated region
        $region65: #{tpu_custom_call.1} parent=63 // pred_check
          %p490 = pneg %p76
        $region66: #{tpu_custom_call.1} parent=63 // pred_check_branch
          %492 = sbr.rel (%p490) target = $region68
        $region67: #{tpu_custom_call.1} parent=63 // pred_region
          %494 = dma.done %s486, 6144
        $region68: #{tpu_custom_call.1} parent=63 // pred_fallthru
          _
        // Predicated region
        $region69: #{tpu_custom_call.1} parent=63 // pred_check
          %p495 = pneg %p97
        $region70: #{tpu_custom_call.1} parent=63 // pred_check_branch
          %497 = sbr.rel (%p495) target = $region72
        $region71: #{tpu_custom_call.1} parent=63 // pred_region
          %499 = dma.done [#allocation6], 6144
        $region72: #{tpu_custom_call.1} parent=63 // pred_fallthru
          _
        // Predicated region
        $region73: #{tpu_custom_call.1} parent=63 // pred_check
          %p500 = pneg %p118
        $region74: #{tpu_custom_call.1} parent=63 // pred_check_branch
          %502 = sbr.rel (%p500) target = $region76
        $region75: #{tpu_custom_call.1} parent=63 // pred_region
          %504 = dma.done [#allocation6], 2048
        $region76: #{tpu_custom_call.1} parent=63 // pred_fallthru
          _
        // Predicated region
        $region77: #{tpu_custom_call.1} parent=63 // pred_check
          %p505 = pneg %p139
        $region78: #{tpu_custom_call.1} parent=63 // pred_check_branch
          %507 = sbr.rel (%p505) target = $region80
        $region79: #{tpu_custom_call.1} parent=63 // pred_region
          %509 = dma.done [#allocation9], 3072
        $region80: #{tpu_custom_call.1} parent=63 // pred_fallthru
          _
        // Predicated region
        $region81: #{tpu_custom_call.1} parent=63 // pred_check
          %p510 = pneg %p181
        $region82: #{tpu_custom_call.1} parent=63 // pred_check_branch
          %512 = sbr.rel (%p510) target = $region84
        $region83: #{tpu_custom_call.1} parent=63 // pred_region
          %514 = dma.done [#allocation9], 3072
        $region84: #{tpu_custom_call.1} parent=63 // pred_fallthru
          _
        // Predicated region
        $region85: #{tpu_custom_call.1} parent=63 // pred_check
          %p515 = pneg %p202
        $region86: #{tpu_custom_call.1} parent=63 // pred_check_branch
          %517 = sbr.rel (%p515) target = $region88
        $region87: #{tpu_custom_call.1} parent=63 // pred_region
          %519 = dma.done [#allocation12], 3072
        $region88: #{tpu_custom_call.1} parent=63 // pred_fallthru
          _
        // Predicated region
        $region89: #{tpu_custom_call.1} parent=63 // pred_check
          %p520 = pneg %p223
        $region90: #{tpu_custom_call.1} parent=63 // pred_check_branch
          %522 = sbr.rel (%p520) target = $region92
        $region91: #{tpu_custom_call.1} parent=63 // pred_region
          %524 = dma.done [#allocation12], 1024
        $region92: #{tpu_custom_call.1} parent=63 // pred_fallthru
          _
        // Predicated region
        $region93: #{tpu_custom_call.1} parent=63 // pred_check
          %p525 = pneg %p244
        $region94: #{tpu_custom_call.1} parent=63 // pred_check_branch
          %527 = sbr.rel (%p525) target = $region96
        $region95: #{tpu_custom_call.1} parent=63 // pred_region
          %529 = dma.done [#allocation15], 4096
        $region96: #{tpu_custom_call.1} parent=63 // pred_fallthru
          _
        // Predicated region
        $region97: #{tpu_custom_call.1} parent=63 // pred_check
          %p530 = pneg %p286
        $region98: #{tpu_custom_call.1} parent=63 // pred_check_branch
          %532 = sbr.rel (%p530) target = $region100
        $region99: #{tpu_custom_call.1} parent=63 // pred_region
          %534 = dma.done [#allocation15], 2048
        $region100: #{tpu_custom_call.1} parent=63 // pred_fallthru
          _
        %s535 = sand.u32 %s63, 1
        %s536 = scalar_lea.sflag [#allocation3], %s535
        %s537 = sand.u32 %s63, 1
        %s538 = smul.addr %s537, 384
        %s539 = scalar_lea.vmem [#allocation2], %s538
        %p540 = pneg %p76
        %p541 = pneg %p73
        %p542 = pneg %p97
        %p543 = pneg %p94
        %p544 = pneg %p118
        %p545 = pneg %p115
        %p546 = pneg %p139
        %p547 = pneg %p136
        %p548 = pneg %p160
        %p549 = pneg %p157
        %p550 = pneg %p181
        %p551 = pneg %p178
        %p552 = pneg %p202
        %p553 = pneg %p199
        %p554 = pneg %p223
        %p555 = pneg %p220
        %p556 = pneg %p244
        %p557 = pneg %p241
        %p558 = pneg %p265
        %p559 = pneg %p262
        %p560 = pneg %p286
        %p561 = pneg %p283
        %p562 = pneg %p316
        %p563 = pneg %p313
        %s564 = sand.u32 %s303, 1
        %s565 = scalar_lea.sflag [#allocation4], %s564
        %s566 = sand.u32 %s303, 1
        %s567 = smul.addr %s566, 384
        %s568 = scalar_lea.vmem [#allocation17], %s567
        %s569 = smul.u32 16, %s38
        %s570 = smul.u32 16, %s38
        %v572 = vld [vmem:[%s489] sm:$0xff]
        %v573 = vld [vmem:[%s489 + $0x8] sm:$0xff]
        %v574 = vld [vmem:[%s489 + $0x10] sm:$0xff]
        %v575 = vld [vmem:[%s489 + $0x18] sm:$0xff]
        %v576 = vld [vmem:[%s489 + $0x20] sm:$0xff]
        %v577 = vld [vmem:[%s489 + $0x28] sm:$0xff]
        %v578 = vld [vmem:[%s489 + $0x30] sm:$0xff]
        %v579 = vld [vmem:[%s489 + $0x38] sm:$0xff]
        %v580 = vld [vmem:[%s489 + $0x40] sm:$0xff]
        %v581 = vld [vmem:[%s489 + $0x48] sm:$0xff]
        %v582 = vld [vmem:[%s489 + $0x50] sm:$0xff]
        %v583 = vld [vmem:[%s489 + $0x58] sm:$0xff]
        %v584 = vld [vmem:[%s489 + $0x60] sm:$0xff]
        %v585 = vld [vmem:[%s489 + $0x68] sm:$0xff]
        %v586 = vld [vmem:[%s489 + $0x70] sm:$0xff]
        %v587 = vld [vmem:[%s489 + $0x78] sm:$0xff]
        %s588 = scalar_lea.vmem %s489, 128 [#allocation2]
        %v589 = vld [vmem:[%s588] sm:$0xff]
        %v590 = vld [vmem:[%s588 + $0x8] sm:$0xff]
        %v591 = vld [vmem:[%s588 + $0x10] sm:$0xff]
        %v592 = vld [vmem:[%s588 + $0x18] sm:$0xff]
        %v593 = vld [vmem:[%s588 + $0x20] sm:$0xff]
        %v594 = vld [vmem:[%s588 + $0x28] sm:$0xff]
        %v595 = vld [vmem:[%s588 + $0x30] sm:$0xff]
        %v596 = vld [vmem:[%s588 + $0x38] sm:$0xff]
        %v597 = vld [vmem:[%s588 + $0x40] sm:$0xff]
        %v598 = vld [vmem:[%s588 + $0x48] sm:$0xff]
        %v599 = vld [vmem:[%s588 + $0x50] sm:$0xff]
        %v600 = vld [vmem:[%s588 + $0x58] sm:$0xff]
        %v601 = vld [vmem:[%s588 + $0x60] sm:$0xff]
        %v602 = vld [vmem:[%s588 + $0x68] sm:$0xff]
        %v603 = vld [vmem:[%s588 + $0x70] sm:$0xff]
        %v604 = vld [vmem:[%s588 + $0x78] sm:$0xff]
        %s605 = scalar_lea.vmem %s489, 256 [#allocation2]
        %v606 = vld [vmem:[%s605] sm:$0xff]
        %v607 = vld [vmem:[%s605 + $0x8] sm:$0xff]
        %v608 = vld [vmem:[%s605 + $0x10] sm:$0xff]
        %v609 = vld [vmem:[%s605 + $0x18] sm:$0xff]
        %v610 = vld [vmem:[%s605 + $0x20] sm:$0xff]
        %v611 = vld [vmem:[%s605 + $0x28] sm:$0xff]
        %v612 = vld [vmem:[%s605 + $0x30] sm:$0xff]
        %v613 = vld [vmem:[%s605 + $0x38] sm:$0xff]
        %v614 = vld [vmem:[%s605 + $0x40] sm:$0xff]
        %v615 = vld [vmem:[%s605 + $0x48] sm:$0xff]
        %v616 = vld [vmem:[%s605 + $0x50] sm:$0xff]
        %v617 = vld [vmem:[%s605 + $0x58] sm:$0xff]
        %v618 = vld [vmem:[%s605 + $0x60] sm:$0xff]
        %v619 = vld [vmem:[%s605 + $0x68] sm:$0xff]
        %v620 = vld [vmem:[%s605 + $0x70] sm:$0xff]
        %v621 = vld [vmem:[%s605 + $0x78] sm:$0xff]
        %v622 = vmul.f32 %v572, 76.245
        %v623 = vmul.f32 %v573, 76.245
        %v624 = vmul.f32 %v574, 76.245
        %v625 = vmul.f32 %v575, 76.245
        %v626 = vmul.f32 %v576, 76.245
        %v627 = vmul.f32 %v577, 76.245
        %v628 = vmul.f32 %v578, 76.245
        %v629 = vmul.f32 %v579, 76.245
        %v630 = vmul.f32 %v580, 76.245
        %v631 = vmul.f32 %v581, 76.245
        %v632 = vmul.f32 %v582, 76.245
        %v633 = vmul.f32 %v583, 76.245
        %v634 = vmul.f32 %v584, 76.245
        %v635 = vmul.f32 %v585, 76.245
        %v636 = vmul.f32 %v586, 76.245
        %v637 = vmul.f32 %v587, 76.245
        %v638 = vmul.f32 %v589, 149.685
        %v639 = vmul.f32 %v590, 149.685
        %v640 = vmul.f32 %v591, 149.685
        %v641 = vmul.f32 %v592, 149.685
        %v642 = vmul.f32 %v593, 149.685
        %v643 = vmul.f32 %v594, 149.685
        %v644 = vmul.f32 %v595, 149.685
        %v645 = vmul.f32 %v596, 149.685
        %v646 = vmul.f32 %v597, 149.685
        %v647 = vmul.f32 %v598, 149.685
        %v648 = vmul.f32 %v599, 149.685
        %v649 = vmul.f32 %v600, 149.685
        %v650 = vmul.f32 %v601, 149.685
        %v651 = vmul.f32 %v602, 149.685
        %v652 = vmul.f32 %v603, 149.685
        %v653 = vmul.f32 %v604, 149.685
        %v654 = vadd.f32 %v622, %v638
        %v655 = vadd.f32 %v623, %v639
        %v656 = vadd.f32 %v624, %v640
        %v657 = vadd.f32 %v625, %v641
        %v658 = vadd.f32 %v626, %v642
        %v659 = vadd.f32 %v627, %v643
        %v660 = vadd.f32 %v628, %v644
        %v661 = vadd.f32 %v629, %v645
        %v662 = vadd.f32 %v630, %v646
        %v663 = vadd.f32 %v631, %v647
        %v664 = vadd.f32 %v632, %v648
        %v665 = vadd.f32 %v633, %v649
        %v666 = vadd.f32 %v634, %v650
        %v667 = vadd.f32 %v635, %v651
        %v668 = vadd.f32 %v636, %v652
        %v669 = vadd.f32 %v637, %v653
        %v670 = vmul.f32 %v606, 29.07
        %v671 = vmul.f32 %v607, 29.07
        %v672 = vmul.f32 %v608, 29.07
        %v673 = vmul.f32 %v609, 29.07
        %v674 = vmul.f32 %v610, 29.07
        %v675 = vmul.f32 %v611, 29.07
        %v676 = vmul.f32 %v612, 29.07
        %v677 = vmul.f32 %v613, 29.07
        %v678 = vmul.f32 %v614, 29.07
        %v679 = vmul.f32 %v615, 29.07
        %v680 = vmul.f32 %v616, 29.07
        %v681 = vmul.f32 %v617, 29.07
        %v682 = vmul.f32 %v618, 29.07
        %v683 = vmul.f32 %v619, 29.07
        %v684 = vmul.f32 %v620, 29.07
        %v685 = vmul.f32 %v621, 29.07
        %v686 = vadd.f32 %v654, %v670
        %v687 = vadd.f32 %v655, %v671
        %v688 = vadd.f32 %v656, %v672
        %v689 = vadd.f32 %v657, %v673
        %v690 = vadd.f32 %v658, %v674
        %v691 = vadd.f32 %v659, %v675
        %v692 = vadd.f32 %v660, %v676
        %v693 = vadd.f32 %v661, %v677
        %v694 = vadd.f32 %v662, %v678
        %v695 = vadd.f32 %v663, %v679
        %v696 = vadd.f32 %v664, %v680
        %v697 = vadd.f32 %v665, %v681
        %v698 = vadd.f32 %v666, %v682
        %v699 = vadd.f32 %v667, %v683
        %v700 = vadd.f32 %v668, %v684
        %v701 = vadd.f32 %v669, %v685
        %v702 = vsub.f32 %v686, 128.0
        %v703 = vsub.f32 %v687, 128.0
        %v704 = vsub.f32 %v688, 128.0
        %v705 = vsub.f32 %v689, 128.0
        %v706 = vsub.f32 %v690, 128.0
        %v707 = vsub.f32 %v691, 128.0
        %v708 = vsub.f32 %v692, 128.0
        %v709 = vsub.f32 %v693, 128.0
        %v710 = vsub.f32 %v694, 128.0
        %v711 = vsub.f32 %v695, 128.0
        %v712 = vsub.f32 %v696, 128.0
        %v713 = vsub.f32 %v697, 128.0
        %v714 = vsub.f32 %v698, 128.0
        %v715 = vsub.f32 %v699, 128.0
        %v716 = vsub.f32 %v700, 128.0
        %v717 = vsub.f32 %v701, 128.0
        %v718 = vmul.f32 %v572, -43.02768
        %v719 = vmul.f32 %v573, -43.02768
        %v720 = vmul.f32 %v574, -43.02768
        %v721 = vmul.f32 %v575, -43.02768
        %v722 = vmul.f32 %v576, -43.02768
        %v723 = vmul.f32 %v577, -43.02768
        %v724 = vmul.f32 %v578, -43.02768
        %v725 = vmul.f32 %v579, -43.02768
        %v726 = vmul.f32 %v580, -43.02768
        %v727 = vmul.f32 %v581, -43.02768
        %v728 = vmul.f32 %v582, -43.02768
        %v729 = vmul.f32 %v583, -43.02768
        %v730 = vmul.f32 %v584, -43.02768
        %v731 = vmul.f32 %v585, -43.02768
        %v732 = vmul.f32 %v586, -43.02768
        %v733 = vmul.f32 %v587, -43.02768
        %v734 = vmul.f32 %v589, -84.47232
        %v735 = vmul.f32 %v590, -84.47232
        %v736 = vmul.f32 %v591, -84.47232
        %v737 = vmul.f32 %v592, -84.47232
        %v738 = vmul.f32 %v593, -84.47232
        %v739 = vmul.f32 %v594, -84.47232
        %v740 = vmul.f32 %v595, -84.47232
        %v741 = vmul.f32 %v596, -84.47232
        %v742 = vmul.f32 %v597, -84.47232
        %v743 = vmul.f32 %v598, -84.47232
        %v744 = vmul.f32 %v599, -84.47232
        %v745 = vmul.f32 %v600, -84.47232
        %v746 = vmul.f32 %v601, -84.47232
        %v747 = vmul.f32 %v602, -84.47232
        %v748 = vmul.f32 %v603, -84.47232
        %v749 = vmul.f32 %v604, -84.47232
        %v750 = vadd.f32 %v718, %v734
        %v751 = vadd.f32 %v719, %v735
        %v752 = vadd.f32 %v720, %v736
        %v753 = vadd.f32 %v721, %v737
        %v754 = vadd.f32 %v722, %v738
        %v755 = vadd.f32 %v723, %v739
        %v756 = vadd.f32 %v724, %v740
        %v757 = vadd.f32 %v725, %v741
        %v758 = vadd.f32 %v726, %v742
        %v759 = vadd.f32 %v727, %v743
        %v760 = vadd.f32 %v728, %v744
        %v761 = vadd.f32 %v729, %v745
        %v762 = vadd.f32 %v730, %v746
        %v763 = vadd.f32 %v731, %v747
        %v764 = vadd.f32 %v732, %v748
        %v765 = vadd.f32 %v733, %v749
        %v766 = vmul.f32 %v606, 127.5
        %v767 = vmul.f32 %v607, 127.5
        %v768 = vmul.f32 %v608, 127.5
        %v769 = vmul.f32 %v609, 127.5
        %v770 = vmul.f32 %v610, 127.5
        %v771 = vmul.f32 %v611, 127.5
        %v772 = vmul.f32 %v612, 127.5
        %v773 = vmul.f32 %v613, 127.5
        %v774 = vmul.f32 %v614, 127.5
        %v775 = vmul.f32 %v615, 127.5
        %v776 = vmul.f32 %v616, 127.5
        %v777 = vmul.f32 %v617, 127.5
        %v778 = vmul.f32 %v618, 127.5
        %v779 = vmul.f32 %v619, 127.5
        %v780 = vmul.f32 %v620, 127.5
        %v781 = vmul.f32 %v621, 127.5
        %v782 = vadd.f32 %v750, %v766
        %v783 = vadd.f32 %v751, %v767
        %v784 = vadd.f32 %v752, %v768
        %v785 = vadd.f32 %v753, %v769
        %v786 = vadd.f32 %v754, %v770
        %v787 = vadd.f32 %v755, %v771
        %v788 = vadd.f32 %v756, %v772
        %v789 = vadd.f32 %v757, %v773
        %v790 = vadd.f32 %v758, %v774
        %v791 = vadd.f32 %v759, %v775
        %v792 = vadd.f32 %v760, %v776
        %v793 = vadd.f32 %v761, %v777
        %v794 = vadd.f32 %v762, %v778
        %v795 = vadd.f32 %v763, %v779
        %v796 = vadd.f32 %v764, %v780
        %v797 = vadd.f32 %v765, %v781
        %v798 = vmul.f32 %v572, 127.5
        %v799 = vmul.f32 %v573, 127.5
        %v800 = vmul.f32 %v574, 127.5
        %v801 = vmul.f32 %v575, 127.5
        %v802 = vmul.f32 %v576, 127.5
        %v803 = vmul.f32 %v577, 127.5
        %v804 = vmul.f32 %v578, 127.5
        %v805 = vmul.f32 %v579, 127.5
        %v806 = vmul.f32 %v580, 127.5
        %v807 = vmul.f32 %v581, 127.5
        %v808 = vmul.f32 %v582, 127.5
        %v809 = vmul.f32 %v583, 127.5
        %v810 = vmul.f32 %v584, 127.5
        %v811 = vmul.f32 %v585, 127.5
        %v812 = vmul.f32 %v586, 127.5
        %v813 = vmul.f32 %v587, 127.5
        %v814 = vmul.f32 %v589, -106.76544
        %v815 = vmul.f32 %v590, -106.76544
        %v816 = vmul.f32 %v591, -106.76544
        %v817 = vmul.f32 %v592, -106.76544
        %v818 = vmul.f32 %v593, -106.76544
        %v819 = vmul.f32 %v594, -106.76544
        %v820 = vmul.f32 %v595, -106.76544
        %v821 = vmul.f32 %v596, -106.76544
        %v822 = vmul.f32 %v597, -106.76544
        %v823 = vmul.f32 %v598, -106.76544
        %v824 = vmul.f32 %v599, -106.76544
        %v825 = vmul.f32 %v600, -106.76544
        %v826 = vmul.f32 %v601, -106.76544
        %v827 = vmul.f32 %v602, -106.76544
        %v828 = vmul.f32 %v603, -106.76544
        %v829 = vmul.f32 %v604, -106.76544
        %v830 = vadd.f32 %v798, %v814
        %v831 = vadd.f32 %v799, %v815
        %v832 = vadd.f32 %v800, %v816
        %v833 = vadd.f32 %v801, %v817
        %v834 = vadd.f32 %v802, %v818
        %v835 = vadd.f32 %v803, %v819
        %v836 = vadd.f32 %v804, %v820
        %v837 = vadd.f32 %v805, %v821
        %v838 = vadd.f32 %v806, %v822
        %v839 = vadd.f32 %v807, %v823
        %v840 = vadd.f32 %v808, %v824
        %v841 = vadd.f32 %v809, %v825
        %v842 = vadd.f32 %v810, %v826
        %v843 = vadd.f32 %v811, %v827
        %v844 = vadd.f32 %v812, %v828
        %v845 = vadd.f32 %v813, %v829
        %v846 = vmul.f32 %v606, -20.73456
        %v847 = vmul.f32 %v607, -20.73456
        %v848 = vmul.f32 %v608, -20.73456
        %v849 = vmul.f32 %v609, -20.73456
        %v850 = vmul.f32 %v610, -20.73456
        %v851 = vmul.f32 %v611, -20.73456
        %v852 = vmul.f32 %v612, -20.73456
        %v853 = vmul.f32 %v613, -20.73456
        %v854 = vmul.f32 %v614, -20.73456
        %v855 = vmul.f32 %v615, -20.73456
        %v856 = vmul.f32 %v616, -20.73456
        %v857 = vmul.f32 %v617, -20.73456
        %v858 = vmul.f32 %v618, -20.73456
        %v859 = vmul.f32 %v619, -20.73456
        %v860 = vmul.f32 %v620, -20.73456
        %v861 = vmul.f32 %v621, -20.73456
        %v862 = vadd.f32 %v830, %v846
        %v863 = vadd.f32 %v831, %v847
        %v864 = vadd.f32 %v832, %v848
        %v865 = vadd.f32 %v833, %v849
        %v866 = vadd.f32 %v834, %v850
        %v867 = vadd.f32 %v835, %v851
        %v868 = vadd.f32 %v836, %v852
        %v869 = vadd.f32 %v837, %v853
        %v870 = vadd.f32 %v838, %v854
        %v871 = vadd.f32 %v839, %v855
        %v872 = vadd.f32 %v840, %v856
        %v873 = vadd.f32 %v841, %v857
        %v874 = vadd.f32 %v842, %v858
        %v875 = vadd.f32 %v843, %v859
        %v876 = vadd.f32 %v844, %v860
        %v877 = vadd.f32 %v845, %v861
        %v878 = vld [vmem:[#allocation13] sm:$0xff]
        %v879 = vld [vmem:[#allocation13 + $0x8] sm:$0xff]
        %v880 = vld [vmem:[#allocation13 + $0x10] sm:$0xff]
        %v881 = vld [vmem:[#allocation13 + $0x18] sm:$0xff]
        %v882 = vld [vmem:[#allocation13 + $0x20] sm:$0xff]
        %v883 = vld [vmem:[#allocation13 + $0x28] sm:$0xff]
        %v884 = vld [vmem:[#allocation13 + $0x30] sm:$0xff]
        %v885 = vld [vmem:[#allocation13 + $0x38] sm:$0xff]
        %886 = vmatpush.msra.mxu0 %v797
        %887 = vmatpush.msra.mxu0 %v796
        %888 = vmatpush.msra.mxu0 %v795
        %889 = vmatpush.msra.mxu0 %v794
        %890 = vmatpush.msra.mxu0 %v793
        %891 = vmatpush.msra.mxu0 %v792
        %892 = vmatpush.msra.mxu0 %v791
        %893 = vmatpush.msra.mxu0 %v790
        %894 = vmatpush.msra.mxu0 %v789
        %895 = vmatpush.msra.mxu0 %v788
        %896 = vmatpush.msra.mxu0 %v787
        %897 = vmatpush.msra.mxu0 %v786
        %898 = vmatpush.msra.mxu0 %v785
        %899 = vmatpush.msra.mxu0 %v784
        %900 = vmatpush.msra.mxu0 %v783
        %901 = vmatpush.msra.mxu0 %v782
        %902 = vmatmul.f32.gmra.mxu0 %v878
        %v903 = vpop.f32.mrf.mxu0
        %v904 = vadd.f32 0.0, %v903
        %905 = vmatmul.f32.gmra.mxu0 %v879
        %v906 = vpop.f32.mrf.mxu0
        %v907 = vadd.f32 0.0, %v906
        %908 = vmatmul.f32.gmra.mxu0 %v880
        %v909 = vpop.f32.mrf.mxu0
        %v910 = vadd.f32 0.0, %v909
        %911 = vmatmul.f32.gmra.mxu0 %v881
        %v912 = vpop.f32.mrf.mxu0
        %v913 = vadd.f32 0.0, %v912
        %914 = vmatmul.f32.gmra.mxu0 %v882
        %v915 = vpop.f32.mrf.mxu0
        %v916 = vadd.f32 0.0, %v915
        %917 = vmatmul.f32.gmra.mxu0 %v883
        %v918 = vpop.f32.mrf.mxu0
        %v919 = vadd.f32 0.0, %v918
        %920 = vmatmul.f32.gmra.mxu0 %v884
        %v921 = vpop.f32.mrf.mxu0
        %v922 = vadd.f32 0.0, %v921
        %923 = vmatmul.f32.gmra.mxu0 %v885
        %v924 = vpop.f32.mrf.mxu0
        %v925 = vadd.f32 0.0, %v924
        %926 = vdwg.mxu0
        %927 = vmatpush.msra.mxu0 %v877
        %928 = vmatpush.msra.mxu0 %v876
        %929 = vmatpush.msra.mxu0 %v875
        %930 = vmatpush.msra.mxu0 %v874
        %931 = vmatpush.msra.mxu0 %v873
        %932 = vmatpush.msra.mxu0 %v872
        %933 = vmatpush.msra.mxu0 %v871
        %934 = vmatpush.msra.mxu0 %v870
        %935 = vmatpush.msra.mxu0 %v869
        %936 = vmatpush.msra.mxu0 %v868
        %937 = vmatpush.msra.mxu0 %v867
        %938 = vmatpush.msra.mxu0 %v866
        %939 = vmatpush.msra.mxu0 %v865
        %940 = vmatpush.msra.mxu0 %v864
        %941 = vmatpush.msra.mxu0 %v863
        %942 = vmatpush.msra.mxu0 %v862
        %943 = vmatmul.f32.gmra.mxu0 %v878
        %v944 = vpop.f32.mrf.mxu0
        %v945 = vadd.f32 0.0, %v944
        %946 = vmatmul.f32.gmra.mxu0 %v879
        %v947 = vpop.f32.mrf.mxu0
        %v948 = vadd.f32 0.0, %v947
        %949 = vmatmul.f32.gmra.mxu0 %v880
        %v950 = vpop.f32.mrf.mxu0
        %v951 = vadd.f32 0.0, %v950
        %952 = vmatmul.f32.gmra.mxu0 %v881
        %v953 = vpop.f32.mrf.mxu0
        %v954 = vadd.f32 0.0, %v953
        %955 = vmatmul.f32.gmra.mxu0 %v882
        %v956 = vpop.f32.mrf.mxu0
        %v957 = vadd.f32 0.0, %v956
        %958 = vmatmul.f32.gmra.mxu0 %v883
        %v959 = vpop.f32.mrf.mxu0
        %v960 = vadd.f32 0.0, %v959
        %961 = vmatmul.f32.gmra.mxu0 %v884
        %v962 = vpop.f32.mrf.mxu0
        %v963 = vadd.f32 0.0, %v962
        %964 = vmatmul.f32.gmra.mxu0 %v885
        %v965 = vpop.f32.mrf.mxu0
        %v966 = vadd.f32 0.0, %v965
        %967 = vdwg.mxu0
        %v968 = vld [vmem:[#allocation14] sm:$0xff]
        %v969 = vld [vmem:[#allocation14 + $0x8] sm:$0xff]
        %v970 = vld [vmem:[#allocation14 + $0x10] sm:$0xff]
        %v971 = vld [vmem:[#allocation14 + $0x18] sm:$0xff]
        %v972 = vld [vmem:[#allocation14 + $0x20] sm:$0xff]
        %v973 = vld [vmem:[#allocation14 + $0x28] sm:$0xff]
        %v974 = vld [vmem:[#allocation14 + $0x30] sm:$0xff]
        %v975 = vld [vmem:[#allocation14 + $0x38] sm:$0xff]
        %v976 = vld [vmem:[#allocation14 + $0x40] sm:$0xff]
        %v977 = vld [vmem:[#allocation14 + $0x48] sm:$0xff]
        %v978 = vld [vmem:[#allocation14 + $0x50] sm:$0xff]
        %v979 = vld [vmem:[#allocation14 + $0x58] sm:$0xff]
        %v980 = vld [vmem:[#allocation14 + $0x60] sm:$0xff]
        %v981 = vld [vmem:[#allocation14 + $0x68] sm:$0xff]
        %v982 = vld [vmem:[#allocation14 + $0x70] sm:$0xff]
        %v983 = vld [vmem:[#allocation14 + $0x78] sm:$0xff]
        %v984 = vld [vmem:[#allocation14 + $0x80] sm:$0xff]
        %v985 = vld [vmem:[#allocation14 + $0x88] sm:$0xff]
        %v986 = vld [vmem:[#allocation14 + $0x90] sm:$0xff]
        %v987 = vld [vmem:[#allocation14 + $0x98] sm:$0xff]
        %v988 = vld [vmem:[#allocation14 + $0xa0] sm:$0xff]
        %v989 = vld [vmem:[#allocation14 + $0xa8] sm:$0xff]
        %v990 = vld [vmem:[#allocation14 + $0xb0] sm:$0xff]
        %v991 = vld [vmem:[#allocation14 + $0xb8] sm:$0xff]
        %v992 = vld [vmem:[#allocation14 + $0xc0] sm:$0xff]
        %v993 = vld [vmem:[#allocation14 + $0xc8] sm:$0xff]
        %v994 = vld [vmem:[#allocation14 + $0xd0] sm:$0xff]
        %v995 = vld [vmem:[#allocation14 + $0xd8] sm:$0xff]
        %v996 = vld [vmem:[#allocation14 + $0xe0] sm:$0xff]
        %v997 = vld [vmem:[#allocation14 + $0xe8] sm:$0xff]
        %v998 = vld [vmem:[#allocation14 + $0xf0] sm:$0xff]
        %v999 = vld [vmem:[#allocation14 + $0xf8] sm:$0xff]
        %1000 = vmatpush.msra.mxu0 %v983
        %1001 = vmatpush.msra.mxu0 %v982
        %1002 = vmatpush.msra.mxu0 %v981
        %1003 = vmatpush.msra.mxu0 %v980
        %1004 = vmatpush.msra.mxu0 %v979
        %1005 = vmatpush.msra.mxu0 %v978
        %1006 = vmatpush.msra.mxu0 %v977
        %1007 = vmatpush.msra.mxu0 %v976
        %1008 = vmatpush.msra.mxu0 %v975
        %1009 = vmatpush.msra.mxu0 %v974
        %1010 = vmatpush.msra.mxu0 %v973
        %1011 = vmatpush.msra.mxu0 %v972
        %1012 = vmatpush.msra.mxu0 %v971
        %1013 = vmatpush.msra.mxu0 %v970
        %1014 = vmatpush.msra.mxu0 %v969
        %1015 = vmatpush.msra.mxu0 %v968
        %1016 = vmatmul.f32.gmra.mxu0 %v904
        %v1017 = vpop.f32.mrf.mxu0
        %v1018 = vadd.f32 0.0, %v1017
        %1019 = vmatmul.f32.gmra.mxu0 %v907
        %v1020 = vpop.f32.mrf.mxu0
        %v1021 = vadd.f32 0.0, %v1020
        %1022 = vmatmul.f32.gmra.mxu0 %v910
        %v1023 = vpop.f32.mrf.mxu0
        %v1024 = vadd.f32 0.0, %v1023
        %1025 = vmatmul.f32.gmra.mxu0 %v913
        %v1026 = vpop.f32.mrf.mxu0
        %v1027 = vadd.f32 0.0, %v1026
        %1028 = vmatmul.f32.gmra.mxu0 %v916
        %v1029 = vpop.f32.mrf.mxu0
        %v1030 = vadd.f32 0.0, %v1029
        %1031 = vmatmul.f32.gmra.mxu0 %v919
        %v1032 = vpop.f32.mrf.mxu0
        %v1033 = vadd.f32 0.0, %v1032
        %1034 = vmatmul.f32.gmra.mxu0 %v922
        %v1035 = vpop.f32.mrf.mxu0
        %v1036 = vadd.f32 0.0, %v1035
        %1037 = vmatmul.f32.gmra.mxu0 %v925
        %v1038 = vpop.f32.mrf.mxu0
        %v1039 = vadd.f32 0.0, %v1038
        %1040 = vdwg.mxu0
        %1041 = vmatpush.msra.mxu0 %v999
        %1042 = vmatpush.msra.mxu0 %v998
        %1043 = vmatpush.msra.mxu0 %v997
        %1044 = vmatpush.msra.mxu0 %v996
        %1045 = vmatpush.msra.mxu0 %v995
        %1046 = vmatpush.msra.mxu0 %v994
        %1047 = vmatpush.msra.mxu0 %v993
        %1048 = vmatpush.msra.mxu0 %v992
        %1049 = vmatpush.msra.mxu0 %v991
        %1050 = vmatpush.msra.mxu0 %v990
        %1051 = vmatpush.msra.mxu0 %v989
        %1052 = vmatpush.msra.mxu0 %v988
        %1053 = vmatpush.msra.mxu0 %v987
        %1054 = vmatpush.msra.mxu0 %v986
        %1055 = vmatpush.msra.mxu0 %v985
        %1056 = vmatpush.msra.mxu0 %v984
        %1057 = vmatmul.f32.gmra.mxu0 %v945
        %v1058 = vpop.f32.mrf.mxu0
        %v1059 = vadd.f32 %v1018, %v1058
        %1060 = vmatmul.f32.gmra.mxu0 %v948
        %v1061 = vpop.f32.mrf.mxu0
        %v1062 = vadd.f32 %v1021, %v1061
        %1063 = vmatmul.f32.gmra.mxu0 %v951
        %v1064 = vpop.f32.mrf.mxu0
        %v1065 = vadd.f32 %v1024, %v1064
        %1066 = vmatmul.f32.gmra.mxu0 %v954
        %v1067 = vpop.f32.mrf.mxu0
        %v1068 = vadd.f32 %v1027, %v1067
        %1069 = vmatmul.f32.gmra.mxu0 %v957
        %v1070 = vpop.f32.mrf.mxu0
        %v1071 = vadd.f32 %v1030, %v1070
        %1072 = vmatmul.f32.gmra.mxu0 %v960
        %v1073 = vpop.f32.mrf.mxu0
        %v1074 = vadd.f32 %v1033, %v1073
        %1075 = vmatmul.f32.gmra.mxu0 %v963
        %v1076 = vpop.f32.mrf.mxu0
        %v1077 = vadd.f32 %v1036, %v1076
        %1078 = vmatmul.f32.gmra.mxu0 %v966
        %v1079 = vpop.f32.mrf.mxu0
        %v1080 = vadd.f32 %v1039, %v1079
        %1081 = vdwg.mxu0
        %v1082 = vld [vmem:[#allocation5] sm:$0xff]
        %v1083 = vld [vmem:[#allocation5 + $0x8] sm:$0xff]
        %v1084 = vld [vmem:[#allocation5 + $0x10] sm:$0xff]
        %v1085 = vld [vmem:[#allocation5 + $0x18] sm:$0xff]
        %v1086 = vld [vmem:[#allocation5 + $0x20] sm:$0xff]
        %v1087 = vld [vmem:[#allocation5 + $0x28] sm:$0xff]
        %v1088 = vld [vmem:[#allocation5 + $0x30] sm:$0xff]
        %v1089 = vld [vmem:[#allocation5 + $0x38] sm:$0xff]
        %v1090 = vld [vmem:[#allocation5 + $0x40] sm:$0xff]
        %v1091 = vld [vmem:[#allocation5 + $0x48] sm:$0xff]
        %v1092 = vld [vmem:[#allocation5 + $0x50] sm:$0xff]
        %v1093 = vld [vmem:[#allocation5 + $0x58] sm:$0xff]
        %v1094 = vld [vmem:[#allocation5 + $0x60] sm:$0xff]
        %v1095 = vld [vmem:[#allocation5 + $0x68] sm:$0xff]
        %v1096 = vld [vmem:[#allocation5 + $0x70] sm:$0xff]
        %v1097 = vld [vmem:[#allocation5 + $0x78] sm:$0xff]
        %v1098 = vld [vmem:[#allocation5 + $0x80] sm:$0xff]
        %v1099 = vld [vmem:[#allocation5 + $0x88] sm:$0xff]
        %v1100 = vld [vmem:[#allocation5 + $0x90] sm:$0xff]
        %v1101 = vld [vmem:[#allocation5 + $0x98] sm:$0xff]
        %v1102 = vld [vmem:[#allocation5 + $0xa0] sm:$0xff]
        %v1103 = vld [vmem:[#allocation5 + $0xa8] sm:$0xff]
        %v1104 = vld [vmem:[#allocation5 + $0xb0] sm:$0xff]
        %v1105 = vld [vmem:[#allocation5 + $0xb8] sm:$0xff]
        %v1106 = vld [vmem:[#allocation5 + $0xc0] sm:$0xff]
        %v1107 = vld [vmem:[#allocation5 + $0xc8] sm:$0xff]
        %v1108 = vld [vmem:[#allocation5 + $0xd0] sm:$0xff]
        %v1109 = vld [vmem:[#allocation5 + $0xd8] sm:$0xff]
        %v1110 = vld [vmem:[#allocation5 + $0xe0] sm:$0xff]
        %v1111 = vld [vmem:[#allocation5 + $0xe8] sm:$0xff]
        %v1112 = vld [vmem:[#allocation5 + $0xf0] sm:$0xff]
        %v1113 = vld [vmem:[#allocation5 + $0xf8] sm:$0xff]
        %v1114 = vld [vmem:[#allocation5 + $0x100] sm:$0xff]
        %v1115 = vld [vmem:[#allocation5 + $0x108] sm:$0xff]
        %v1116 = vld [vmem:[#allocation5 + $0x110] sm:$0xff]
        %v1117 = vld [vmem:[#allocation5 + $0x118] sm:$0xff]
        %v1118 = vld [vmem:[#allocation5 + $0x120] sm:$0xff]
        %v1119 = vld [vmem:[#allocation5 + $0x128] sm:$0xff]
        %v1120 = vld [vmem:[#allocation5 + $0x130] sm:$0xff]
        %v1121 = vld [vmem:[#allocation5 + $0x138] sm:$0xff]
        %v1122 = vld [vmem:[#allocation5 + $0x140] sm:$0xff]
        %v1123 = vld [vmem:[#allocation5 + $0x148] sm:$0xff]
        %v1124 = vld [vmem:[#allocation5 + $0x150] sm:$0xff]
        %v1125 = vld [vmem:[#allocation5 + $0x158] sm:$0xff]
        %v1126 = vld [vmem:[#allocation5 + $0x160] sm:$0xff]
        %v1127 = vld [vmem:[#allocation5 + $0x168] sm:$0xff]
        %v1128 = vld [vmem:[#allocation5 + $0x170] sm:$0xff]
        %v1129 = vld [vmem:[#allocation5 + $0x178] sm:$0xff]
        %vm1130 = vcmask 523264
        %v1132 = vsel %vm1130, %v1083, 0
        %v1135 = vsel %vm1130, %v1085, 0
        %v1138 = vsel %vm1130, %v1087, 0
        %v1141 = vsel %vm1130, %v1089, 0
        %v1144 = vsel %vm1130, %v1091, 0
        %v1147 = vsel %vm1130, %v1093, 0
        %v1150 = vsel %vm1130, %v1095, 0
        %v1153 = vsel %vm1130, %v1097, 0
        %v1156 = vsel %vm1130, %v1099, 0
        %v1159 = vsel %vm1130, %v1101, 0
        %v1162 = vsel %vm1130, %v1103, 0
        %v1165 = vsel %vm1130, %v1105, 0
        %v1168 = vsel %vm1130, %v1107, 0
        %v1171 = vsel %vm1130, %v1109, 0
        %v1174 = vsel %vm1130, %v1111, 0
        %v1177 = vsel %vm1130, %v1113, 0
        %v1180 = vsel %vm1130, %v1115, 0
        %v1183 = vsel %vm1130, %v1117, 0
        %v1186 = vsel %vm1130, %v1119, 0
        %v1189 = vsel %vm1130, %v1121, 0
        %v1192 = vsel %vm1130, %v1123, 0
        %v1195 = vsel %vm1130, %v1125, 0
        %v1198 = vsel %vm1130, %v1127, 0
        %v1201 = vsel %vm1130, %v1129, 0
        %1203 = vmatpush.msra.mxu0 %v717
        %1204 = vmatpush.msra.mxu0 %v716
        %1205 = vmatpush.msra.mxu0 %v715
        %1206 = vmatpush.msra.mxu0 %v714
        %1207 = vmatpush.msra.mxu0 %v713
        %1208 = vmatpush.msra.mxu0 %v712
        %1209 = vmatpush.msra.mxu0 %v711
        %1210 = vmatpush.msra.mxu0 %v710
        %1211 = vmatpush.msra.mxu0 %v709
        %1212 = vmatpush.msra.mxu0 %v708
        %1213 = vmatpush.msra.mxu0 %v707
        %1214 = vmatpush.msra.mxu0 %v706
        %1215 = vmatpush.msra.mxu0 %v705
        %1216 = vmatpush.msra.mxu0 %v704
        %1217 = vmatpush.msra.mxu0 %v703
        %1218 = vmatpush.msra.mxu0 %v702
        %1219 = vmatmul.f32.gmra.mxu0 %v1082
        %v1220 = vpop.f32.mrf.mxu0
        %v1221 = vadd.f32 0.0, %v1220
        %1222 = vmatmul.f32.gmra.mxu0 %v1084
        %v1223 = vpop.f32.mrf.mxu0
        %v1224 = vadd.f32 0.0, %v1223
        %1225 = vmatmul.f32.gmra.mxu0 %v1086
        %v1226 = vpop.f32.mrf.mxu0
        %v1227 = vadd.f32 0.0, %v1226
        %1228 = vmatmul.f32.gmra.mxu0 %v1088
        %v1229 = vpop.f32.mrf.mxu0
        %v1230 = vadd.f32 0.0, %v1229
        %1231 = vmatmul.f32.gmra.mxu0 %v1090
        %v1232 = vpop.f32.mrf.mxu0
        %v1233 = vadd.f32 0.0, %v1232
        %1234 = vmatmul.f32.gmra.mxu0 %v1092
        %v1235 = vpop.f32.mrf.mxu0
        %v1236 = vadd.f32 0.0, %v1235
        %1237 = vmatmul.f32.gmra.mxu0 %v1094
        %v1238 = vpop.f32.mrf.mxu0
        %v1239 = vadd.f32 0.0, %v1238
        %1240 = vmatmul.f32.gmra.mxu0 %v1096
        %v1241 = vpop.f32.mrf.mxu0
        %v1242 = vadd.f32 0.0, %v1241
        %1243 = vmatmul.f32.gmra.mxu0 %v1098
        %v1244 = vpop.f32.mrf.mxu0
        %v1245 = vadd.f32 0.0, %v1244
        %1246 = vmatmul.f32.gmra.mxu0 %v1100
        %v1247 = vpop.f32.mrf.mxu0
        %v1248 = vadd.f32 0.0, %v1247
        %1249 = vmatmul.f32.gmra.mxu0 %v1102
        %v1250 = vpop.f32.mrf.mxu0
        %v1251 = vadd.f32 0.0, %v1250
        %1252 = vmatmul.f32.gmra.mxu0 %v1104
        %v1253 = vpop.f32.mrf.mxu0
        %v1254 = vadd.f32 0.0, %v1253
        %1255 = vmatmul.f32.gmra.mxu0 %v1106
        %v1256 = vpop.f32.mrf.mxu0
        %v1257 = vadd.f32 0.0, %v1256
        %1258 = vmatmul.f32.gmra.mxu0 %v1108
        %v1259 = vpop.f32.mrf.mxu0
        %v1260 = vadd.f32 0.0, %v1259
        %1261 = vmatmul.f32.gmra.mxu0 %v1110
        %v1262 = vpop.f32.mrf.mxu0
        %v1263 = vadd.f32 0.0, %v1262
        %1264 = vmatmul.f32.gmra.mxu0 %v1112
        %v1265 = vpop.f32.mrf.mxu0
        %v1266 = vadd.f32 0.0, %v1265
        %1267 = vmatmul.f32.gmra.mxu0 %v1114
        %v1268 = vpop.f32.mrf.mxu0
        %v1269 = vadd.f32 0.0, %v1268
        %1270 = vmatmul.f32.gmra.mxu0 %v1116
        %v1271 = vpop.f32.mrf.mxu0
        %v1272 = vadd.f32 0.0, %v1271
        %1273 = vmatmul.f32.gmra.mxu0 %v1118
        %v1274 = vpop.f32.mrf.mxu0
        %v1275 = vadd.f32 0.0, %v1274
        %1276 = vmatmul.f32.gmra.mxu0 %v1120
        %v1277 = vpop.f32.mrf.mxu0
        %v1278 = vadd.f32 0.0, %v1277
        %1279 = vmatmul.f32.gmra.mxu0 %v1122
        %v1280 = vpop.f32.mrf.mxu0
        %v1281 = vadd.f32 0.0, %v1280
        %1282 = vmatmul.f32.gmra.mxu0 %v1124
        %v1283 = vpop.f32.mrf.mxu0
        %v1284 = vadd.f32 0.0, %v1283
        %1285 = vmatmul.f32.gmra.mxu0 %v1126
        %v1286 = vpop.f32.mrf.mxu0
        %v1287 = vadd.f32 0.0, %v1286
        %1288 = vmatmul.f32.gmra.mxu0 %v1128
        %v1289 = vpop.f32.mrf.mxu0
        %v1290 = vadd.f32 0.0, %v1289
        %1291 = vdwg.mxu0
        %1292 = vmatpush.msra.mxu0 0.0
        %1293 = vmatpush.msra.mxu0 0.0
        %1294 = vmatpush.msra.mxu0 0.0
        %1295 = vmatpush.msra.mxu0 0.0
        %1296 = vmatpush.msra.mxu0 0.0
        %1297 = vmatpush.msra.mxu0 0.0
        %1298 = vmatpush.msra.mxu0 0.0
        %1299 = vmatpush.msra.mxu0 0.0
        %1300 = vmatpush.msra.mxu0 %v1080
        %1301 = vmatpush.msra.mxu0 %v1077
        %1302 = vmatpush.msra.mxu0 %v1074
        %1303 = vmatpush.msra.mxu0 %v1071
        %1304 = vmatpush.msra.mxu0 %v1068
        %1305 = vmatpush.msra.mxu0 %v1065
        %1306 = vmatpush.msra.mxu0 %v1062
        %1307 = vmatpush.msra.mxu0 %v1059
        %1308 = vmatmul.f32.gmra.mxu0 %v1132
        %v1309 = vpop.f32.mrf.mxu0
        %v1310 = vadd.f32 %v1221, %v1309
        %1311 = vmatmul.f32.gmra.mxu0 %v1135
        %v1312 = vpop.f32.mrf.mxu0
        %v1313 = vadd.f32 %v1224, %v1312
        %1314 = vmatmul.f32.gmra.mxu0 %v1138
        %v1315 = vpop.f32.mrf.mxu0
        %v1316 = vadd.f32 %v1227, %v1315
        %1317 = vmatmul.f32.gmra.mxu0 %v1141
        %v1318 = vpop.f32.mrf.mxu0
        %v1319 = vadd.f32 %v1230, %v1318
        %1320 = vmatmul.f32.gmra.mxu0 %v1144
        %v1321 = vpop.f32.mrf.mxu0
        %v1322 = vadd.f32 %v1233, %v1321
        %1323 = vmatmul.f32.gmra.mxu0 %v1147
        %v1324 = vpop.f32.mrf.mxu0
        %v1325 = vadd.f32 %v1236, %v1324
        %1326 = vmatmul.f32.gmra.mxu0 %v1150
        %v1327 = vpop.f32.mrf.mxu0
        %v1328 = vadd.f32 %v1239, %v1327
        %1329 = vmatmul.f32.gmra.mxu0 %v1153
        %v1330 = vpop.f32.mrf.mxu0
        %v1331 = vadd.f32 %v1242, %v1330
        %1332 = vmatmul.f32.gmra.mxu0 %v1156
        %v1333 = vpop.f32.mrf.mxu0
        %v1334 = vadd.f32 %v1245, %v1333
        %1335 = vmatmul.f32.gmra.mxu0 %v1159
        %v1336 = vpop.f32.mrf.mxu0
        %v1337 = vadd.f32 %v1248, %v1336
        %1338 = vmatmul.f32.gmra.mxu0 %v1162
        %v1339 = vpop.f32.mrf.mxu0
        %v1340 = vadd.f32 %v1251, %v1339
        %1341 = vmatmul.f32.gmra.mxu0 %v1165
        %v1342 = vpop.f32.mrf.mxu0
        %v1343 = vadd.f32 %v1254, %v1342
        %1344 = vmatmul.f32.gmra.mxu0 %v1168
        %v1345 = vpop.f32.mrf.mxu0
        %v1346 = vadd.f32 %v1257, %v1345
        %1347 = vmatmul.f32.gmra.mxu0 %v1171
        %v1348 = vpop.f32.mrf.mxu0
        %v1349 = vadd.f32 %v1260, %v1348
        %1350 = vmatmul.f32.gmra.mxu0 %v1174
        %v1351 = vpop.f32.mrf.mxu0
        %v1352 = vadd.f32 %v1263, %v1351
        %1353 = vmatmul.f32.gmra.mxu0 %v1177
        %v1354 = vpop.f32.mrf.mxu0
        %v1355 = vadd.f32 %v1266, %v1354
        %1356 = vmatmul.f32.gmra.mxu0 %v1180
        %v1357 = vpop.f32.mrf.mxu0
        %v1358 = vadd.f32 %v1269, %v1357
        %1359 = vmatmul.f32.gmra.mxu0 %v1183
        %v1360 = vpop.f32.mrf.mxu0
        %v1361 = vadd.f32 %v1272, %v1360
        %1362 = vmatmul.f32.gmra.mxu0 %v1186
        %v1363 = vpop.f32.mrf.mxu0
        %v1364 = vadd.f32 %v1275, %v1363
        %1365 = vmatmul.f32.gmra.mxu0 %v1189
        %v1366 = vpop.f32.mrf.mxu0
        %v1367 = vadd.f32 %v1278, %v1366
        %1368 = vmatmul.f32.gmra.mxu0 %v1192
        %v1369 = vpop.f32.mrf.mxu0
        %v1370 = vadd.f32 %v1281, %v1369
        %1371 = vmatmul.f32.gmra.mxu0 %v1195
        %v1372 = vpop.f32.mrf.mxu0
        %v1373 = vadd.f32 %v1284, %v1372
        %1374 = vmatmul.f32.gmra.mxu0 %v1198
        %v1375 = vpop.f32.mrf.mxu0
        %v1376 = vadd.f32 %v1287, %v1375
        %1377 = vmatmul.f32.gmra.mxu0 %v1201
        %v1378 = vpop.f32.mrf.mxu0
        %v1379 = vadd.f32 %v1290, %v1378
        %1380 = vdwg.mxu0
        %v1381 = vld [vmem:[#allocation7] sm:$0xff]
        %v1382 = vld [vmem:[#allocation7 + $0x8] sm:$0xff]
        %v1383 = vld [vmem:[#allocation7 + $0x10] sm:$0xff]
        %v1384 = vld [vmem:[#allocation7 + $0x18] sm:$0xff]
        %v1385 = vld [vmem:[#allocation7 + $0x20] sm:$0xff]
        %v1386 = vld [vmem:[#allocation7 + $0x28] sm:$0xff]
        %v1387 = vld [vmem:[#allocation7 + $0x30] sm:$0xff]
        %v1388 = vld [vmem:[#allocation7 + $0x38] sm:$0xff]
        %v1389 = vld [vmem:[#allocation7 + $0x40] sm:$0xff]
        %v1390 = vld [vmem:[#allocation7 + $0x48] sm:$0xff]
        %v1391 = vld [vmem:[#allocation7 + $0x50] sm:$0xff]
        %v1392 = vld [vmem:[#allocation7 + $0x58] sm:$0xff]
        %v1393 = vld [vmem:[#allocation7 + $0x60] sm:$0xff]
        %v1394 = vld [vmem:[#allocation7 + $0x68] sm:$0xff]
        %v1395 = vld [vmem:[#allocation7 + $0x70] sm:$0xff]
        %v1396 = vld [vmem:[#allocation7 + $0x78] sm:$0xff]
        %1397 = vmatpush.msra.mxu0 %v1396
        %1398 = vmatpush.msra.mxu0 %v1395
        %1399 = vmatpush.msra.mxu0 %v1394
        %1400 = vmatpush.msra.mxu0 %v1393
        %1401 = vmatpush.msra.mxu0 %v1392
        %1402 = vmatpush.msra.mxu0 %v1391
        %1403 = vmatpush.msra.mxu0 %v1390
        %1404 = vmatpush.msra.mxu0 %v1389
        %1405 = vmatpush.msra.mxu0 %v1388
        %1406 = vmatpush.msra.mxu0 %v1387
        %1407 = vmatpush.msra.mxu0 %v1386
        %1408 = vmatpush.msra.mxu0 %v1385
        %1409 = vmatpush.msra.mxu0 %v1384
        %1410 = vmatpush.msra.mxu0 %v1383
        %1411 = vmatpush.msra.mxu0 %v1382
        %1412 = vmatpush.msra.mxu0 %v1381
        %1413 = vmatmul.f32.gmra.mxu0 %v1310
        %v1414 = vpop.f32.mrf.mxu0
        %v1415 = vadd.f32 0.0, %v1414
        %1416 = vmatmul.f32.gmra.mxu0 %v1313
        %v1417 = vpop.f32.mrf.mxu0
        %v1418 = vadd.f32 0.0, %v1417
        %1419 = vmatmul.f32.gmra.mxu0 %v1316
        %v1420 = vpop.f32.mrf.mxu0
        %v1421 = vadd.f32 0.0, %v1420
        %1422 = vmatmul.f32.gmra.mxu0 %v1319
        %v1423 = vpop.f32.mrf.mxu0
        %v1424 = vadd.f32 0.0, %v1423
        %1425 = vmatmul.f32.gmra.mxu0 %v1322
        %v1426 = vpop.f32.mrf.mxu0
        %v1427 = vadd.f32 0.0, %v1426
        %1428 = vmatmul.f32.gmra.mxu0 %v1325
        %v1429 = vpop.f32.mrf.mxu0
        %v1430 = vadd.f32 0.0, %v1429
        %1431 = vmatmul.f32.gmra.mxu0 %v1328
        %v1432 = vpop.f32.mrf.mxu0
        %v1433 = vadd.f32 0.0, %v1432
        %1434 = vmatmul.f32.gmra.mxu0 %v1331
        %v1435 = vpop.f32.mrf.mxu0
        %v1436 = vadd.f32 0.0, %v1435
        %1437 = vmatmul.f32.gmra.mxu0 %v1334
        %v1438 = vpop.f32.mrf.mxu0
        %v1439 = vadd.f32 0.0, %v1438
        %1440 = vmatmul.f32.gmra.mxu0 %v1337
        %v1441 = vpop.f32.mrf.mxu0
        %v1442 = vadd.f32 0.0, %v1441
        %1443 = vmatmul.f32.gmra.mxu0 %v1340
        %v1444 = vpop.f32.mrf.mxu0
        %v1445 = vadd.f32 0.0, %v1444
        %1446 = vmatmul.f32.gmra.mxu0 %v1343
        %v1447 = vpop.f32.mrf.mxu0
        %v1448 = vadd.f32 0.0, %v1447
        %1449 = vmatmul.f32.gmra.mxu0 %v1346
        %v1450 = vpop.f32.mrf.mxu0
        %v1451 = vadd.f32 0.0, %v1450
        %1452 = vmatmul.f32.gmra.mxu0 %v1349
        %v1453 = vpop.f32.mrf.mxu0
        %v1454 = vadd.f32 0.0, %v1453
        %1455 = vmatmul.f32.gmra.mxu0 %v1352
        %v1456 = vpop.f32.mrf.mxu0
        %v1457 = vadd.f32 0.0, %v1456
        %1458 = vmatmul.f32.gmra.mxu0 %v1355
        %v1459 = vpop.f32.mrf.mxu0
        %v1460 = vadd.f32 0.0, %v1459
        %1461 = vmatmul.f32.gmra.mxu0 %v1358
        %v1462 = vpop.f32.mrf.mxu0
        %v1463 = vadd.f32 0.0, %v1462
        %1464 = vmatmul.f32.gmra.mxu0 %v1361
        %v1465 = vpop.f32.mrf.mxu0
        %v1466 = vadd.f32 0.0, %v1465
        %1467 = vmatmul.f32.gmra.mxu0 %v1364
        %v1468 = vpop.f32.mrf.mxu0
        %v1469 = vadd.f32 0.0, %v1468
        %1470 = vmatmul.f32.gmra.mxu0 %v1367
        %v1471 = vpop.f32.mrf.mxu0
        %v1472 = vadd.f32 0.0, %v1471
        %1473 = vmatmul.f32.gmra.mxu0 %v1370
        %v1474 = vpop.f32.mrf.mxu0
        %v1475 = vadd.f32 0.0, %v1474
        %1476 = vmatmul.f32.gmra.mxu0 %v1373
        %v1477 = vpop.f32.mrf.mxu0
        %v1478 = vadd.f32 0.0, %v1477
        %1479 = vmatmul.f32.gmra.mxu0 %v1376
        %v1480 = vpop.f32.mrf.mxu0
        %v1481 = vadd.f32 0.0, %v1480
        %1482 = vmatmul.f32.gmra.mxu0 %v1379
        %v1483 = vpop.f32.mrf.mxu0
        %v1484 = vadd.f32 0.0, %v1483
        %1485 = vdwg.mxu0
        %v1486 = vld [vmem:[#allocation10] sm:$0xff]
        %v1487 = vld [vmem:[#allocation10 + $0x8] sm:$0xff]
        %v1488 = vld [vmem:[#allocation10 + $0x10] sm:$0xff]
        %v1489 = vld [vmem:[#allocation10 + $0x18] sm:$0xff]
        %v1490 = vld [vmem:[#allocation10 + $0x20] sm:$0xff]
        %v1491 = vld [vmem:[#allocation10 + $0x28] sm:$0xff]
        %v1492 = vld [vmem:[#allocation10 + $0x30] sm:$0xff]
        %v1493 = vld [vmem:[#allocation10 + $0x38] sm:$0xff]
        %v1494 = vld [vmem:[#allocation10 + $0x40] sm:$0xff]
        %v1495 = vld [vmem:[#allocation10 + $0x48] sm:$0xff]
        %v1496 = vld [vmem:[#allocation10 + $0x50] sm:$0xff]
        %v1497 = vld [vmem:[#allocation10 + $0x58] sm:$0xff]
        %v1498 = vld [vmem:[#allocation10 + $0x60] sm:$0xff]
        %v1499 = vld [vmem:[#allocation10 + $0x68] sm:$0xff]
        %v1500 = vld [vmem:[#allocation10 + $0x70] sm:$0xff]
        %v1501 = vld [vmem:[#allocation10 + $0x78] sm:$0xff]
        %v1502 = vld [vmem:[#allocation10 + $0x80] sm:$0xff]
        %v1503 = vld [vmem:[#allocation10 + $0x88] sm:$0xff]
        %v1504 = vld [vmem:[#allocation10 + $0x90] sm:$0xff]
        %v1505 = vld [vmem:[#allocation10 + $0x98] sm:$0xff]
        %v1506 = vld [vmem:[#allocation10 + $0xa0] sm:$0xff]
        %v1507 = vld [vmem:[#allocation10 + $0xa8] sm:$0xff]
        %v1508 = vld [vmem:[#allocation10 + $0xb0] sm:$0xff]
        %v1509 = vld [vmem:[#allocation10 + $0xb8] sm:$0xff]
        %v1510 = vmul.f32 %v1415, %v1486
        %v1511 = vmul.f32 %v1418, %v1487
        %v1512 = vmul.f32 %v1421, %v1488
        %v1513 = vmul.f32 %v1424, %v1489
        %v1514 = vmul.f32 %v1427, %v1490
        %v1515 = vmul.f32 %v1430, %v1491
        %v1516 = vmul.f32 %v1433, %v1492
        %v1517 = vmul.f32 %v1436, %v1493
        %v1518 = vmul.f32 %v1439, %v1494
        %v1519 = vmul.f32 %v1442, %v1495
        %v1520 = vmul.f32 %v1445, %v1496
        %v1521 = vmul.f32 %v1448, %v1497
        %v1522 = vmul.f32 %v1451, %v1498
        %v1523 = vmul.f32 %v1454, %v1499
        %v1524 = vmul.f32 %v1457, %v1500
        %v1525 = vmul.f32 %v1460, %v1501
        %v1526 = vmul.f32 %v1463, %v1502
        %v1527 = vmul.f32 %v1466, %v1503
        %v1528 = vmul.f32 %v1469, %v1504
        %v1529 = vmul.f32 %v1472, %v1505
        %v1530 = vmul.f32 %v1475, %v1506
        %v1531 = vmul.f32 %v1478, %v1507
        %v1532 = vmul.f32 %v1481, %v1508
        %v1533 = vmul.f32 %v1484, %v1509
        %v1534 = vround.ne.pseudo %v1510
        %v1535 = vround.ne.pseudo %v1511
        %v1536 = vround.ne.pseudo %v1512
        %v1537 = vround.ne.pseudo %v1513
        %v1538 = vround.ne.pseudo %v1514
        %v1539 = vround.ne.pseudo %v1515
        %v1540 = vround.ne.pseudo %v1516
        %v1541 = vround.ne.pseudo %v1517
        %v1542 = vround.ne.pseudo %v1518
        %v1543 = vround.ne.pseudo %v1519
        %v1544 = vround.ne.pseudo %v1520
        %v1545 = vround.ne.pseudo %v1521
        %v1546 = vround.ne.pseudo %v1522
        %v1547 = vround.ne.pseudo %v1523
        %v1548 = vround.ne.pseudo %v1524
        %v1549 = vround.ne.pseudo %v1525
        %v1550 = vround.ne.pseudo %v1526
        %v1551 = vround.ne.pseudo %v1527
        %v1552 = vround.ne.pseudo %v1528
        %v1553 = vround.ne.pseudo %v1529
        %v1554 = vround.ne.pseudo %v1530
        %v1555 = vround.ne.pseudo %v1531
        %v1556 = vround.ne.pseudo %v1532
        %v1557 = vround.ne.pseudo %v1533
        %v1558 = vsub.f32 %v1510, %v1534
        %v1559 = vsub.f32 %v1511, %v1535
        %v1560 = vsub.f32 %v1512, %v1536
        %v1561 = vsub.f32 %v1513, %v1537
        %v1562 = vsub.f32 %v1514, %v1538
        %v1563 = vsub.f32 %v1515, %v1539
        %v1564 = vsub.f32 %v1516, %v1540
        %v1565 = vsub.f32 %v1517, %v1541
        %v1566 = vsub.f32 %v1518, %v1542
        %v1567 = vsub.f32 %v1519, %v1543
        %v1568 = vsub.f32 %v1520, %v1544
        %v1569 = vsub.f32 %v1521, %v1545
        %v1570 = vsub.f32 %v1522, %v1546
        %v1571 = vsub.f32 %v1523, %v1547
        %v1572 = vsub.f32 %v1524, %v1548
        %v1573 = vsub.f32 %v1525, %v1549
        %v1574 = vsub.f32 %v1526, %v1550
        %v1575 = vsub.f32 %v1527, %v1551
        %v1576 = vsub.f32 %v1528, %v1552
        %v1577 = vsub.f32 %v1529, %v1553
        %v1578 = vsub.f32 %v1530, %v1554
        %v1579 = vsub.f32 %v1531, %v1555
        %v1580 = vsub.f32 %v1532, %v1556
        %v1581 = vsub.f32 %v1533, %v1557
        %v1582 = vmul.f32 %v1558, %v1558
        %v1583 = vmul.f32 %v1559, %v1559
        %v1584 = vmul.f32 %v1560, %v1560
        %v1585 = vmul.f32 %v1561, %v1561
        %v1586 = vmul.f32 %v1562, %v1562
        %v1587 = vmul.f32 %v1563, %v1563
        %v1588 = vmul.f32 %v1564, %v1564
        %v1589 = vmul.f32 %v1565, %v1565
        %v1590 = vmul.f32 %v1566, %v1566
        %v1591 = vmul.f32 %v1567, %v1567
        %v1592 = vmul.f32 %v1568, %v1568
        %v1593 = vmul.f32 %v1569, %v1569
        %v1594 = vmul.f32 %v1570, %v1570
        %v1595 = vmul.f32 %v1571, %v1571
        %v1596 = vmul.f32 %v1572, %v1572
        %v1597 = vmul.f32 %v1573, %v1573
        %v1598 = vmul.f32 %v1574, %v1574
        %v1599 = vmul.f32 %v1575, %v1575
        %v1600 = vmul.f32 %v1576, %v1576
        %v1601 = vmul.f32 %v1577, %v1577
        %v1602 = vmul.f32 %v1578, %v1578
        %v1603 = vmul.f32 %v1579, %v1579
        %v1604 = vmul.f32 %v1580, %v1580
        %v1605 = vmul.f32 %v1581, %v1581
        %v1606 = vmul.f32 %v1582, %v1558
        %v1607 = vmul.f32 %v1583, %v1559
        %v1608 = vmul.f32 %v1584, %v1560
        %v1609 = vmul.f32 %v1585, %v1561
        %v1610 = vmul.f32 %v1586, %v1562
        %v1611 = vmul.f32 %v1587, %v1563
        %v1612 = vmul.f32 %v1588, %v1564
        %v1613 = vmul.f32 %v1589, %v1565
        %v1614 = vmul.f32 %v1590, %v1566
        %v1615 = vmul.f32 %v1591, %v1567
        %v1616 = vmul.f32 %v1592, %v1568
        %v1617 = vmul.f32 %v1593, %v1569
        %v1618 = vmul.f32 %v1594, %v1570
        %v1619 = vmul.f32 %v1595, %v1571
        %v1620 = vmul.f32 %v1596, %v1572
        %v1621 = vmul.f32 %v1597, %v1573
        %v1622 = vmul.f32 %v1598, %v1574
        %v1623 = vmul.f32 %v1599, %v1575
        %v1624 = vmul.f32 %v1600, %v1576
        %v1625 = vmul.f32 %v1601, %v1577
        %v1626 = vmul.f32 %v1602, %v1578
        %v1627 = vmul.f32 %v1603, %v1579
        %v1628 = vmul.f32 %v1604, %v1580
        %v1629 = vmul.f32 %v1605, %v1581
        %v1630 = vadd.f32 %v1534, %v1606
        %v1631 = vadd.f32 %v1535, %v1607
        %v1632 = vadd.f32 %v1536, %v1608
        %v1633 = vadd.f32 %v1537, %v1609
        %v1634 = vadd.f32 %v1538, %v1610
        %v1635 = vadd.f32 %v1539, %v1611
        %v1636 = vadd.f32 %v1540, %v1612
        %v1637 = vadd.f32 %v1541, %v1613
        %v1638 = vadd.f32 %v1542, %v1614
        %v1639 = vadd.f32 %v1543, %v1615
        %v1640 = vadd.f32 %v1544, %v1616
        %v1641 = vadd.f32 %v1545, %v1617
        %v1642 = vadd.f32 %v1546, %v1618
        %v1643 = vadd.f32 %v1547, %v1619
        %v1644 = vadd.f32 %v1548, %v1620
        %v1645 = vadd.f32 %v1549, %v1621
        %v1646 = vadd.f32 %v1550, %v1622
        %v1647 = vadd.f32 %v1551, %v1623
        %v1648 = vadd.f32 %v1552, %v1624
        %v1649 = vadd.f32 %v1553, %v1625
        %v1650 = vadd.f32 %v1554, %v1626
        %v1651 = vadd.f32 %v1555, %v1627
        %v1652 = vadd.f32 %v1556, %v1628
        %v1653 = vadd.f32 %v1557, %v1629
        %v1654 = vld [vmem:[#allocation11] sm:$0xff]
        %v1655 = vld [vmem:[#allocation11 + $0x8] sm:$0xff]
        %v1656 = vld [vmem:[#allocation11 + $0x10] sm:$0xff]
        %v1657 = vld [vmem:[#allocation11 + $0x18] sm:$0xff]
        %v1658 = vld [vmem:[#allocation11 + $0x20] sm:$0xff]
        %v1659 = vld [vmem:[#allocation11 + $0x28] sm:$0xff]
        %v1660 = vld [vmem:[#allocation11 + $0x30] sm:$0xff]
        %v1661 = vld [vmem:[#allocation11 + $0x38] sm:$0xff]
        %v1662 = vld [vmem:[#allocation11 + $0x40] sm:$0xff]
        %v1663 = vld [vmem:[#allocation11 + $0x48] sm:$0xff]
        %v1664 = vld [vmem:[#allocation11 + $0x50] sm:$0xff]
        %v1665 = vld [vmem:[#allocation11 + $0x58] sm:$0xff]
        %v1666 = vld [vmem:[#allocation11 + $0x60] sm:$0xff]
        %v1667 = vld [vmem:[#allocation11 + $0x68] sm:$0xff]
        %v1668 = vld [vmem:[#allocation11 + $0x70] sm:$0xff]
        %v1669 = vld [vmem:[#allocation11 + $0x78] sm:$0xff]
        %v1670 = vld [vmem:[#allocation11 + $0x80] sm:$0xff]
        %v1671 = vld [vmem:[#allocation11 + $0x88] sm:$0xff]
        %v1672 = vld [vmem:[#allocation11 + $0x90] sm:$0xff]
        %v1673 = vld [vmem:[#allocation11 + $0x98] sm:$0xff]
        %v1674 = vld [vmem:[#allocation11 + $0xa0] sm:$0xff]
        %v1675 = vld [vmem:[#allocation11 + $0xa8] sm:$0xff]
        %v1676 = vld [vmem:[#allocation11 + $0xb0] sm:$0xff]
        %v1677 = vld [vmem:[#allocation11 + $0xb8] sm:$0xff]
        %v1678 = vmul.f32 %v1630, %v1654
        %v1679 = vmul.f32 %v1631, %v1655
        %v1680 = vmul.f32 %v1632, %v1656
        %v1681 = vmul.f32 %v1633, %v1657
        %v1682 = vmul.f32 %v1634, %v1658
        %v1683 = vmul.f32 %v1635, %v1659
        %v1684 = vmul.f32 %v1636, %v1660
        %v1685 = vmul.f32 %v1637, %v1661
        %v1686 = vmul.f32 %v1638, %v1662
        %v1687 = vmul.f32 %v1639, %v1663
        %v1688 = vmul.f32 %v1640, %v1664
        %v1689 = vmul.f32 %v1641, %v1665
        %v1690 = vmul.f32 %v1642, %v1666
        %v1691 = vmul.f32 %v1643, %v1667
        %v1692 = vmul.f32 %v1644, %v1668
        %v1693 = vmul.f32 %v1645, %v1669
        %v1694 = vmul.f32 %v1646, %v1670
        %v1695 = vmul.f32 %v1647, %v1671
        %v1696 = vmul.f32 %v1648, %v1672
        %v1697 = vmul.f32 %v1649, %v1673
        %v1698 = vmul.f32 %v1650, %v1674
        %v1699 = vmul.f32 %v1651, %v1675
        %v1700 = vmul.f32 %v1652, %v1676
        %v1701 = vmul.f32 %v1653, %v1677
        %v1702 = vld [vmem:[#allocation8] sm:$0xff]
        %v1703 = vld [vmem:[#allocation8 + $0x8] sm:$0xff]
        %v1704 = vld [vmem:[#allocation8 + $0x10] sm:$0xff]
        %v1705 = vld [vmem:[#allocation8 + $0x18] sm:$0xff]
        %v1706 = vld [vmem:[#allocation8 + $0x20] sm:$0xff]
        %v1707 = vld [vmem:[#allocation8 + $0x28] sm:$0xff]
        %v1708 = vld [vmem:[#allocation8 + $0x30] sm:$0xff]
        %v1709 = vld [vmem:[#allocation8 + $0x38] sm:$0xff]
        %v1710 = vld [vmem:[#allocation8 + $0x40] sm:$0xff]
        %v1711 = vld [vmem:[#allocation8 + $0x48] sm:$0xff]
        %v1712 = vld [vmem:[#allocation8 + $0x50] sm:$0xff]
        %v1713 = vld [vmem:[#allocation8 + $0x58] sm:$0xff]
        %v1714 = vld [vmem:[#allocation8 + $0x60] sm:$0xff]
        %v1715 = vld [vmem:[#allocation8 + $0x68] sm:$0xff]
        %v1716 = vld [vmem:[#allocation8 + $0x70] sm:$0xff]
        %v1717 = vld [vmem:[#allocation8 + $0x78] sm:$0xff]
        %v1718 = vld [vmem:[#allocation8 + $0x80] sm:$0xff]
        %v1719 = vld [vmem:[#allocation8 + $0x88] sm:$0xff]
        %v1720 = vld [vmem:[#allocation8 + $0x90] sm:$0xff]
        %v1721 = vld [vmem:[#allocation8 + $0x98] sm:$0xff]
        %v1722 = vld [vmem:[#allocation8 + $0xa0] sm:$0xff]
        %v1723 = vld [vmem:[#allocation8 + $0xa8] sm:$0xff]
        %v1724 = vld [vmem:[#allocation8 + $0xb0] sm:$0xff]
        %v1725 = vld [vmem:[#allocation8 + $0xb8] sm:$0xff]
        %v1726 = vpack.c.bf16 %v1679, %v1678
        %v1727 = vpack.c.bf16 %v1681, %v1680
        %v1728 = vpack.c.bf16 %v1683, %v1682
        %v1729 = vpack.c.bf16 %v1685, %v1684
        %v1730 = vpack.c.bf16 %v1687, %v1686
        %v1731 = vpack.c.bf16 %v1689, %v1688
        %v1732 = vpack.c.bf16 %v1691, %v1690
        %v1733 = vpack.c.bf16 %v1693, %v1692
        %v1734 = vpack.c.bf16 %v1695, %v1694
        %v1735 = vpack.c.bf16 %v1697, %v1696
        %v1736 = vpack.c.bf16 %v1699, %v1698
        %v1737 = vpack.c.bf16 %v1701, %v1700
        %v1762 = vunpack.c.l.b16 %v1702
        %v1763 = vunpack.c.h.b16 %v1702
        %v1764 = vunpack.c.l.b16 %v1703
        %v1765 = vunpack.c.h.b16 %v1703
        %v1766 = vunpack.c.l.b16 %v1704
        %v1767 = vunpack.c.h.b16 %v1704
        %v1768 = vunpack.c.l.b16 %v1705
        %v1769 = vunpack.c.h.b16 %v1705
        %v1770 = vunpack.c.l.b16 %v1706
        %v1771 = vunpack.c.h.b16 %v1706
        %v1772 = vunpack.c.l.b16 %v1707
        %v1773 = vunpack.c.h.b16 %v1707
        %v1774 = vunpack.c.l.b16 %v1708
        %v1775 = vunpack.c.h.b16 %v1708
        %v1776 = vunpack.c.l.b16 %v1709
        %v1777 = vunpack.c.h.b16 %v1709
        %v1778 = vunpack.c.l.b16 %v1710
        %v1779 = vunpack.c.h.b16 %v1710
        %v1780 = vunpack.c.l.b16 %v1711
        %v1781 = vunpack.c.h.b16 %v1711
        %v1782 = vunpack.c.l.b16 %v1712
        %v1783 = vunpack.c.h.b16 %v1712
        %v1784 = vunpack.c.l.b16 %v1713
        %v1785 = vunpack.c.h.b16 %v1713
        %v1786 = vunpack.c.l.b16 %v1714
        %v1787 = vunpack.c.h.b16 %v1714
        %v1788 = vunpack.c.l.b16 %v1715
        %v1789 = vunpack.c.h.b16 %v1715
        %v1790 = vunpack.c.l.b16 %v1716
        %v1791 = vunpack.c.h.b16 %v1716
        %v1792 = vunpack.c.l.b16 %v1717
        %v1793 = vunpack.c.h.b16 %v1717
        %v1794 = vunpack.c.l.b16 %v1718
        %v1795 = vunpack.c.h.b16 %v1718
        %v1796 = vunpack.c.l.b16 %v1719
        %v1797 = vunpack.c.h.b16 %v1719
        %v1798 = vunpack.c.l.b16 %v1720
        %v1799 = vunpack.c.h.b16 %v1720
        %v1800 = vunpack.c.l.b16 %v1721
        %v1801 = vunpack.c.h.b16 %v1721
        %v1802 = vunpack.c.l.b16 %v1722
        %v1803 = vunpack.c.h.b16 %v1722
        %v1804 = vunpack.c.l.b16 %v1723
        %v1805 = vunpack.c.h.b16 %v1723
        %v1806 = vunpack.c.l.b16 %v1724
        %v1807 = vunpack.c.h.b16 %v1724
        %v1808 = vunpack.c.l.b16 %v1725
        %v1809 = vunpack.c.h.b16 %v1725
        %v1810 = vpack.c.b16 %v1764, %v1762
        %v1811 = vpack.c.b16 %v1765, %v1763
        %v1812 = vpack.c.b16 %v1768, %v1766
        %v1813 = vpack.c.b16 %v1769, %v1767
        %v1814 = vpack.c.b16 %v1772, %v1770
        %v1815 = vpack.c.b16 %v1773, %v1771
        %v1816 = vpack.c.b16 %v1776, %v1774
        %v1817 = vpack.c.b16 %v1777, %v1775
        %v1818 = vpack.c.b16 %v1780, %v1778
        %v1819 = vpack.c.b16 %v1781, %v1779
        %v1820 = vpack.c.b16 %v1784, %v1782
        %v1821 = vpack.c.b16 %v1785, %v1783
        %v1822 = vpack.c.b16 %v1788, %v1786
        %v1823 = vpack.c.b16 %v1789, %v1787
        %v1824 = vpack.c.b16 %v1792, %v1790
        %v1825 = vpack.c.b16 %v1793, %v1791
        %v1826 = vpack.c.b16 %v1796, %v1794
        %v1827 = vpack.c.b16 %v1797, %v1795
        %v1828 = vpack.c.b16 %v1800, %v1798
        %v1829 = vpack.c.b16 %v1801, %v1799
        %v1830 = vpack.c.b16 %v1804, %v1802
        %v1831 = vpack.c.b16 %v1805, %v1803
        %v1832 = vpack.c.b16 %v1808, %v1806
        %v1833 = vpack.c.b16 %v1809, %v1807
        %v1847 = vsel %vm1130, %v1811, 0
        %v1850 = vsel %vm1130, %v1813, 0
        %v1853 = vsel %vm1130, %v1815, 0
        %v1856 = vsel %vm1130, %v1817, 0
        %v1859 = vsel %vm1130, %v1819, 0
        %v1862 = vsel %vm1130, %v1821, 0
        %v1865 = vsel %vm1130, %v1823, 0
        %v1868 = vsel %vm1130, %v1825, 0
        %v1871 = vsel %vm1130, %v1827, 0
        %v1874 = vsel %vm1130, %v1829, 0
        %v1877 = vsel %vm1130, %v1831, 0
        %v1880 = vsel %vm1130, %v1833, 0
        %1882 = vmatpush.bf16.msra.mxu0 %v1733
        %1883 = vmatpush.bf16.msra.mxu0 %v1732
        %1884 = vmatpush.bf16.msra.mxu0 %v1731
        %1885 = vmatpush.bf16.msra.mxu0 %v1730
        %1886 = vmatpush.bf16.msra.mxu0 %v1729
        %1887 = vmatpush.bf16.msra.mxu0 %v1728
        %1888 = vmatpush.bf16.msra.mxu0 %v1727
        %1889 = vmatpush.bf16.msra.mxu0 %v1726
        %1890 = vmatmul.bf16.gmra.mxu0 %v1810
        %v1891 = vpop.f32.mrf.mxu0
        %v1892 = vadd.f32 0.0, %v1891
        %v1893 = vpop.f32.mrf.mxu0
        %v1894 = vadd.f32 0.0, %v1893
        %1895 = vmatmul.bf16.gmra.mxu0 %v1812
        %v1896 = vpop.f32.mrf.mxu0
        %v1897 = vadd.f32 0.0, %v1896
        %v1898 = vpop.f32.mrf.mxu0
        %v1899 = vadd.f32 0.0, %v1898
        %1900 = vmatmul.bf16.gmra.mxu0 %v1814
        %v1901 = vpop.f32.mrf.mxu0
        %v1902 = vadd.f32 0.0, %v1901
        %v1903 = vpop.f32.mrf.mxu0
        %v1904 = vadd.f32 0.0, %v1903
        %1905 = vmatmul.bf16.gmra.mxu0 %v1816
        %v1906 = vpop.f32.mrf.mxu0
        %v1907 = vadd.f32 0.0, %v1906
        %v1908 = vpop.f32.mrf.mxu0
        %v1909 = vadd.f32 0.0, %v1908
        %1910 = vmatmul.bf16.gmra.mxu0 %v1818
        %v1911 = vpop.f32.mrf.mxu0
        %v1912 = vadd.f32 0.0, %v1911
        %v1913 = vpop.f32.mrf.mxu0
        %v1914 = vadd.f32 0.0, %v1913
        %1915 = vmatmul.bf16.gmra.mxu0 %v1820
        %v1916 = vpop.f32.mrf.mxu0
        %v1917 = vadd.f32 0.0, %v1916
        %v1918 = vpop.f32.mrf.mxu0
        %v1919 = vadd.f32 0.0, %v1918
        %1920 = vmatmul.bf16.gmra.mxu0 %v1822
        %v1921 = vpop.f32.mrf.mxu0
        %v1922 = vadd.f32 0.0, %v1921
        %v1923 = vpop.f32.mrf.mxu0
        %v1924 = vadd.f32 0.0, %v1923
        %1925 = vmatmul.bf16.gmra.mxu0 %v1824
        %v1926 = vpop.f32.mrf.mxu0
        %v1927 = vadd.f32 0.0, %v1926
        %v1928 = vpop.f32.mrf.mxu0
        %v1929 = vadd.f32 0.0, %v1928
        %1930 = vmatmul.bf16.gmra.mxu0 %v1826
        %v1931 = vpop.f32.mrf.mxu0
        %v1932 = vadd.f32 0.0, %v1931
        %v1933 = vpop.f32.mrf.mxu0
        %v1934 = vadd.f32 0.0, %v1933
        %1935 = vmatmul.bf16.gmra.mxu0 %v1828
        %v1936 = vpop.f32.mrf.mxu0
        %v1937 = vadd.f32 0.0, %v1936
        %v1938 = vpop.f32.mrf.mxu0
        %v1939 = vadd.f32 0.0, %v1938
        %1940 = vmatmul.bf16.gmra.mxu0 %v1830
        %v1941 = vpop.f32.mrf.mxu0
        %v1942 = vadd.f32 0.0, %v1941
        %v1943 = vpop.f32.mrf.mxu0
        %v1944 = vadd.f32 0.0, %v1943
        %1945 = vmatmul.bf16.gmra.mxu0 %v1832
        %v1946 = vpop.f32.mrf.mxu0
        %v1947 = vadd.f32 0.0, %v1946
        %v1948 = vpop.f32.mrf.mxu0
        %v1949 = vadd.f32 0.0, %v1948
        %1950 = vdwg.mxu0
        %1951 = vmatpush.bf16.msra.mxu0 0
        %1952 = vmatpush.bf16.msra.mxu0 0
        %1953 = vmatpush.bf16.msra.mxu0 0
        %1954 = vmatpush.bf16.msra.mxu0 0
        %1955 = vmatpush.bf16.msra.mxu0 %v1737
        %1956 = vmatpush.bf16.msra.mxu0 %v1736
        %1957 = vmatpush.bf16.msra.mxu0 %v1735
        %1958 = vmatpush.bf16.msra.mxu0 %v1734
        %1959 = vmatmul.bf16.gmra.mxu0 %v1847
        %v1960 = vpop.f32.mrf.mxu0
        %v1961 = vadd.f32 %v1892, %v1960
        %v1962 = vpop.f32.mrf.mxu0
        %v1963 = vadd.f32 %v1894, %v1962
        %1964 = vmatmul.bf16.gmra.mxu0 %v1850
        %v1965 = vpop.f32.mrf.mxu0
        %v1966 = vadd.f32 %v1897, %v1965
        %v1967 = vpop.f32.mrf.mxu0
        %v1968 = vadd.f32 %v1899, %v1967
        %1969 = vmatmul.bf16.gmra.mxu0 %v1853
        %v1970 = vpop.f32.mrf.mxu0
        %v1971 = vadd.f32 %v1902, %v1970
        %v1972 = vpop.f32.mrf.mxu0
        %v1973 = vadd.f32 %v1904, %v1972
        %1974 = vmatmul.bf16.gmra.mxu0 %v1856
        %v1975 = vpop.f32.mrf.mxu0
        %v1976 = vadd.f32 %v1907, %v1975
        %v1977 = vpop.f32.mrf.mxu0
        %v1978 = vadd.f32 %v1909, %v1977
        %1979 = vmatmul.bf16.gmra.mxu0 %v1859
        %v1980 = vpop.f32.mrf.mxu0
        %v1981 = vadd.f32 %v1912, %v1980
        %v1982 = vpop.f32.mrf.mxu0
        %v1983 = vadd.f32 %v1914, %v1982
        %1984 = vmatmul.bf16.gmra.mxu0 %v1862
        %v1985 = vpop.f32.mrf.mxu0
        %v1986 = vadd.f32 %v1917, %v1985
        %v1987 = vpop.f32.mrf.mxu0
        %v1988 = vadd.f32 %v1919, %v1987
        %1989 = vmatmul.bf16.gmra.mxu0 %v1865
        %v1990 = vpop.f32.mrf.mxu0
        %v1991 = vadd.f32 %v1922, %v1990
        %v1992 = vpop.f32.mrf.mxu0
        %v1993 = vadd.f32 %v1924, %v1992
        %1994 = vmatmul.bf16.gmra.mxu0 %v1868
        %v1995 = vpop.f32.mrf.mxu0
        %v1996 = vadd.f32 %v1927, %v1995
        %v1997 = vpop.f32.mrf.mxu0
        %v1998 = vadd.f32 %v1929, %v1997
        %1999 = vmatmul.bf16.gmra.mxu0 %v1871
        %v2000 = vpop.f32.mrf.mxu0
        %v2001 = vadd.f32 %v1932, %v2000
        %v2002 = vpop.f32.mrf.mxu0
        %v2003 = vadd.f32 %v1934, %v2002
        %2004 = vmatmul.bf16.gmra.mxu0 %v1874
        %v2005 = vpop.f32.mrf.mxu0
        %v2006 = vadd.f32 %v1937, %v2005
        %v2007 = vpop.f32.mrf.mxu0
        %v2008 = vadd.f32 %v1939, %v2007
        %2009 = vmatmul.bf16.gmra.mxu0 %v1877
        %v2010 = vpop.f32.mrf.mxu0
        %v2011 = vadd.f32 %v1942, %v2010
        %v2012 = vpop.f32.mrf.mxu0
        %v2013 = vadd.f32 %v1944, %v2012
        %2014 = vmatmul.bf16.gmra.mxu0 %v1880
        %v2015 = vpop.f32.mrf.mxu0
        %v2016 = vadd.f32 %v1947, %v2015
        %v2017 = vpop.f32.mrf.mxu0
        %v2018 = vadd.f32 %v1949, %v2017
        %2019 = vdwg.mxu0
        %v2020 = vld [vmem:[%s4] sm:$0xf]
        %v2021 = vld [vmem:[%s4 + $0x4] sm:$0xf]
        %v2022 = vld [vmem:[%s4 + $0x8] sm:$0xf]
        %v2023 = vld [vmem:[%s4 + $0xc] sm:$0xf]
        %v2024 = vld [vmem:[%s4 + $0x10] sm:$0xf]
        %v2025 = vld [vmem:[%s4 + $0x14] sm:$0xf]
        %v2026 = vld [vmem:[%s4 + $0x18] sm:$0xf]
        %v2027 = vld [vmem:[%s4 + $0x1c] sm:$0xf]
        %v2028 = vld [vmem:[%s4 + $0x20] sm:$0xf]
        %v2029 = vld [vmem:[%s4 + $0x24] sm:$0xf]
        %v2030 = vld [vmem:[%s4 + $0x28] sm:$0xf]
        %v2031 = vld [vmem:[%s4 + $0x2c] sm:$0xf]
        %v2032 = vld [vmem:[%s4 + $0x30] sm:$0xf]
        %v2033 = vld [vmem:[%s4 + $0x34] sm:$0xf]
        %v2034 = vld [vmem:[%s4 + $0x38] sm:$0xf]
        %v2035 = vld [vmem:[%s4 + $0x3c] sm:$0xf]
        %v2036 = vpack.c.bf16 %v1963, %v1961
        %v2037 = vpack.c.bf16 %v1968, %v1966
        %v2038 = vpack.c.bf16 %v1973, %v1971
        %v2039 = vpack.c.bf16 %v1978, %v1976
        %v2040 = vpack.c.bf16 %v1983, %v1981
        %v2041 = vpack.c.bf16 %v1988, %v1986
        %v2042 = vpack.c.bf16 %v1993, %v1991
        %v2043 = vpack.c.bf16 %v1998, %v1996
        %v2044 = vpack.c.bf16 %v2003, %v2001
        %v2045 = vpack.c.bf16 %v2008, %v2006
        %v2046 = vpack.c.bf16 %v2013, %v2011
        %v2047 = vpack.c.bf16 %v2018, %v2016
        %v2064 = vunpack.c.l.b16 %v2020
        %v2065 = vunpack.c.l.b16 %v2021
        %v2066 = vunpack.c.l.b16 %v2022
        %v2067 = vunpack.c.l.b16 %v2023
        %v2068 = vunpack.c.l.b16 %v2024
        %v2069 = vunpack.c.l.b16 %v2025
        %v2070 = vunpack.c.l.b16 %v2026
        %v2071 = vunpack.c.l.b16 %v2027
        %v2072 = vunpack.c.l.b16 %v2028
        %v2073 = vunpack.c.l.b16 %v2029
        %v2074 = vunpack.c.l.b16 %v2030
        %v2075 = vunpack.c.l.b16 %v2031
        %v2076 = vunpack.c.l.b16 %v2032
        %v2077 = vunpack.c.l.b16 %v2033
        %v2078 = vunpack.c.l.b16 %v2034
        %v2079 = vunpack.c.l.b16 %v2035
        %v2080 = vpack.c.b16 %v2065, %v2064
        %v2081 = vpack.c.b16 %v2067, %v2066
        %v2082 = vpack.c.b16 %v2069, %v2068
        %v2083 = vpack.c.b16 %v2071, %v2070
        %v2084 = vpack.c.b16 %v2073, %v2072
        %v2085 = vpack.c.b16 %v2075, %v2074
        %v2086 = vpack.c.b16 %v2077, %v2076
        %v2087 = vpack.c.b16 %v2079, %v2078
        %2096 = vmatpush.bf16.msra.mxu0 %v2087
        %2097 = vmatpush.bf16.msra.mxu0 %v2086
        %2098 = vmatpush.bf16.msra.mxu0 %v2085
        %2099 = vmatpush.bf16.msra.mxu0 %v2084
        %2100 = vmatpush.bf16.msra.mxu0 %v2083
        %2101 = vmatpush.bf16.msra.mxu0 %v2082
        %2102 = vmatpush.bf16.msra.mxu0 %v2081
        %2103 = vmatpush.bf16.msra.mxu0 %v2080
        %2104 = vmatmul.bf16.gmra.mxu0 %v2036
        %v2105 = vpop.f32.mrf.mxu0
        %v2106 = vadd.f32 0.0, %v2105
        %v2107 = vpop.f32.mrf.mxu0
        %v2108 = vadd.f32 0.0, %v2107
        %2109 = vmatmul.bf16.gmra.mxu0 %v2037
        %v2110 = vpop.f32.mrf.mxu0
        %v2111 = vadd.f32 0.0, %v2110
        %v2112 = vpop.f32.mrf.mxu0
        %v2113 = vadd.f32 0.0, %v2112
        %2114 = vmatmul.bf16.gmra.mxu0 %v2038
        %v2115 = vpop.f32.mrf.mxu0
        %v2116 = vadd.f32 0.0, %v2115
        %v2117 = vpop.f32.mrf.mxu0
        %v2118 = vadd.f32 0.0, %v2117
        %2119 = vmatmul.bf16.gmra.mxu0 %v2039
        %v2120 = vpop.f32.mrf.mxu0
        %v2121 = vadd.f32 0.0, %v2120
        %v2122 = vpop.f32.mrf.mxu0
        %v2123 = vadd.f32 0.0, %v2122
        %2124 = vmatmul.bf16.gmra.mxu0 %v2040
        %v2125 = vpop.f32.mrf.mxu0
        %v2126 = vadd.f32 0.0, %v2125
        %v2127 = vpop.f32.mrf.mxu0
        %v2128 = vadd.f32 0.0, %v2127
        %2129 = vmatmul.bf16.gmra.mxu0 %v2041
        %v2130 = vpop.f32.mrf.mxu0
        %v2131 = vadd.f32 0.0, %v2130
        %v2132 = vpop.f32.mrf.mxu0
        %v2133 = vadd.f32 0.0, %v2132
        %2134 = vmatmul.bf16.gmra.mxu0 %v2042
        %v2135 = vpop.f32.mrf.mxu0
        %v2136 = vadd.f32 0.0, %v2135
        %v2137 = vpop.f32.mrf.mxu0
        %v2138 = vadd.f32 0.0, %v2137
        %2139 = vmatmul.bf16.gmra.mxu0 %v2043
        %v2140 = vpop.f32.mrf.mxu0
        %v2141 = vadd.f32 0.0, %v2140
        %v2142 = vpop.f32.mrf.mxu0
        %v2143 = vadd.f32 0.0, %v2142
        %2144 = vmatmul.bf16.gmra.mxu0 %v2044
        %v2145 = vpop.f32.mrf.mxu0
        %v2146 = vadd.f32 0.0, %v2145
        %v2147 = vpop.f32.mrf.mxu0
        %v2148 = vadd.f32 0.0, %v2147
        %2149 = vmatmul.bf16.gmra.mxu0 %v2045
        %v2150 = vpop.f32.mrf.mxu0
        %v2151 = vadd.f32 0.0, %v2150
        %v2152 = vpop.f32.mrf.mxu0
        %v2153 = vadd.f32 0.0, %v2152
        %2154 = vmatmul.bf16.gmra.mxu0 %v2046
        %v2155 = vpop.f32.mrf.mxu0
        %v2156 = vadd.f32 0.0, %v2155
        %v2157 = vpop.f32.mrf.mxu0
        %v2158 = vadd.f32 0.0, %v2157
        %2159 = vmatmul.bf16.gmra.mxu0 %v2047
        %v2160 = vpop.f32.mrf.mxu0
        %v2161 = vadd.f32 0.0, %v2160
        %v2162 = vpop.f32.mrf.mxu0
        %v2163 = vadd.f32 0.0, %v2162
        %2164 = vdwg.mxu0
        %v2165 = vld [vmem:[%s9] sm:$0xf]
        %v2166 = vld [vmem:[%s9 + $0x4] sm:$0xf]
        %v2167 = vld [vmem:[%s9 + $0x8] sm:$0xf]
        %v2168 = vld [vmem:[%s9 + $0xc] sm:$0xf]
        %v2169 = vld [vmem:[%s9 + $0x10] sm:$0xf]
        %v2170 = vld [vmem:[%s9 + $0x14] sm:$0xf]
        %v2171 = vld [vmem:[%s9 + $0x18] sm:$0xf]
        %v2172 = vld [vmem:[%s9 + $0x1c] sm:$0xf]
        %v2173 = vld [vmem:[%s9 + $0x20] sm:$0xf]
        %v2174 = vld [vmem:[%s9 + $0x24] sm:$0xf]
        %v2175 = vld [vmem:[%s9 + $0x28] sm:$0xf]
        %v2176 = vld [vmem:[%s9 + $0x2c] sm:$0xf]
        %v2177 = vld [vmem:[%s9 + $0x30] sm:$0xf]
        %v2178 = vld [vmem:[%s9 + $0x34] sm:$0xf]
        %v2179 = vld [vmem:[%s9 + $0x38] sm:$0xf]
        %v2180 = vld [vmem:[%s9 + $0x3c] sm:$0xf]
        %v2181 = vpack.c.bf16 %v2148, %v2146
        %v2182 = vpack.c.bf16 %v2153, %v2151
        %v2183 = vpack.c.bf16 %v2158, %v2156
        %v2184 = vpack.c.bf16 %v2163, %v2161
        %v2201 = vunpack.c.l.b16 %v2165
        %v2202 = vunpack.c.l.b16 %v2166
        %v2203 = vunpack.c.l.b16 %v2167
        %v2204 = vunpack.c.l.b16 %v2168
        %v2205 = vunpack.c.l.b16 %v2169
        %v2206 = vunpack.c.l.b16 %v2170
        %v2207 = vunpack.c.l.b16 %v2171
        %v2208 = vunpack.c.l.b16 %v2172
        %v2209 = vunpack.c.l.b16 %v2173
        %v2210 = vunpack.c.l.b16 %v2174
        %v2211 = vunpack.c.l.b16 %v2175
        %v2212 = vunpack.c.l.b16 %v2176
        %v2213 = vunpack.c.l.b16 %v2177
        %v2214 = vunpack.c.l.b16 %v2178
        %v2215 = vunpack.c.l.b16 %v2179
        %v2216 = vunpack.c.l.b16 %v2180
        %v2217 = vpack.c.b16 %v2202, %v2201
        %v2218 = vpack.c.b16 %v2204, %v2203
        %v2219 = vpack.c.b16 %v2206, %v2205
        %v2220 = vpack.c.b16 %v2208, %v2207
        %v2221 = vpack.c.b16 %v2210, %v2209
        %v2222 = vpack.c.b16 %v2212, %v2211
        %v2223 = vpack.c.b16 %v2214, %v2213
        %v2224 = vpack.c.b16 %v2216, %v2215
        %v2226 = vsel %vm1130, %v2217, 0
        %v2229 = vsel %vm1130, %v2218, 0
        %v2232 = vsel %vm1130, %v2219, 0
        %v2235 = vsel %vm1130, %v2220, 0
        %v2238 = vsel %vm1130, %v2221, 0
        %v2241 = vsel %vm1130, %v2222, 0
        %v2244 = vsel %vm1130, %v2223, 0
        %v2247 = vsel %vm1130, %v2224, 0
        %2249 = vmatpush.bf16.msra.mxu0 0
        %2250 = vmatpush.bf16.msra.mxu0 0
        %2251 = vmatpush.bf16.msra.mxu0 0
        %2252 = vmatpush.bf16.msra.mxu0 0
        %2253 = vmatpush.bf16.msra.mxu0 %v2184
        %2254 = vmatpush.bf16.msra.mxu0 %v2183
        %2255 = vmatpush.bf16.msra.mxu0 %v2182
        %2256 = vmatpush.bf16.msra.mxu0 %v2181
        %2257 = vmatmul.bf16.gmra.mxu0 %v2226
        %v2258 = vpop.f32.mrf.mxu0
        %v2259 = vadd.f32 0.0, %v2258
        %v2260 = vpop.f32.mrf.mxu0
        %v2261 = vadd.f32 0.0, %v2260
        %2262 = vmatmul.bf16.gmra.mxu0 %v2229
        %v2263 = vpop.f32.mrf.mxu0
        %v2264 = vadd.f32 0.0, %v2263
        %v2265 = vpop.f32.mrf.mxu0
        %v2266 = vadd.f32 0.0, %v2265
        %2267 = vmatmul.bf16.gmra.mxu0 %v2232
        %v2268 = vpop.f32.mrf.mxu0
        %v2269 = vadd.f32 0.0, %v2268
        %v2270 = vpop.f32.mrf.mxu0
        %v2271 = vadd.f32 0.0, %v2270
        %2272 = vmatmul.bf16.gmra.mxu0 %v2235
        %v2273 = vpop.f32.mrf.mxu0
        %v2274 = vadd.f32 0.0, %v2273
        %v2275 = vpop.f32.mrf.mxu0
        %v2276 = vadd.f32 0.0, %v2275
        %2277 = vmatmul.bf16.gmra.mxu0 %v2238
        %v2278 = vpop.f32.mrf.mxu0
        %v2279 = vadd.f32 0.0, %v2278
        %v2280 = vpop.f32.mrf.mxu0
        %v2281 = vadd.f32 0.0, %v2280
        %2282 = vmatmul.bf16.gmra.mxu0 %v2241
        %v2283 = vpop.f32.mrf.mxu0
        %v2284 = vadd.f32 0.0, %v2283
        %v2285 = vpop.f32.mrf.mxu0
        %v2286 = vadd.f32 0.0, %v2285
        %2287 = vmatmul.bf16.gmra.mxu0 %v2244
        %v2288 = vpop.f32.mrf.mxu0
        %v2289 = vadd.f32 0.0, %v2288
        %v2290 = vpop.f32.mrf.mxu0
        %v2291 = vadd.f32 0.0, %v2290
        %2292 = vmatmul.bf16.gmra.mxu0 %v2247
        %v2293 = vpop.f32.mrf.mxu0
        %v2294 = vadd.f32 0.0, %v2293
        %v2295 = vpop.f32.mrf.mxu0
        %v2296 = vadd.f32 0.0, %v2295
        %2297 = vdwg.mxu0
        %v2298 = vld [vmem:[#allocation16] sm:$0xff]
        %v2299 = vld [vmem:[#allocation16 + $0x8] sm:$0xff]
        %v2300 = vld [vmem:[#allocation16 + $0x10] sm:$0xff]
        %v2301 = vld [vmem:[#allocation16 + $0x18] sm:$0xff]
        %v2302 = vld [vmem:[#allocation16 + $0x20] sm:$0xff]
        %v2303 = vld [vmem:[#allocation16 + $0x28] sm:$0xff]
        %v2304 = vld [vmem:[#allocation16 + $0x30] sm:$0xff]
        %v2305 = vld [vmem:[#allocation16 + $0x38] sm:$0xff]
        %v2306 = vld [vmem:[#allocation16 + $0x40] sm:$0xff]
        %v2307 = vld [vmem:[#allocation16 + $0x48] sm:$0xff]
        %v2308 = vld [vmem:[#allocation16 + $0x50] sm:$0xff]
        %v2309 = vld [vmem:[#allocation16 + $0x58] sm:$0xff]
        %v2310 = vld [vmem:[#allocation16 + $0x60] sm:$0xff]
        %v2311 = vld [vmem:[#allocation16 + $0x68] sm:$0xff]
        %v2312 = vld [vmem:[#allocation16 + $0x70] sm:$0xff]
        %v2313 = vld [vmem:[#allocation16 + $0x78] sm:$0xff]
        %v2314 = vpack.c.bf16 %v2261, %v2259
        %v2315 = vpack.c.bf16 %v2266, %v2264
        %v2316 = vpack.c.bf16 %v2271, %v2269
        %v2317 = vpack.c.bf16 %v2276, %v2274
        %v2318 = vpack.c.bf16 %v2281, %v2279
        %v2319 = vpack.c.bf16 %v2286, %v2284
        %v2320 = vpack.c.bf16 %v2291, %v2289
        %v2321 = vpack.c.bf16 %v2296, %v2294
        %v2338 = vunpack.c.l.b16 %v2298
        %v2339 = vunpack.c.h.b16 %v2298
        %v2340 = vunpack.c.l.b16 %v2299
        %v2341 = vunpack.c.h.b16 %v2299
        %v2342 = vunpack.c.l.b16 %v2300
        %v2343 = vunpack.c.h.b16 %v2300
        %v2344 = vunpack.c.l.b16 %v2301
        %v2345 = vunpack.c.h.b16 %v2301
        %v2346 = vunpack.c.l.b16 %v2302
        %v2347 = vunpack.c.h.b16 %v2302
        %v2348 = vunpack.c.l.b16 %v2303
        %v2349 = vunpack.c.h.b16 %v2303
        %v2350 = vunpack.c.l.b16 %v2304
        %v2351 = vunpack.c.h.b16 %v2304
        %v2352 = vunpack.c.l.b16 %v2305
        %v2353 = vunpack.c.h.b16 %v2305
        %v2354 = vunpack.c.l.b16 %v2306
        %v2355 = vunpack.c.h.b16 %v2306
        %v2356 = vunpack.c.l.b16 %v2307
        %v2357 = vunpack.c.h.b16 %v2307
        %v2358 = vunpack.c.l.b16 %v2308
        %v2359 = vunpack.c.h.b16 %v2308
        %v2360 = vunpack.c.l.b16 %v2309
        %v2361 = vunpack.c.h.b16 %v2309
        %v2362 = vunpack.c.l.b16 %v2310
        %v2363 = vunpack.c.h.b16 %v2310
        %v2364 = vunpack.c.l.b16 %v2311
        %v2365 = vunpack.c.h.b16 %v2311
        %v2366 = vunpack.c.l.b16 %v2312
        %v2367 = vunpack.c.h.b16 %v2312
        %v2368 = vunpack.c.l.b16 %v2313
        %v2369 = vunpack.c.h.b16 %v2313
        %v2370 = vpack.c.b16 %v2340, %v2338
        %v2371 = vpack.c.b16 %v2341, %v2339
        %v2372 = vpack.c.b16 %v2344, %v2342
        %v2373 = vpack.c.b16 %v2345, %v2343
        %v2374 = vpack.c.b16 %v2348, %v2346
        %v2375 = vpack.c.b16 %v2349, %v2347
        %v2376 = vpack.c.b16 %v2352, %v2350
        %v2377 = vpack.c.b16 %v2353, %v2351
        %v2378 = vpack.c.b16 %v2356, %v2354
        %v2379 = vpack.c.b16 %v2357, %v2355
        %v2380 = vpack.c.b16 %v2360, %v2358
        %v2381 = vpack.c.b16 %v2361, %v2359
        %v2382 = vpack.c.b16 %v2364, %v2362
        %v2383 = vpack.c.b16 %v2365, %v2363
        %v2384 = vpack.c.b16 %v2368, %v2366
        %v2385 = vpack.c.b16 %v2369, %v2367
        %2402 = vmatpush.bf16.msra.mxu0 %v2384
        %2403 = vmatpush.bf16.msra.mxu0 %v2382
        %2404 = vmatpush.bf16.msra.mxu0 %v2380
        %2405 = vmatpush.bf16.msra.mxu0 %v2378
        %2406 = vmatpush.bf16.msra.mxu0 %v2376
        %2407 = vmatpush.bf16.msra.mxu0 %v2374
        %2408 = vmatpush.bf16.msra.mxu0 %v2372
        %2409 = vmatpush.bf16.msra.mxu0 %v2370
        %2410 = vmatmul.bf16.gmra.mxu0 %v2314
        %v2411 = vpop.f32.mrf.mxu0
        %v2412 = vadd.f32 0.0, %v2411
        %v2413 = vpop.f32.mrf.mxu0
        %v2414 = vadd.f32 0.0, %v2413
        %2415 = vmatmul.bf16.gmra.mxu0 %v2315
        %v2416 = vpop.f32.mrf.mxu0
        %v2417 = vadd.f32 0.0, %v2416
        %v2418 = vpop.f32.mrf.mxu0
        %v2419 = vadd.f32 0.0, %v2418
        %2420 = vmatmul.bf16.gmra.mxu0 %v2316
        %v2421 = vpop.f32.mrf.mxu0
        %v2422 = vadd.f32 0.0, %v2421
        %v2423 = vpop.f32.mrf.mxu0
        %v2424 = vadd.f32 0.0, %v2423
        %2425 = vmatmul.bf16.gmra.mxu0 %v2317
        %v2426 = vpop.f32.mrf.mxu0
        %v2427 = vadd.f32 0.0, %v2426
        %v2428 = vpop.f32.mrf.mxu0
        %v2429 = vadd.f32 0.0, %v2428
        %2430 = vmatmul.bf16.gmra.mxu0 %v2318
        %v2431 = vpop.f32.mrf.mxu0
        %v2432 = vadd.f32 0.0, %v2431
        %v2433 = vpop.f32.mrf.mxu0
        %v2434 = vadd.f32 0.0, %v2433
        %2435 = vmatmul.bf16.gmra.mxu0 %v2319
        %v2436 = vpop.f32.mrf.mxu0
        %v2437 = vadd.f32 0.0, %v2436
        %v2438 = vpop.f32.mrf.mxu0
        %v2439 = vadd.f32 0.0, %v2438
        %2440 = vmatmul.bf16.gmra.mxu0 %v2320
        %v2441 = vpop.f32.mrf.mxu0
        %v2442 = vadd.f32 0.0, %v2441
        %v2443 = vpop.f32.mrf.mxu0
        %v2444 = vadd.f32 0.0, %v2443
        %2445 = vmatmul.bf16.gmra.mxu0 %v2321
        %v2446 = vpop.f32.mrf.mxu0
        %v2447 = vadd.f32 0.0, %v2446
        %v2448 = vpop.f32.mrf.mxu0
        %v2449 = vadd.f32 0.0, %v2448
        %2450 = vdwg.mxu0
        %2451 = vmatpush.bf16.msra.mxu0 %v2385
        %2452 = vmatpush.bf16.msra.mxu0 %v2383
        %2453 = vmatpush.bf16.msra.mxu0 %v2381
        %2454 = vmatpush.bf16.msra.mxu0 %v2379
        %2455 = vmatpush.bf16.msra.mxu0 %v2377
        %2456 = vmatpush.bf16.msra.mxu0 %v2375
        %2457 = vmatpush.bf16.msra.mxu0 %v2373
        %2458 = vmatpush.bf16.msra.mxu0 %v2371
        %2459 = vmatmul.bf16.gmra.mxu0 %v2314
        %v2460 = vpop.f32.mrf.mxu0
        %v2461 = vadd.f32 0.0, %v2460
        %v2462 = vpop.f32.mrf.mxu0
        %v2463 = vadd.f32 0.0, %v2462
        %2464 = vmatmul.bf16.gmra.mxu0 %v2315
        %v2465 = vpop.f32.mrf.mxu0
        %v2466 = vadd.f32 0.0, %v2465
        %v2467 = vpop.f32.mrf.mxu0
        %v2468 = vadd.f32 0.0, %v2467
        %2469 = vmatmul.bf16.gmra.mxu0 %v2316
        %v2470 = vpop.f32.mrf.mxu0
        %v2471 = vadd.f32 0.0, %v2470
        %v2472 = vpop.f32.mrf.mxu0
        %v2473 = vadd.f32 0.0, %v2472
        %2474 = vmatmul.bf16.gmra.mxu0 %v2317
        %v2475 = vpop.f32.mrf.mxu0
        %v2476 = vadd.f32 0.0, %v2475
        %v2477 = vpop.f32.mrf.mxu0
        %v2478 = vadd.f32 0.0, %v2477
        %2479 = vmatmul.bf16.gmra.mxu0 %v2318
        %v2480 = vpop.f32.mrf.mxu0
        %v2481 = vadd.f32 0.0, %v2480
        %v2482 = vpop.f32.mrf.mxu0
        %v2483 = vadd.f32 0.0, %v2482
        %2484 = vmatmul.bf16.gmra.mxu0 %v2319
        %v2485 = vpop.f32.mrf.mxu0
        %v2486 = vadd.f32 0.0, %v2485
        %v2487 = vpop.f32.mrf.mxu0
        %v2488 = vadd.f32 0.0, %v2487
        %2489 = vmatmul.bf16.gmra.mxu0 %v2320
        %v2490 = vpop.f32.mrf.mxu0
        %v2491 = vadd.f32 0.0, %v2490
        %v2492 = vpop.f32.mrf.mxu0
        %v2493 = vadd.f32 0.0, %v2492
        %2494 = vmatmul.bf16.gmra.mxu0 %v2321
        %v2495 = vpop.f32.mrf.mxu0
        %v2496 = vadd.f32 0.0, %v2495
        %v2497 = vpop.f32.mrf.mxu0
        %v2498 = vadd.f32 0.0, %v2497
        %2499 = vdwg.mxu0
        %v2500 = vmul.f32 %v2461, 1.402
        %v2501 = vmul.f32 %v2463, 1.402
        %v2502 = vmul.f32 %v2466, 1.402
        %v2503 = vmul.f32 %v2468, 1.402
        %v2504 = vmul.f32 %v2471, 1.402
        %v2505 = vmul.f32 %v2473, 1.402
        %v2506 = vmul.f32 %v2476, 1.402
        %v2507 = vmul.f32 %v2478, 1.402
        %v2508 = vmul.f32 %v2481, 1.402
        %v2509 = vmul.f32 %v2483, 1.402
        %v2510 = vmul.f32 %v2486, 1.402
        %v2511 = vmul.f32 %v2488, 1.402
        %v2512 = vmul.f32 %v2491, 1.402
        %v2513 = vmul.f32 %v2493, 1.402
        %v2514 = vmul.f32 %v2496, 1.402
        %v2515 = vmul.f32 %v2498, 1.402
        %v2516 = vadd.f32 %v2106, %v2500
        %v2517 = vadd.f32 %v2108, %v2501
        %v2518 = vadd.f32 %v2111, %v2502
        %v2519 = vadd.f32 %v2113, %v2503
        %v2520 = vadd.f32 %v2116, %v2504
        %v2521 = vadd.f32 %v2118, %v2505
        %v2522 = vadd.f32 %v2121, %v2506
        %v2523 = vadd.f32 %v2123, %v2507
        %v2524 = vadd.f32 %v2126, %v2508
        %v2525 = vadd.f32 %v2128, %v2509
        %v2526 = vadd.f32 %v2131, %v2510
        %v2527 = vadd.f32 %v2133, %v2511
        %v2528 = vadd.f32 %v2136, %v2512
        %v2529 = vadd.f32 %v2138, %v2513
        %v2530 = vadd.f32 %v2141, %v2514
        %v2531 = vadd.f32 %v2143, %v2515
        %v2532 = vadd.f32 %v2516, 0.5019608
        %v2533 = vadd.f32 %v2517, 0.5019608
        %v2534 = vadd.f32 %v2518, 0.5019608
        %v2535 = vadd.f32 %v2519, 0.5019608
        %v2536 = vadd.f32 %v2520, 0.5019608
        %v2537 = vadd.f32 %v2521, 0.5019608
        %v2538 = vadd.f32 %v2522, 0.5019608
        %v2539 = vadd.f32 %v2523, 0.5019608
        %v2540 = vadd.f32 %v2524, 0.5019608
        %v2541 = vadd.f32 %v2525, 0.5019608
        %v2542 = vadd.f32 %v2526, 0.5019608
        %v2543 = vadd.f32 %v2527, 0.5019608
        %v2544 = vadd.f32 %v2528, 0.5019608
        %v2545 = vadd.f32 %v2529, 0.5019608
        %v2546 = vadd.f32 %v2530, 0.5019608
        %v2547 = vadd.f32 %v2531, 0.5019608
        %v2548 = vmul.f32 %v2412, 0.344136
        %v2549 = vmul.f32 %v2414, 0.344136
        %v2550 = vmul.f32 %v2417, 0.344136
        %v2551 = vmul.f32 %v2419, 0.344136
        %v2552 = vmul.f32 %v2422, 0.344136
        %v2553 = vmul.f32 %v2424, 0.344136
        %v2554 = vmul.f32 %v2427, 0.344136
        %v2555 = vmul.f32 %v2429, 0.344136
        %v2556 = vmul.f32 %v2432, 0.344136
        %v2557 = vmul.f32 %v2434, 0.344136
        %v2558 = vmul.f32 %v2437, 0.344136
        %v2559 = vmul.f32 %v2439, 0.344136
        %v2560 = vmul.f32 %v2442, 0.344136
        %v2561 = vmul.f32 %v2444, 0.344136
        %v2562 = vmul.f32 %v2447, 0.344136
        %v2563 = vmul.f32 %v2449, 0.344136
        %v2564 = vsub.f32 %v2106, %v2548
        %v2565 = vsub.f32 %v2108, %v2549
        %v2566 = vsub.f32 %v2111, %v2550
        %v2567 = vsub.f32 %v2113, %v2551
        %v2568 = vsub.f32 %v2116, %v2552
        %v2569 = vsub.f32 %v2118, %v2553
        %v2570 = vsub.f32 %v2121, %v2554
        %v2571 = vsub.f32 %v2123, %v2555
        %v2572 = vsub.f32 %v2126, %v2556
        %v2573 = vsub.f32 %v2128, %v2557
        %v2574 = vsub.f32 %v2131, %v2558
        %v2575 = vsub.f32 %v2133, %v2559
        %v2576 = vsub.f32 %v2136, %v2560
        %v2577 = vsub.f32 %v2138, %v2561
        %v2578 = vsub.f32 %v2141, %v2562
        %v2579 = vsub.f32 %v2143, %v2563
        %v2580 = vmul.f32 %v2461, 0.714136
        %v2581 = vmul.f32 %v2463, 0.714136
        %v2582 = vmul.f32 %v2466, 0.714136
        %v2583 = vmul.f32 %v2468, 0.714136
        %v2584 = vmul.f32 %v2471, 0.714136
        %v2585 = vmul.f32 %v2473, 0.714136
        %v2586 = vmul.f32 %v2476, 0.714136
        %v2587 = vmul.f32 %v2478, 0.714136
        %v2588 = vmul.f32 %v2481, 0.714136
        %v2589 = vmul.f32 %v2483, 0.714136
        %v2590 = vmul.f32 %v2486, 0.714136
        %v2591 = vmul.f32 %v2488, 0.714136
        %v2592 = vmul.f32 %v2491, 0.714136
        %v2593 = vmul.f32 %v2493, 0.714136
        %v2594 = vmul.f32 %v2496, 0.714136
        %v2595 = vmul.f32 %v2498, 0.714136
        %v2596 = vsub.f32 %v2564, %v2580
        %v2597 = vsub.f32 %v2565, %v2581
        %v2598 = vsub.f32 %v2566, %v2582
        %v2599 = vsub.f32 %v2567, %v2583
        %v2600 = vsub.f32 %v2568, %v2584
        %v2601 = vsub.f32 %v2569, %v2585
        %v2602 = vsub.f32 %v2570, %v2586
        %v2603 = vsub.f32 %v2571, %v2587
        %v2604 = vsub.f32 %v2572, %v2588
        %v2605 = vsub.f32 %v2573, %v2589
        %v2606 = vsub.f32 %v2574, %v2590
        %v2607 = vsub.f32 %v2575, %v2591
        %v2608 = vsub.f32 %v2576, %v2592
        %v2609 = vsub.f32 %v2577, %v2593
        %v2610 = vsub.f32 %v2578, %v2594
        %v2611 = vsub.f32 %v2579, %v2595
        %v2612 = vadd.f32 %v2596, 0.5019608
        %v2613 = vadd.f32 %v2597, 0.5019608
        %v2614 = vadd.f32 %v2598, 0.5019608
        %v2615 = vadd.f32 %v2599, 0.5019608
        %v2616 = vadd.f32 %v2600, 0.5019608
        %v2617 = vadd.f32 %v2601, 0.5019608
        %v2618 = vadd.f32 %v2602, 0.5019608
        %v2619 = vadd.f32 %v2603, 0.5019608
        %v2620 = vadd.f32 %v2604, 0.5019608
        %v2621 = vadd.f32 %v2605, 0.5019608
        %v2622 = vadd.f32 %v2606, 0.5019608
        %v2623 = vadd.f32 %v2607, 0.5019608
        %v2624 = vadd.f32 %v2608, 0.5019608
        %v2625 = vadd.f32 %v2609, 0.5019608
        %v2626 = vadd.f32 %v2610, 0.5019608
        %v2627 = vadd.f32 %v2611, 0.5019608
        %v2628 = vmul.f32 %v2412, 1.772
        %v2629 = vmul.f32 %v2414, 1.772
        %v2630 = vmul.f32 %v2417, 1.772
        %v2631 = vmul.f32 %v2419, 1.772
        %v2632 = vmul.f32 %v2422, 1.772
        %v2633 = vmul.f32 %v2424, 1.772
        %v2634 = vmul.f32 %v2427, 1.772
        %v2635 = vmul.f32 %v2429, 1.772
        %v2636 = vmul.f32 %v2432, 1.772
        %v2637 = vmul.f32 %v2434, 1.772
        %v2638 = vmul.f32 %v2437, 1.772
        %v2639 = vmul.f32 %v2439, 1.772
        %v2640 = vmul.f32 %v2442, 1.772
        %v2641 = vmul.f32 %v2444, 1.772
        %v2642 = vmul.f32 %v2447, 1.772
        %v2643 = vmul.f32 %v2449, 1.772
        %v2644 = vadd.f32 %v2106, %v2628
        %v2645 = vadd.f32 %v2108, %v2629
        %v2646 = vadd.f32 %v2111, %v2630
        %v2647 = vadd.f32 %v2113, %v2631
        %v2648 = vadd.f32 %v2116, %v2632
        %v2649 = vadd.f32 %v2118, %v2633
        %v2650 = vadd.f32 %v2121, %v2634
        %v2651 = vadd.f32 %v2123, %v2635
        %v2652 = vadd.f32 %v2126, %v2636
        %v2653 = vadd.f32 %v2128, %v2637
        %v2654 = vadd.f32 %v2131, %v2638
        %v2655 = vadd.f32 %v2133, %v2639
        %v2656 = vadd.f32 %v2136, %v2640
        %v2657 = vadd.f32 %v2138, %v2641
        %v2658 = vadd.f32 %v2141, %v2642
        %v2659 = vadd.f32 %v2143, %v2643
        %v2660 = vadd.f32 %v2644, 0.5019608
        %v2661 = vadd.f32 %v2645, 0.5019608
        %v2662 = vadd.f32 %v2646, 0.5019608
        %v2663 = vadd.f32 %v2647, 0.5019608
        %v2664 = vadd.f32 %v2648, 0.5019608
        %v2665 = vadd.f32 %v2649, 0.5019608
        %v2666 = vadd.f32 %v2650, 0.5019608
        %v2667 = vadd.f32 %v2651, 0.5019608
        %v2668 = vadd.f32 %v2652, 0.5019608
        %v2669 = vadd.f32 %v2653, 0.5019608
        %v2670 = vadd.f32 %v2654, 0.5019608
        %v2671 = vadd.f32 %v2655, 0.5019608
        %v2672 = vadd.f32 %v2656, 0.5019608
        %v2673 = vadd.f32 %v2657, 0.5019608
        %v2674 = vadd.f32 %v2658, 0.5019608
        %v2675 = vadd.f32 %v2659, 0.5019608
        %v2676 = vmax.f32 %v2532, 0.0
        %v2677 = vmax.f32 %v2533, 0.0
        %v2678 = vmax.f32 %v2534, 0.0
        %v2679 = vmax.f32 %v2535, 0.0
        %v2680 = vmax.f32 %v2536, 0.0
        %v2681 = vmax.f32 %v2537, 0.0
        %v2682 = vmax.f32 %v2538, 0.0
        %v2683 = vmax.f32 %v2539, 0.0
        %v2684 = vmax.f32 %v2540, 0.0
        %v2685 = vmax.f32 %v2541, 0.0
        %v2686 = vmax.f32 %v2542, 0.0
        %v2687 = vmax.f32 %v2543, 0.0
        %v2688 = vmax.f32 %v2544, 0.0
        %v2689 = vmax.f32 %v2545, 0.0
        %v2690 = vmax.f32 %v2546, 0.0
        %v2691 = vmax.f32 %v2547, 0.0
        %v2692 = vmin.f32 %v2676, 1.0
        %v2693 = vmin.f32 %v2677, 1.0
        %v2694 = vmin.f32 %v2678, 1.0
        %v2695 = vmin.f32 %v2679, 1.0
        %v2696 = vmin.f32 %v2680, 1.0
        %v2697 = vmin.f32 %v2681, 1.0
        %v2698 = vmin.f32 %v2682, 1.0
        %v2699 = vmin.f32 %v2683, 1.0
        %v2700 = vmin.f32 %v2684, 1.0
        %v2701 = vmin.f32 %v2685, 1.0
        %v2702 = vmin.f32 %v2686, 1.0
        %v2703 = vmin.f32 %v2687, 1.0
        %v2704 = vmin.f32 %v2688, 1.0
        %v2705 = vmin.f32 %v2689, 1.0
        %v2706 = vmin.f32 %v2690, 1.0
        %v2707 = vmin.f32 %v2691, 1.0
        %2708 = vst [vmem:[%s568] sm:$0xff] %v2692
        %2709 = vst [vmem:[%s568 + $0x8] sm:$0xff] %v2693
        %2710 = vst [vmem:[%s568 + $0x10] sm:$0xff] %v2694
        %2711 = vst [vmem:[%s568 + $0x18] sm:$0xff] %v2695
        %2712 = vst [vmem:[%s568 + $0x20] sm:$0xff] %v2696
        %2713 = vst [vmem:[%s568 + $0x28] sm:$0xff] %v2697
        %2714 = vst [vmem:[%s568 + $0x30] sm:$0xff] %v2698
        %2715 = vst [vmem:[%s568 + $0x38] sm:$0xff] %v2699
        %2716 = vst [vmem:[%s568 + $0x40] sm:$0xff] %v2700
        %2717 = vst [vmem:[%s568 + $0x48] sm:$0xff] %v2701
        %2718 = vst [vmem:[%s568 + $0x50] sm:$0xff] %v2702
        %2719 = vst [vmem:[%s568 + $0x58] sm:$0xff] %v2703
        %2720 = vst [vmem:[%s568 + $0x60] sm:$0xff] %v2704
        %2721 = vst [vmem:[%s568 + $0x68] sm:$0xff] %v2705
        %2722 = vst [vmem:[%s568 + $0x70] sm:$0xff] %v2706
        %2723 = vst [vmem:[%s568 + $0x78] sm:$0xff] %v2707
        %v2724 = vmax.f32 %v2612, 0.0
        %v2725 = vmax.f32 %v2613, 0.0
        %v2726 = vmax.f32 %v2614, 0.0
        %v2727 = vmax.f32 %v2615, 0.0
        %v2728 = vmax.f32 %v2616, 0.0
        %v2729 = vmax.f32 %v2617, 0.0
        %v2730 = vmax.f32 %v2618, 0.0
        %v2731 = vmax.f32 %v2619, 0.0
        %v2732 = vmax.f32 %v2620, 0.0
        %v2733 = vmax.f32 %v2621, 0.0
        %v2734 = vmax.f32 %v2622, 0.0
        %v2735 = vmax.f32 %v2623, 0.0
        %v2736 = vmax.f32 %v2624, 0.0
        %v2737 = vmax.f32 %v2625, 0.0
        %v2738 = vmax.f32 %v2626, 0.0
        %v2739 = vmax.f32 %v2627, 0.0
        %v2740 = vmin.f32 %v2724, 1.0
        %v2741 = vmin.f32 %v2725, 1.0
        %v2742 = vmin.f32 %v2726, 1.0
        %v2743 = vmin.f32 %v2727, 1.0
        %v2744 = vmin.f32 %v2728, 1.0
        %v2745 = vmin.f32 %v2729, 1.0
        %v2746 = vmin.f32 %v2730, 1.0
        %v2747 = vmin.f32 %v2731, 1.0
        %v2748 = vmin.f32 %v2732, 1.0
        %v2749 = vmin.f32 %v2733, 1.0
        %v2750 = vmin.f32 %v2734, 1.0
        %v2751 = vmin.f32 %v2735, 1.0
        %v2752 = vmin.f32 %v2736, 1.0
        %v2753 = vmin.f32 %v2737, 1.0
        %v2754 = vmin.f32 %v2738, 1.0
        %v2755 = vmin.f32 %v2739, 1.0
        %s2756 = scalar_lea.vmem %s568, 128 [#allocation17]
        %2757 = vst [vmem:[%s2756] sm:$0xff] %v2740
        %2758 = vst [vmem:[%s2756 + $0x8] sm:$0xff] %v2741
        %2759 = vst [vmem:[%s2756 + $0x10] sm:$0xff] %v2742
        %2760 = vst [vmem:[%s2756 + $0x18] sm:$0xff] %v2743
        %2761 = vst [vmem:[%s2756 + $0x20] sm:$0xff] %v2744
        %2762 = vst [vmem:[%s2756 + $0x28] sm:$0xff] %v2745
        %2763 = vst [vmem:[%s2756 + $0x30] sm:$0xff] %v2746
        %2764 = vst [vmem:[%s2756 + $0x38] sm:$0xff] %v2747
        %2765 = vst [vmem:[%s2756 + $0x40] sm:$0xff] %v2748
        %2766 = vst [vmem:[%s2756 + $0x48] sm:$0xff] %v2749
        %2767 = vst [vmem:[%s2756 + $0x50] sm:$0xff] %v2750
        %2768 = vst [vmem:[%s2756 + $0x58] sm:$0xff] %v2751
        %2769 = vst [vmem:[%s2756 + $0x60] sm:$0xff] %v2752
        %2770 = vst [vmem:[%s2756 + $0x68] sm:$0xff] %v2753
        %2771 = vst [vmem:[%s2756 + $0x70] sm:$0xff] %v2754
        %2772 = vst [vmem:[%s2756 + $0x78] sm:$0xff] %v2755
        %v2773 = vmax.f32 %v2660, 0.0
        %v2774 = vmax.f32 %v2661, 0.0
        %v2775 = vmax.f32 %v2662, 0.0
        %v2776 = vmax.f32 %v2663, 0.0
        %v2777 = vmax.f32 %v2664, 0.0
        %v2778 = vmax.f32 %v2665, 0.0
        %v2779 = vmax.f32 %v2666, 0.0
        %v2780 = vmax.f32 %v2667, 0.0
        %v2781 = vmax.f32 %v2668, 0.0
        %v2782 = vmax.f32 %v2669, 0.0
        %v2783 = vmax.f32 %v2670, 0.0
        %v2784 = vmax.f32 %v2671, 0.0
        %v2785 = vmax.f32 %v2672, 0.0
        %v2786 = vmax.f32 %v2673, 0.0
        %v2787 = vmax.f32 %v2674, 0.0
        %v2788 = vmax.f32 %v2675, 0.0
        %v2789 = vmin.f32 %v2773, 1.0
        %v2790 = vmin.f32 %v2774, 1.0
        %v2791 = vmin.f32 %v2775, 1.0
        %v2792 = vmin.f32 %v2776, 1.0
        %v2793 = vmin.f32 %v2777, 1.0
        %v2794 = vmin.f32 %v2778, 1.0
        %v2795 = vmin.f32 %v2779, 1.0
        %v2796 = vmin.f32 %v2780, 1.0
        %v2797 = vmin.f32 %v2781, 1.0
        %v2798 = vmin.f32 %v2782, 1.0
        %v2799 = vmin.f32 %v2783, 1.0
        %v2800 = vmin.f32 %v2784, 1.0
        %v2801 = vmin.f32 %v2785, 1.0
        %v2802 = vmin.f32 %v2786, 1.0
        %v2803 = vmin.f32 %v2787, 1.0
        %v2804 = vmin.f32 %v2788, 1.0
        %s2805 = scalar_lea.vmem %s568, 256 [#allocation17]
        %2806 = vst [vmem:[%s2805] sm:$0xff] %v2789
        %2807 = vst [vmem:[%s2805 + $0x8] sm:$0xff] %v2790
        %2808 = vst [vmem:[%s2805 + $0x10] sm:$0xff] %v2791
        %2809 = vst [vmem:[%s2805 + $0x18] sm:$0xff] %v2792
        %2810 = vst [vmem:[%s2805 + $0x20] sm:$0xff] %v2793
        %2811 = vst [vmem:[%s2805 + $0x28] sm:$0xff] %v2794
        %2812 = vst [vmem:[%s2805 + $0x30] sm:$0xff] %v2795
        %2813 = vst [vmem:[%s2805 + $0x38] sm:$0xff] %v2796
        %2814 = vst [vmem:[%s2805 + $0x40] sm:$0xff] %v2797
        %2815 = vst [vmem:[%s2805 + $0x48] sm:$0xff] %v2798
        %2816 = vst [vmem:[%s2805 + $0x50] sm:$0xff] %v2799
        %2817 = vst [vmem:[%s2805 + $0x58] sm:$0xff] %v2800
        %2818 = vst [vmem:[%s2805 + $0x60] sm:$0xff] %v2801
        %2819 = vst [vmem:[%s2805 + $0x68] sm:$0xff] %v2802
        %2820 = vst [vmem:[%s2805 + $0x70] sm:$0xff] %v2803
        %2821 = vst [vmem:[%s2805 + $0x78] sm:$0xff] %v2804
        %s2822 = sand.u32 %s303, 1
        %s2823 = scalar_lea.sflag [#allocation4], %s2822
        %s2824 = sand.u32 %s303, 1
        %s2825 = smul.addr %s2824, 384
        %s2826 = scalar_lea.vmem [#allocation17], %s2825
        // Predicated region
        $region101: #{tpu_custom_call.1} parent=63 // pred_check
          %p2827 = pneg %p313
        $region102: #{tpu_custom_call.1} parent=63 // pred_check_branch
          %2829 = sbr.rel (%p2827) target = $region104
        $region103: #{tpu_custom_call.1} parent=63 // pred_region
          %s2830 = smul.u32 16, %s38
          %2832 = vsyncadd %s2823, 0
          %s2833 = sadd.s32 %s39, %s2830
          %s2834 = smul.addr %s37, 48
          %s2835 = sadd.s32 %s2833, %s2834
          %s2836 = smul.addr %s2835, 8
          %s2837 = scalar_lea.hbm %s11, %s2836
          %s2838 = sshll.u32 %s2826, 4
          %s2839 = int_to_ptr.vmem [resolvable:$true] %s2838
          %s2840 = sshll.u32 %s2837, 4
          %s2841 = int_to_ptr.hbm [resolvable:$true] %s2840
          %2846 = dma.vmem_to_hbm [thread:$0]  %s2839, 6144, %s2841, %s2823, 128, 128, 8
        $region104: #{tpu_custom_call.1} parent=63 // pred_fallthru
          _
      $region64: #{tpu_custom_call.1} parent=5 // pred_fallthru
        _
      %p2847 = scmp.le.s32.totalorder 2, %s27
      // Predicated region
      $region105: #{tpu_custom_call.1} parent=5 // pred_check
        %p2848 = pneg %p2847
      $region106: #{tpu_custom_call.1} parent=5 // pred_check_branch
        %2850 = sbr.rel (%p2848) target = $region108
      $region107: #{tpu_custom_call.1} parent=5 // pred_region
        %s2851 = ssub.s32 %s27, 2
        // Predicated region
        $region109: #{tpu_custom_call.1} parent=107 // pred_check
          %p2852 = pneg %p319
        $region110: #{tpu_custom_call.1} parent=107 // pred_check_branch
          %2854 = sbr.rel (%p2852) target = $region112
        $region111: #{tpu_custom_call.1} parent=107 // pred_region
          %s2855 = sand.u32 %s304, 1
          %s2856 = scalar_lea.sflag [#allocation4], %s2855
          %s2857 = sand.u32 %s304, 1
          %s2858 = smul.addr %s2857, 384
          %s2859 = scalar_lea.vmem [#allocation17], %s2858
          %2861 = dma.done %s2856, 6144
        $region112: #{tpu_custom_call.1} parent=107 // pred_fallthru
          _
      $region108: #{tpu_custom_call.1} parent=5 // pred_fallthru
        _
    $region6: #{tpu_custom_call.1} parent=1 // loop_footer
      %s31 = sadd.s32 1, %s27
    $region7: #{tpu_custom_call.1} parent=1 // loop_footer_branch
      %26 = sbr.rel target = $region3
    $region8: #{tpu_custom_call.1} parent=1 // loop_exit
      _
    %2862 = vsyncpa [#allocation3], 1
    %s2863 = scalar_lea.sflag [#allocation3], 1
    %2864 = vsyncpa %s2863, 1
    %2865 = vsyncpa [#allocation6], 1
    %2866 = vsyncpa [#allocation9], 1
    %2867 = vsyncpa [#allocation12], 1
    %2868 = vsyncpa [#allocation15], 1
    %2869 = vsyncpa [#allocation4], 1
    %s2870 = scalar_lea.sflag [#allocation4], 1
    %2871 = vsyncpa %s2870, 1

</llo_original>
